<compile_context>
chip_gen: v5e
topology: v5e:2x2
jax: 0.10.0
libtpu: 0.0.40
codegen_flags: <defaults>
</compile_context>

<pallas_src>
import functools
import math

import jax
import jax.numpy as jnp
from jax import lax
from jax.experimental import pallas as pl
from jax.experimental.pallas import tpu as pltpu


# ------------------------------------------------------------------------------------------
# Helpers
# ------------------------------------------------------------------------------------------
def _spec(shape, index_map, buffers=None):
    """BlockSpec with an optional multi-buffering hint; falls back if unsupported."""
    if buffers is not None:
        try:
            return pl.BlockSpec(shape, index_map, pipeline_mode=pl.Buffered(buffers))
        except Exception:  # older jax without pipeline_mode / pl.Buffered
            pass
    return pl.BlockSpec(shape, index_map)


def _largest_tile(n, cap):
    t = min(n, cap)
    while t > 8 and n % t != 0:
        t //= 2
    return t if n % t == 0 else n


def _is_v5():
    try:
        return "v5" in jax.devices()[0].device_kind.lower()
    except Exception:
        return False


def _clamp_vmem(estimate_bytes):
    # 2x headroom for compiler-internal scratch, capped so the budget also fits v7x (64 MiB).
    return int(min(48 * 1024 * 1024, max(16 * 1024 * 1024, 2 * estimate_bytes)))


# ------------------------------------------------------------------------------------------
# Kernel 1: fused QKV projection  (B*S, E) @ (E, 3E) -> bf16 Q (pre-scaled), K, V
# ------------------------------------------------------------------------------------------
def qkv_proj_kernel(x_ref, w_ref, b_ref, q_ref, k_ref, v_ref, *, scale):
    x = x_ref[...].astype(jnp.bfloat16)                                  # (TM, E)
    qkv = jnp.dot(x, w_ref[...], preferred_element_type=jnp.float32)     # (TM, 3E) f32
    qkv = qkv + b_ref[...]
    E = q_ref.shape[-1]
    q_ref[...] = (qkv[:, :E] * scale).astype(q_ref.dtype)                # scale folded into Q
    k_ref[...] = qkv[:, E:2 * E].astype(k_ref.dtype)
    v_ref[...] = qkv[:, 2 * E:].astype(v_ref.dtype)


def qkv_projection(x2d, w_qkv, b_qkv, *, scale, tm, pipeline_hints=True):
    M, E = x2d.shape
    n_m = M // tm
    hint = (lambda n: n) if pipeline_hints else (lambda n: None)
    out_sd = jax.ShapeDtypeStruct((M, E), jnp.bfloat16)

    flops = 2 * M * E * 3 * E
    bytes_accessed = M * E * 4 + E * 3 * E * 2 + 3 * E * 4 + 3 * M * E * 2

    vmem_estimate = (2 * (tm * E * 4)            # x tile (f32, double buffered)
                     + E * 3 * E * 2 + 3 * E * 4  # resident fused weight / bias
                     + 3 * 2 * (tm * E * 2)       # three bf16 output tiles (double buffered)
                     + tm * 3 * E * 4)            # f32 intermediate

    return pl.pallas_call(
        functools.partial(qkv_proj_kernel, scale=scale),
        out_shape=(out_sd, out_sd, out_sd),
        grid_spec=pltpu.PrefetchScalarGridSpec(
            num_scalar_prefetch=0,
            grid=(n_m,),
            in_specs=[
                pl.BlockSpec((tm, E), lambda i: (i, 0)),
                _spec((E, 3 * E), lambda i: (0, 0), hint(1)),   # resident fused QKV weight
                _spec((1, 3 * E), lambda i: (0, 0), hint(1)),   # resident fused QKV bias
            ],
            out_specs=[
                pl.BlockSpec((tm, E), lambda i: (i, 0)),
                pl.BlockSpec((tm, E), lambda i: (i, 0)),
                pl.BlockSpec((tm, E), lambda i: (i, 0)),
            ],
        ),
        compiler_params=pltpu.CompilerParams(
            dimension_semantics=("parallel",),
            vmem_limit_bytes=_clamp_vmem(vmem_estimate),
        ),
        cost_estimate=pl.CostEstimate(
            flops=flops, transcendentals=0, bytes_accessed=bytes_accessed),
    )(x2d, w_qkv, b_qkv)


# ------------------------------------------------------------------------------------------
# Kernel 2: flash-style attention + residual/LN1 + FFN(ReLU) + residual/LN2
# ------------------------------------------------------------------------------------------
def attn_ffn_kernel(x_ref, q_ref, k_ref, v_ref,
                    g1_ref, be1_ref, w1_ref, b1_ref, w2_ref, b2_ref, g2_ref, be2_ref,
                    o_ref, m_s, l_s, acc_s, *, eps=1e-5):
    ki = pl.program_id(2)
    n_kv = pl.num_programs(2)
    bf16 = jnp.bfloat16

    @pl.when(ki == 0)
    def _init():
        m_s[...] = jnp.full(m_s.shape, -jnp.inf, dtype=jnp.float32)
        l_s[...] = jnp.zeros(l_s.shape, dtype=jnp.float32)
        acc_s[...] = jnp.zeros(acc_s.shape, dtype=jnp.float32)

    # scores (TQ, TK): contract E of Q and K directly (no K transpose materialization).
    s = lax.dot_general(q_ref[0], k_ref[0],
                        dimension_numbers=(((1,), (1,)), ((), ())),
                        preferred_element_type=jnp.float32)

    m_prev = m_s[...]
    m_new = jnp.maximum(m_prev, jnp.max(s, axis=-1, keepdims=True))
    alpha = jnp.exp(m_prev - m_new)
    p = jnp.exp(s - m_new)
    l_s[...] = alpha * l_s[...] + jnp.sum(p, axis=-1, keepdims=True)
    acc_s[...] = alpha * acc_s[...] + jnp.dot(p.astype(bf16), v_ref[0],
                                              preferred_element_type=jnp.float32)
    m_s[...] = m_new

    @pl.when(ki == n_kv - 1)
    def _finalize():
        attn_out = acc_s[...] / l_s[...]            # exact normalize, once per query tile
        x = x_ref[0]
        h = attn_out + x
        mu = jnp.mean(h, axis=-1, keepdims=True)
        var = jnp.mean((h - mu) * (h - mu), axis=-1, keepdims=True)
        h1 = (h - mu) * lax.rsqrt(var + eps) * g1_ref[...] + be1_ref[...]

        ff = jnp.dot(h1.astype(bf16), w1_ref[...],
                     preferred_element_type=jnp.float32) + b1_ref[...]
        ff = jnp.maximum(ff, 0.0)
        ff = jnp.dot(ff.astype(bf16), w2_ref[...],
                     preferred_element_type=jnp.float32) + b2_ref[...]

        g = ff + h1
        mu2 = jnp.mean(g, axis=-1, keepdims=True)
        var2 = jnp.mean((g - mu2) * (g - mu2), axis=-1, keepdims=True)
        out = (g - mu2) * lax.rsqrt(var2 + eps) * g2_ref[...] + be2_ref[...]

        o_ref[0] = out.astype(o_ref.dtype)


def transformer_block(x, params, *, tq=None, tk=None, pipeline_hints=True):
    """x: (B, S, E) float32.  params: dict of weights (GEMM weights in bf16, see init_params)."""
    B, S, E = x.shape
    H = params["w1"].shape[1]
    assert S % 8 == 0, "sequence length must be a multiple of 8"

    if tq is None:
        tq = _largest_tile(S, 128 if _is_v5() else 256)   # match MXU height per chip
    if tk is None:
        tk = _largest_tile(S, 512)
    assert S % tq == 0 and S % tk == 0, "S must be divisible by the chosen tiles"
    n_q, n_kv = S // tq, S // tk

    scale = 1.0 / math.sqrt(E)

    # ---- pre-pass: fused QKV projection over the flattened (B*S, E) activations -----------
    w_qkv = jnp.concatenate([params["wq"], params["wk"], params["wv"]], axis=1)   # (E,3E) bf16
    b_qkv = jnp.concatenate([params["bq"], params["bk"], params["bv"]], axis=1)   # (1,3E) f32
    x2d = x.reshape(B * S, E)
    tm = _largest_tile(B * S, 512)
    q2d, k2d, v2d = qkv_projection(x2d, w_qkv, b_qkv, scale=scale, tm=tm,
                                   pipeline_hints=pipeline_hints)
    q = q2d.reshape(B, S, E)
    k = k2d.reshape(B, S, E)
    v = v2d.reshape(B, S, E)

    hint = (lambda n: n) if pipeline_hints else (lambda n: None)

    def rep(shape, buffers=None):
        return _spec(shape, lambda b, qi, ki: tuple(0 for _ in shape), buffers)

    in_specs = [
        pl.BlockSpec((1, tq, E), lambda b, qi, ki: (b, qi, 0)),    # x (residual, f32)
        pl.BlockSpec((1, tq, E), lambda b, qi, ki: (b, qi, 0)),    # Q (pre-scaled, bf16)
        _spec((1, tk, E), lambda b, qi, ki: (b, ki, 0), hint(3)),  # K tile (bf16, streamed)
        _spec((1, tk, E), lambda b, qi, ki: (b, ki, 0), hint(3)),  # V tile (bf16, streamed)
        rep((1, E), hint(1)), rep((1, E), hint(1)),                # gamma1, beta1
        rep((E, H), hint(1)), rep((1, H), hint(1)),                # w1 (bf16), b1
        rep((H, E), hint(1)), rep((1, E), hint(1)),                # w2 (bf16), b2
        rep((1, E), hint(1)), rep((1, E), hint(1)),                # gamma2, beta2
    ]

    flops = 4 * B * S * S * E + 4 * B * S * E * H
    transcendentals = B * S * S + B * S * n_kv + 2 * B * S        # p exp + alpha exp + rsqrt
    bytes_accessed = (B * S * E * 4                    # x (resident across the KV axis)
                      + B * S * E * 2                  # Q (bf16)
                      + 2 * n_q * B * S * E * 2        # K, V re-streamed per query tile
                      + 2 * E * H * 2                  # w1, w2 (bf16)
                      + (H + 5 * E) * 4                # biases / LN params
                      + B * S * E * 4)                 # output write

    vmem_estimate = (2 * E * H * 2 * 2                 # w1 + w2 (bf16, worst-case dbl buffer)
                     + 2 * (tq * E * 4) * 2            # x tile + out tile (f32, dbl buffer)
                     + (tq * E * 2) * 2                # Q tile (bf16, dbl buffer)
                     + 2 * (tk * E * 2) * 3            # K, V tiles (bf16, 3-deep)
                     + tq * E * 4 + 2 * tq * 4         # acc / m / l scratch
                     + tq * tk * 4 + tq * H * 4 + 4 * tq * E * 4)  # score/FFN/LN intermediates

    return pl.pallas_call(
        attn_ffn_kernel,
        out_shape=jax.ShapeDtypeStruct((B, S, E), jnp.float32),
        grid_spec=pltpu.PrefetchScalarGridSpec(
            num_scalar_prefetch=0,
            grid=(B, n_q, n_kv),
            in_specs=in_specs,
            out_specs=pl.BlockSpec((1, tq, E), lambda b, qi, ki: (b, qi, 0)),
            scratch_shapes=[
                pltpu.VMEM((tq, 1), jnp.float32),    # running row max
                pltpu.VMEM((tq, 1), jnp.float32),    # running row sum
                pltpu.VMEM((tq, E), jnp.float32),    # attention accumulator
            ],
        ),
        compiler_params=pltpu.CompilerParams(
            dimension_semantics=("parallel", "parallel", "arbitrary"),
            vmem_limit_bytes=_clamp_vmem(vmem_estimate),
        ),
        cost_estimate=pl.CostEstimate(
            flops=flops, transcendentals=transcendentals, bytes_accessed=bytes_accessed),
    )(x, q, k, v,
      params["gamma1"], params["beta1"],
      params["w1"], params["b1"],
      params["w2"], params["b2"],
      params["gamma2"], params["beta2"])


# ------------------------------------------------------------------------------------------
# Parameters / reference
# ------------------------------------------------------------------------------------------
def init_params(key, embed_size, forward_expansion):
    E = embed_size
    H = forward_expansion * embed_size
    keys = jax.random.split(key, 10)
    se = 1.0 / math.sqrt(E)
    sh = 1.0 / math.sqrt(H)
    bf16 = jnp.bfloat16
    return {
        # GEMM weights live in bf16 on the host (MXU-native, halves HBM/VMEM traffic).
        "wq": (jax.random.normal(keys[0], (E, E), jnp.float32) * se).astype(bf16),
        "bq": jax.random.normal(keys[1], (1, E), jnp.float32) * 0.01,
        "wk": (jax.random.normal(keys[2], (E, E), jnp.float32) * se).astype(bf16),
        "bk": jax.random.normal(keys[3], (1, E), jnp.float32) * 0.01,
        "wv": (jax.random.normal(keys[4], (E, E), jnp.float32) * se).astype(bf16),
        "bv": jax.random.normal(keys[5], (1, E), jnp.float32) * 0.01,
        "gamma1": jnp.ones((1, E), jnp.float32),
        "beta1": jnp.zeros((1, E), jnp.float32),
        "w1": (jax.random.normal(keys[6], (E, H), jnp.float32) * se).astype(bf16),
        "b1": jax.random.normal(keys[7], (1, H), jnp.float32) * 0.01,
        "w2": (jax.random.normal(keys[8], (H, E), jnp.float32) * sh).astype(bf16),
        "b2": jax.random.normal(keys[9], (1, E), jnp.float32) * 0.01,
        "gamma2": jnp.ones((1, E), jnp.float32),
        "beta2": jnp.zeros((1, E), jnp.float32),
    }


def reference_transformer_block(x, params):
    """Pure-JAX f32 reference of the PyTorch forward pass (same bf16-quantized weights)."""
    E = x.shape[-1]
    eps = 1e-5
    f32 = jnp.float32
    wq, wk, wv = (params[n].astype(f32) for n in ("wq", "wk", "wv"))
    w1, w2 = params["w1"].astype(f32), params["w2"].astype(f32)

    q = x @ wq + params["bq"][0]
    k = x @ wk + params["bk"][0]
    v = x @ wv + params["bv"][0]
    scores = jnp.einsum("bqe,bke->bqk", q, k) / math.sqrt(E)
    attn = jax.nn.softmax(scores, axis=-1)
    attn_out = jnp.einsum("bqk,bke->bqe", attn, v)

    def layernorm(h, g, b):
        mu = h.mean(-1, keepdims=True)
        var = ((h - mu) ** 2).mean(-1, keepdims=True)
        return (h - mu) / jnp.sqrt(var + eps) * g[0] + b[0]

    h1 = layernorm(attn_out + x, params["gamma1"], params["beta1"])
    ff = jax.nn.relu(h1 @ w1 + params["b1"][0]) @ w2 + params["b2"][0]
    return layernorm(ff + h1, params["gamma2"], params["beta2"])


if __name__ == "__main__":
    # Lane/MXU-dense test shapes: E multiple of 128, S a multiple of the 256-tall query tile;
    # tk=256 (< S) exercises the multi-step online-softmax KV reduction.
    B, S, E = 2, 512, 128
    forward_expansion = 4

    key = jax.random.PRNGKey(0)
    kx, kp = jax.random.split(key)
    x = jax.random.normal(kx, (B, S, E), jnp.float32)
    params = init_params(kp, E, forward_expansion)

    try:
        out = jax.block_until_ready(transformer_block(x, params, tk=256))
    except Exception:
        # Fallback for jax builds without BlockSpec pipeline_mode / pl.Buffered support.
        out = jax.block_until_ready(transformer_block(x, params, tk=256, pipeline_hints=False))

    ref = reference_transformer_block(x, params)
    assert out.shape == (B, S, E)
    max_err = float(jnp.max(jnp.abs(out - ref)))
    # bf16 MXU operands / bf16 Q-K-V streaming with f32 accumulation => relaxed tolerance.
    assert jnp.allclose(out, ref, atol=5e-2, rtol=5e-2), (
        f"mismatch vs pure-JAX reference (max abs err {max_err:.4e})")

    print("KERNEL_OK")
</pallas_src>

<mosaic_0001>
module attributes {stable_mosaic.version = 11 : i64} {
  func.func @qkv_proj_kernel(%arg0: i32, %arg1: memref<512x128xf32, #tpu.memory_space<vmem>>, %arg2: memref<128x384xbf16, #tpu.memory_space<vmem>>, %arg3: memref<1x384xf32, #tpu.memory_space<vmem>>, %arg4: memref<512x128xbf16, #tpu.memory_space<vmem>>, %arg5: memref<512x128xbf16, #tpu.memory_space<vmem>>, %arg6: memref<512x128xbf16, #tpu.memory_space<vmem>>) attributes {dimension_semantics = [#tpu.dimension_semantics<parallel>], iteration_bounds = array<i64: 2>, scalar_prefetch = 0 : i64, scratch_operands = 0 : i64, tpu.core_type = #tpu.core_type<tc>, window_params = [{transform_indices = @transform_0, window_bounds = array<i64: 512, 128>}, {pipeline_mode = #tpu.pipeline_mode<synchronous>, transform_indices = @transform_1, window_bounds = array<i64: 128, 384>}, {pipeline_mode = #tpu.pipeline_mode<synchronous>, transform_indices = @transform_2, window_bounds = array<i64: 1, 384>}, {transform_indices = @transform_3, window_bounds = array<i64: 512, 128>}, {transform_indices = @transform_4, window_bounds = array<i64: 512, 128>}, {transform_indices = @transform_5, window_bounds = array<i64: 512, 128>}]} {
    %c0 = arith.constant 0 : index
    %c0_0 = arith.constant 0 : index
    %0 = vector.load %arg1[%c0, %c0_0] : memref<512x128xf32, #tpu.memory_space<vmem>>, vector<512x128xf32>
    %1 = arith.truncf %0 : vector<512x128xf32> to vector<512x128xbf16>
    %c0_1 = arith.constant 0 : index
    %c0_2 = arith.constant 0 : index
    %2 = vector.load %arg2[%c0_1, %c0_2] : memref<128x384xbf16, #tpu.memory_space<vmem>>, vector<128x384xbf16>
    %cst = arith.constant dense<0.000000e+00> : vector<512x384xf32>
    %3 = tpu.matmul %1, %2, %cst {dimension_numbers = #tpu.dot_dimension_numbers<[1], [0], [0], [1], [0, 0, 1, 1], [], []>} : vector<512x128xbf16>, vector<128x384xbf16>, vector<512x384xf32> -> vector<512x384xf32>
    %c0_3 = arith.constant 0 : index
    %c0_4 = arith.constant 0 : index
    %4 = vector.load %arg3[%c0_3, %c0_4] : memref<1x384xf32, #tpu.memory_space<vmem>>, vector<1x384xf32>
    %5 = vector.broadcast %4 : vector<1x384xf32> to vector<512x384xf32>
    %6 = arith.addf %3, %5 : vector<512x384xf32>
    %7 = vector.extract_strided_slice %6 {offsets = [0, 0], sizes = [512, 128], strides = [1, 1]} : vector<512x384xf32> to vector<512x128xf32>
    %cst_5 = arith.constant 0.0883883461 : f32
    %8 = vector.broadcast %cst_5 : f32 to vector<512x128xf32>
    %9 = arith.mulf %7, %8 : vector<512x128xf32>
    %10 = arith.truncf %9 : vector<512x128xf32> to vector<512x128xbf16>
    %c0_6 = arith.constant 0 : index
    %c0_7 = arith.constant 0 : index
    %11 = vector.load %arg4[%c0_6, %c0_7] : memref<512x128xbf16, #tpu.memory_space<vmem>>, vector<512x128xbf16>
    tpu.vector_store %arg4[%c0_6, %c0_7], %10 {strides = array<i32>} : memref<512x128xbf16, #tpu.memory_space<vmem>>, vector<512x128xbf16>,
    %12 = vector.extract_strided_slice %6 {offsets = [0, 128], sizes = [512, 128], strides = [1, 1]} : vector<512x384xf32> to vector<512x128xf32>
    %13 = arith.truncf %12 : vector<512x128xf32> to vector<512x128xbf16>
    %c0_8 = arith.constant 0 : index
    %c0_9 = arith.constant 0 : index
    %14 = vector.load %arg5[%c0_8, %c0_9] : memref<512x128xbf16, #tpu.memory_space<vmem>>, vector<512x128xbf16>
    tpu.vector_store %arg5[%c0_8, %c0_9], %13 {strides = array<i32>} : memref<512x128xbf16, #tpu.memory_space<vmem>>, vector<512x128xbf16>,
    %15 = vector.extract_strided_slice %6 {offsets = [0, 256], sizes = [512, 128], strides = [1, 1]} : vector<512x384xf32> to vector<512x128xf32>
    %16 = arith.truncf %15 : vector<512x128xf32> to vector<512x128xbf16>
    %c0_10 = arith.constant 0 : index
    %c0_11 = arith.constant 0 : index
    %17 = vector.load %arg6[%c0_10, %c0_11] : memref<512x128xbf16, #tpu.memory_space<vmem>>, vector<512x128xbf16>
    tpu.vector_store %arg6[%c0_10, %c0_11], %16 {strides = array<i32>} : memref<512x128xbf16, #tpu.memory_space<vmem>>, vector<512x128xbf16>,
    return
  }
  func.func @transform_0(%arg0: i32) -> (i32, i32) {
    %c0_i32 = arith.constant 0 : i32
    %c0_i32_0 = arith.constant 0 : i32
    return %arg0, %c0_i32 : i32, i32
  }
  func.func @transform_1(%arg0: i32) -> (i32, i32) {
    %c0_i32 = arith.constant 0 : i32
    %c0_i32_0 = arith.constant 0 : i32
    %c0_i32_1 = arith.constant 0 : i32
    return %c0_i32, %c0_i32_0 : i32, i32
  }
  func.func @transform_2(%arg0: i32) -> (i32, i32) {
    %c0_i32 = arith.constant 0 : i32
    %c0_i32_0 = arith.constant 0 : i32
    %c0_i32_1 = arith.constant 0 : i32
    return %c0_i32, %c0_i32_0 : i32, i32
  }
  func.func @transform_3(%arg0: i32) -> (i32, i32) {
    %c0_i32 = arith.constant 0 : i32
    %c0_i32_0 = arith.constant 0 : i32
    return %arg0, %c0_i32 : i32, i32
  }
  func.func @transform_4(%arg0: i32) -> (i32, i32) {
    %c0_i32 = arith.constant 0 : i32
    %c0_i32_0 = arith.constant 0 : i32
    return %arg0, %c0_i32 : i32, i32
  }
  func.func @transform_5(%arg0: i32) -> (i32, i32) {
    %c0_i32 = arith.constant 0 : i32
    %c0_i32_0 = arith.constant 0 : i32
    return %arg0, %c0_i32 : i32, i32
  }
}

module attributes {stable_mosaic.version = 11 : i64} {
  func.func @qkv_proj_kernel(%arg0: i32, %arg1: memref<512x128xf32, #tpu.memory_space<vmem>>, %arg2: memref<128x384xbf16, #tpu.memory_space<vmem>>, %arg3: memref<1x384xf32, #tpu.memory_space<vmem>>, %arg4: memref<512x128xbf16, #tpu.memory_space<vmem>>, %arg5: memref<512x128xbf16, #tpu.memory_space<vmem>>, %arg6: memref<512x128xbf16, #tpu.memory_space<vmem>>) attributes {dimension_semantics = [#tpu.dimension_semantics<parallel>], iteration_bounds = array<i64: 2>, scalar_prefetch = 0 : i64, scratch_operands = 0 : i64, tpu.core_type = #tpu.core_type<tc>, window_params = [{transform_indices = @transform_0, window_bounds = array<i64: 512, 128>}, {pipeline_mode = #tpu.pipeline_mode<synchronous>, transform_indices = @transform_1, window_bounds = array<i64: 128, 384>}, {pipeline_mode = #tpu.pipeline_mode<synchronous>, transform_indices = @transform_2, window_bounds = array<i64: 1, 384>}, {transform_indices = @transform_3, window_bounds = array<i64: 512, 128>}, {transform_indices = @transform_4, window_bounds = array<i64: 512, 128>}, {transform_indices = @transform_5, window_bounds = array<i64: 512, 128>}]} {
    %c0 = arith.constant 0 : index
    %c0_0 = arith.constant 0 : index
    %0 = vector.load %arg1[%c0, %c0_0] : memref<512x128xf32, #tpu.memory_space<vmem>>, vector<512x128xf32>
    %1 = arith.truncf %0 : vector<512x128xf32> to vector<512x128xbf16>
    %c0_1 = arith.constant 0 : index
    %c0_2 = arith.constant 0 : index
    %2 = vector.load %arg2[%c0_1, %c0_2] : memref<128x384xbf16, #tpu.memory_space<vmem>>, vector<128x384xbf16>
    %cst = arith.constant dense<0.000000e+00> : vector<512x384xf32>
    %3 = tpu.matmul %1, %2, %cst {dimension_numbers = #tpu.dot_dimension_numbers<[1], [0], [0], [1], [0, 0, 1, 1], [], []>} : vector<512x128xbf16>, vector<128x384xbf16>, vector<512x384xf32> -> vector<512x384xf32>
    %c0_3 = arith.constant 0 : index
    %c0_4 = arith.constant 0 : index
    %4 = vector.load %arg3[%c0_3, %c0_4] : memref<1x384xf32, #tpu.memory_space<vmem>>, vector<1x384xf32>
    %5 = vector.broadcast %4 : vector<1x384xf32> to vector<512x384xf32>
    %6 = arith.addf %3, %5 : vector<512x384xf32>
    %7 = vector.extract_strided_slice %6 {offsets = [0, 0], sizes = [512, 128], strides = [1, 1]} : vector<512x384xf32> to vector<512x128xf32>
    %cst_5 = arith.constant 0.0883883461 : f32
    %8 = vector.broadcast %cst_5 : f32 to vector<512x128xf32>
    %9 = arith.mulf %7, %8 : vector<512x128xf32>
    %10 = arith.truncf %9 : vector<512x128xf32> to vector<512x128xbf16>
    %c0_6 = arith.constant 0 : index
    %c0_7 = arith.constant 0 : index
    %11 = vector.load %arg4[%c0_6, %c0_7] : memref<512x128xbf16, #tpu.memory_space<vmem>>, vector<512x128xbf16>
    tpu.vector_store %arg4[%c0_6, %c0_7], %10 {strides = array<i32>} : memref<512x128xbf16, #tpu.memory_space<vmem>>, vector<512x128xbf16>,
    %12 = vector.extract_strided_slice %6 {offsets = [0, 128], sizes = [512, 128], strides = [1, 1]} : vector<512x384xf32> to vector<512x128xf32>
    %13 = arith.truncf %12 : vector<512x128xf32> to vector<512x128xbf16>
    %c0_8 = arith.constant 0 : index
    %c0_9 = arith.constant 0 : index
    %14 = vector.load %arg5[%c0_8, %c0_9] : memref<512x128xbf16, #tpu.memory_space<vmem>>, vector<512x128xbf16>
    tpu.vector_store %arg5[%c0_8, %c0_9], %13 {strides = array<i32>} : memref<512x128xbf16, #tpu.memory_space<vmem>>, vector<512x128xbf16>,
    %15 = vector.extract_strided_slice %6 {offsets = [0, 256], sizes = [512, 128], strides = [1, 1]} : vector<512x384xf32> to vector<512x128xf32>
    %16 = arith.truncf %15 : vector<512x128xf32> to vector<512x128xbf16>
    %c0_10 = arith.constant 0 : index
    %c0_11 = arith.constant 0 : index
    %17 = vector.load %arg6[%c0_10, %c0_11] : memref<512x128xbf16, #tpu.memory_space<vmem>>, vector<512x128xbf16>
    tpu.vector_store %arg6[%c0_10, %c0_11], %16 {strides = array<i32>} : memref<512x128xbf16, #tpu.memory_space<vmem>>, vector<512x128xbf16>,
    return
  }
  func.func @transform_0(%arg0: i32) -> (i32, i32) {
    %c0_i32 = arith.constant 0 : i32
    %c0_i32_0 = arith.constant 0 : i32
    return %arg0, %c0_i32 : i32, i32
  }
  func.func @transform_1(%arg0: i32) -> (i32, i32) {
    %c0_i32 = arith.constant 0 : i32
    %c0_i32_0 = arith.constant 0 : i32
    %c0_i32_1 = arith.constant 0 : i32
    return %c0_i32, %c0_i32_0 : i32, i32
  }
  func.func @transform_2(%arg0: i32) -> (i32, i32) {
    %c0_i32 = arith.constant 0 : i32
    %c0_i32_0 = arith.constant 0 : i32
    %c0_i32_1 = arith.constant 0 : i32
    return %c0_i32, %c0_i32_0 : i32, i32
  }
  func.func @transform_3(%arg0: i32) -> (i32, i32) {
    %c0_i32 = arith.constant 0 : i32
    %c0_i32_0 = arith.constant 0 : i32
    return %arg0, %c0_i32 : i32, i32
  }
  func.func @transform_4(%arg0: i32) -> (i32, i32) {
    %c0_i32 = arith.constant 0 : i32
    %c0_i32_0 = arith.constant 0 : i32
    return %arg0, %c0_i32 : i32, i32
  }
  func.func @transform_5(%arg0: i32) -> (i32, i32) {
    %c0_i32 = arith.constant 0 : i32
    %c0_i32_0 = arith.constant 0 : i32
    return %arg0, %c0_i32 : i32, i32
  }
}

</mosaic_0001>

<llo_original>
// kernel: tpu_custom_call.1
$region0: #{tpu_custom_call.1}
  #allocation0 [shape = 'u32[]', space=smem, size = 0x4, offset = 0x4, fixed_abs, tag = 'smem constant byte address 0x4 - core index']
  #allocation1 [shape = 'u32[72,128]{1,0:T(1,128)}', space=vmem, size = 0x9000, scoped, tag = 'internal scratch']
  %s0 = inlined_call_operand.hbm [shape: f32[1024,128], index: 0, kind: input, shape index: {}]
  %s1 = inlined_call_operand.hbm [shape: bf16[128,384], index: 1, kind: input, shape index: {}]
  %s2 = inlined_call_operand.hbm [shape: f32[1,384], index: 2, kind: input, shape index: {}]
  %s3 = inlined_call_operand.hbm [shape: bf16[1024,128], index: 3, kind: output, shape index: {0}]
  %s4 = inlined_call_operand.hbm [shape: bf16[1024,128], index: 4, kind: output, shape index: {1}]
  %s5 = inlined_call_operand.hbm [shape: bf16[1024,128], index: 5, kind: output, shape index: {2}]
  %6 = xla_tuple %s3, %s4, %s5
  %s7 = sld [smem:[#allocation0]]
  $region73: #{tpu_custom_call.1} parent=0
    _
  %s9 = ssub.s32 1, %s7
  %s10 = scalar_select 0, %s9, %s7
  $region1: #{tpu_custom_call.1} parent=0
    #allocation2 [shape = 'u8[524288]{0}', space=vmem, size = 0x80000, scoped, tag = 'input window, operand 0']
    #allocation3 [shape = 's32[2]{0}', space=sflag, size = 0x8, scoped, tag = 'scoped memory for tpu_custom_call.1']
    #allocation4 [shape = 's32[2]{0}', space=sflag, size = 0x8, scoped, tag = 'scoped memory for tpu_custom_call.1']
    #allocation5 [shape = 'u8[98304]{0}', space=vmem, size = 0x18000, scoped, tag = 'input window, operand 1, single buffered']
    #allocation6 [shape = 's32[1]{0}', space=sflag, size = 0x4, scoped, tag = 'scoped memory for tpu_custom_call.1']
    #allocation7 [shape = 'u8[1536]{0}', space=vmem, size = 0x800, scoped, tag = 'input window, operand 2, single buffered']
    #allocation8 [shape = 'u8[262144]{0}', space=vmem, size = 0x40000, scoped, tag = 'output window, operand 0']
    #allocation9 [shape = 'u8[262144]{0}', space=vmem, size = 0x40000, scoped, tag = 'output window, operand 1']
    #allocation10 [shape = 's32[2]{0}', space=sflag, size = 0x8, scoped, tag = 'scoped memory for tpu_custom_call.1']
    #allocation11 [shape = 'u8[262144]{0}', space=vmem, size = 0x40000, scoped, tag = 'output window, operand 2']
    %11 = vsyncpa [#allocation3], 0
    %s12 = scalar_lea.sflag [#allocation3], 1
    %13 = vsyncpa %s12, 0
    %14 = vsyncpa [#allocation6], 0
    %15 = vsyncpa [#allocation4], 0
    %s16 = scalar_lea.sflag [#allocation4], 1
    %17 = vsyncpa %s16, 0
    %18 = vsyncpa [#allocation10], 0
    %s19 = scalar_lea.sflag [#allocation10], 1
    %20 = vsyncpa %s19, 0
    loop: start=0, step=1, limit=4
    $region2: #{tpu_custom_call.1} parent=1 // loop_pre_header
      _
    $region3: #{tpu_custom_call.1} parent=1 // loop_header
      %s22 = sphi 0, %s26
      %p23 = scmp.ge.s32.totalorder %s22, 4
      %s32 = sphi 0, %s34
      %s35 = sphi 0, %s32
      %s36 = sphi 0, %s35
      %s52 = sphi 0, %s36
      %s56 = sphi 0, %s56
      %s58 = sphi 0, %s56
      %s59 = sphi 0, %s58
      %s73 = sphi 0, %s59
      %s77 = sphi 0, %s77
      %s79 = sphi 0, %s77
      %s80 = sphi 0, %s79
      %s94 = sphi 0, %s80
      %s100 = sphi 0, %s102
      %s103 = sphi 0, %s100
      %s104 = sphi 0, %s103
      %s120 = sphi 0, %s104
      %s126 = sphi 0, %s128
      %s129 = sphi 0, %s126
      %s130 = sphi 0, %s129
      %s146 = sphi 0, %s130
      %s152 = sphi 0, %s154
      %s155 = sphi 0, %s152
      %s156 = sphi 0, %s155
      %s172 = sphi 0, %s156
    $region4: #{tpu_custom_call.1} parent=1 // loop_header_branch
      %25 = sbr.rel (%p23) target = $region8
    $region5: #{tpu_custom_call.1} parent=1 // loop_body
      %s27 = ssub.s32 %s22, 1
      %s28 = ssub.s32 %s22, 2
      %s29 = sadd.s32 %s22, 1
      %s30 = ssub.s32 %s22, %s29
      %p31 = scmp.eq.s32.totalorder %s30, 0
      %s33 = sadd.s32 %s32, 1
      %s34 = scalar_select %p31, %s32, %s33
      %p37 = pneg %p31
      %p38 = scmp.eq.s32.totalorder %s22, 1
      %p39 = por %p37, %p38
      %p40 = scmp.ne.s32.totalorder %s32, %s35
      %p41 = scmp.eq.s32.totalorder %s22, 0
      %p42 = por %p40, %p41
      %p43 = scmp.ne.s32.totalorder %s32, %s35
      %p44 = scmp.eq.s32.totalorder %s27, 1
      %p45 = por %p43, %p44
      %p46 = scmp.ne.s32.totalorder %s35, %s36
      %p47 = scmp.eq.s32.totalorder %s27, 0
      %p48 = por %p46, %p47
      %p49 = scmp.ne.s32.totalorder %s35, %s36
      %p50 = scmp.eq.s32.totalorder %s28, 1
      %p51 = por %p49, %p50
      %p53 = scmp.ne.s32.totalorder %s36, %s52
      %p54 = scmp.eq.s32.totalorder %s28, 0
      %p55 = por %p53, %p54
      %s57 = sadd.s32 %s56, 1
      %p60 = scmp.eq.s32.totalorder %s22, 1
      %p61 = scmp.ne.s32.totalorder %s56, %s58
      %p62 = scmp.eq.s32.totalorder %s22, 0
      %p63 = por %p61, %p62
      %p64 = scmp.ne.s32.totalorder %s56, %s58
      %p65 = scmp.eq.s32.totalorder %s27, 1
      %p66 = por %p64, %p65
      %p67 = scmp.ne.s32.totalorder %s58, %s59
      %p68 = scmp.eq.s32.totalorder %s27, 0
      %p69 = por %p67, %p68
      %p70 = scmp.ne.s32.totalorder %s58, %s59
      %p71 = scmp.eq.s32.totalorder %s28, 1
      %p72 = por %p70, %p71
      %p74 = scmp.ne.s32.totalorder %s59, %s73
      %p75 = scmp.eq.s32.totalorder %s28, 0
      %p76 = por %p74, %p75
      %s78 = sadd.s32 %s77, 1
      %p81 = scmp.eq.s32.totalorder %s22, 1
      %p82 = scmp.ne.s32.totalorder %s77, %s79
      %p83 = scmp.eq.s32.totalorder %s22, 0
      %p84 = por %p82, %p83
      %p85 = scmp.ne.s32.totalorder %s77, %s79
      %p86 = scmp.eq.s32.totalorder %s27, 1
      %p87 = por %p85, %p86
      %p88 = scmp.ne.s32.totalorder %s79, %s80
      %p89 = scmp.eq.s32.totalorder %s27, 0
      %p90 = por %p88, %p89
      %p91 = scmp.ne.s32.totalorder %s79, %s80
      %p92 = scmp.eq.s32.totalorder %s28, 1
      %p93 = por %p91, %p92
      %p95 = scmp.ne.s32.totalorder %s80, %s94
      %p96 = scmp.eq.s32.totalorder %s28, 0
      %p97 = por %p95, %p96
      %s98 = ssub.s32 %s22, %s29
      %p99 = scmp.eq.s32.totalorder %s98, 0
      %s101 = sadd.s32 %s100, 1
      %s102 = scalar_select %p99, %s100, %s101
      %p105 = pneg %p99
      %p106 = scmp.eq.s32.totalorder %s22, 1
      %p107 = por %p105, %p106
      %p108 = scmp.ne.s32.totalorder %s100, %s103
      %p109 = scmp.eq.s32.totalorder %s22, 0
      %p110 = por %p108, %p109
      %p111 = scmp.ne.s32.totalorder %s100, %s103
      %p112 = scmp.eq.s32.totalorder %s27, 1
      %p113 = por %p111, %p112
      %p114 = scmp.ne.s32.totalorder %s103, %s104
      %p115 = scmp.eq.s32.totalorder %s27, 0
      %p116 = por %p114, %p115
      %p117 = scmp.ne.s32.totalorder %s103, %s104
      %p118 = scmp.eq.s32.totalorder %s28, 1
      %p119 = por %p117, %p118
      %p121 = scmp.ne.s32.totalorder %s104, %s120
      %p122 = scmp.eq.s32.totalorder %s28, 0
      %p123 = por %p121, %p122
      %s124 = ssub.s32 %s22, %s29
      %p125 = scmp.eq.s32.totalorder %s124, 0
      %s127 = sadd.s32 %s126, 1
      %s128 = scalar_select %p125, %s126, %s127
      %p131 = pneg %p125
      %p132 = scmp.eq.s32.totalorder %s22, 1
      %p133 = por %p131, %p132
      %p134 = scmp.ne.s32.totalorder %s126, %s129
      %p135 = scmp.eq.s32.totalorder %s22, 0
      %p136 = por %p134, %p135
      %p137 = scmp.ne.s32.totalorder %s126, %s129
      %p138 = scmp.eq.s32.totalorder %s27, 1
      %p139 = por %p137, %p138
      %p140 = scmp.ne.s32.totalorder %s129, %s130
      %p141 = scmp.eq.s32.totalorder %s27, 0
      %p142 = por %p140, %p141
      %p143 = scmp.ne.s32.totalorder %s129, %s130
      %p144 = scmp.eq.s32.totalorder %s28, 1
      %p145 = por %p143, %p144
      %p147 = scmp.ne.s32.totalorder %s130, %s146
      %p148 = scmp.eq.s32.totalorder %s28, 0
      %p149 = por %p147, %p148
      %s150 = ssub.s32 %s22, %s29
      %p151 = scmp.eq.s32.totalorder %s150, 0
      %s153 = sadd.s32 %s152, 1
      %s154 = scalar_select %p151, %s152, %s153
      %p157 = pneg %p151
      %p158 = scmp.eq.s32.totalorder %s22, 1
      %p159 = por %p157, %p158
      %p160 = scmp.ne.s32.totalorder %s152, %s155
      %p161 = scmp.eq.s32.totalorder %s22, 0
      %p162 = por %p160, %p161
      %p163 = scmp.ne.s32.totalorder %s152, %s155
      %p164 = scmp.eq.s32.totalorder %s27, 1
      %p165 = por %p163, %p164
      %p166 = scmp.ne.s32.totalorder %s155, %s156
      %p167 = scmp.eq.s32.totalorder %s27, 0
      %p168 = por %p166, %p167
      %p169 = scmp.ne.s32.totalorder %s155, %s156
      %p170 = scmp.eq.s32.totalorder %s28, 1
      %p171 = por %p169, %p170
      %p173 = scmp.ne.s32.totalorder %s156, %s172
      %p174 = scmp.eq.s32.totalorder %s28, 0
      %p175 = por %p173, %p174
      %p176 = scmp.le.s32.totalorder 1, %s22
      %p177 = scmp.lt.s32.totalorder %s22, 3
      %p178 = pnand %p176, %p177
      %p179 = pneg %p178
      // Predicated region
      $region9: #{tpu_custom_call.1} parent=5 // pred_check
        _
      $region10: #{tpu_custom_call.1} parent=5 // pred_check_branch
        %181 = sbr.rel (%p178) target = $region12
      $region11: #{tpu_custom_call.1} parent=5 // pred_region
        %s182 = ssub.s32 %s22, 1
        // Predicated region
        $region13: #{tpu_custom_call.1} parent=11 // pred_check
          %p183 = pneg %p69
        $region14: #{tpu_custom_call.1} parent=11 // pred_check_branch
          %185 = sbr.rel (%p183) target = $region16
        $region15: #{tpu_custom_call.1} parent=11 // pred_region
          %187 = vsyncadd [#allocation6], 0
          %s188 = sshll.u32 %s1, 4
          %s189 = int_to_ptr.hbm [resolvable:$true] %s188
          %s190 = sshll.u32 [#allocation5], 4
          %s191 = int_to_ptr.vmem [resolvable:$true] %s190
          %196 = dma.hbm_to_vmem [thread:$0]  %s189, 3072, %s191, [#allocation6], 192, 192, 12
        $region16: #{tpu_custom_call.1} parent=11 // pred_fallthru
          _
        // Predicated region
        $region17: #{tpu_custom_call.1} parent=11 // pred_check
          %p197 = pneg %p90
        $region18: #{tpu_custom_call.1} parent=11 // pred_check_branch
          %199 = sbr.rel (%p197) target = $region20
        $region19: #{tpu_custom_call.1} parent=11 // pred_region
          %201 = vsyncadd [#allocation6], 0
          %s203 = sshll.u32 %s2, 4
          %s204 = int_to_ptr.hbm [resolvable:$true] %s203
          %s205 = sshll.u32 [#allocation7], 4
          %s206 = int_to_ptr.vmem [resolvable:$true] %s205
          %208 = dma.hbm_to_vmem [thread:$0]  %s204, 48, %s206, [#allocation6]
        $region20: #{tpu_custom_call.1} parent=11 // pred_fallthru
          _
      $region12: #{tpu_custom_call.1} parent=5 // pred_fallthru
        _
      %p209 = scmp.lt.s32.totalorder %s22, 2
      // Predicated region
      $region21: #{tpu_custom_call.1} parent=5 // pred_check
        %p210 = pneg %p209
      $region22: #{tpu_custom_call.1} parent=5 // pred_check_branch
        %212 = sbr.rel (%p210) target = $region24
      $region23: #{tpu_custom_call.1} parent=5 // pred_region
        // Predicated region
        $region25: #{tpu_custom_call.1} parent=23 // pred_check
          %p213 = pneg %p42
        $region26: #{tpu_custom_call.1} parent=23 // pred_check_branch
          %215 = sbr.rel (%p213) target = $region28
        $region27: #{tpu_custom_call.1} parent=23 // pred_region
          %s216 = sand.u32 %s32, 1
          %s217 = scalar_lea.sflag [#allocation3], %s216
          %s218 = sand.u32 %s32, 1
          %s219 = smul.addr %s218, 512
          %s220 = scalar_lea.vmem [#allocation2], %s219
          %s221 = smul.u32 64, %s22
          %223 = vsyncadd %s217, 0
          %s224 = smul.addr %s221, 8
          %s225 = scalar_lea.hbm %s0, %s224
          %s226 = sshll.u32 %s225, 4
          %s227 = int_to_ptr.hbm [resolvable:$true] %s226
          %s228 = sshll.u32 %s220, 4
          %s229 = int_to_ptr.vmem [resolvable:$true] %s228
          %234 = dma.hbm_to_vmem [thread:$0]  %s227, 8192, %s229, %s217, 128, 128, 8
        $region28: #{tpu_custom_call.1} parent=23 // pred_fallthru
          _
      $region24: #{tpu_custom_call.1} parent=5 // pred_fallthru
        _
      %p235 = scmp.le.s32.totalorder 1, %s22
      %p236 = scmp.lt.s32.totalorder %s22, 3
      %p237 = pnand %p235, %p236
      %p238 = pneg %p237
      // Predicated region
      $region29: #{tpu_custom_call.1} parent=5 // pred_check
        _
      $region30: #{tpu_custom_call.1} parent=5 // pred_check_branch
        %240 = sbr.rel (%p237) target = $region32
      $region31: #{tpu_custom_call.1} parent=5 // pred_region
        %s241 = ssub.s32 %s22, 1
        %s242 = sand.u32 %s35, 1
        %s243 = scalar_lea.sflag [#allocation3], %s242
        %s244 = sand.u32 %s35, 1
        %s245 = smul.addr %s244, 512
        %s246 = scalar_lea.vmem [#allocation2], %s245
        // Predicated region
        $region33: #{tpu_custom_call.1} parent=31 // pred_check
          %p247 = pneg %p48
        $region34: #{tpu_custom_call.1} parent=31 // pred_check_branch
          %249 = sbr.rel (%p247) target = $region36
        $region35: #{tpu_custom_call.1} parent=31 // pred_region
          %251 = dma.done %s243, 8192
        $region36: #{tpu_custom_call.1} parent=31 // pred_fallthru
          _
        // Predicated region
        $region37: #{tpu_custom_call.1} parent=31 // pred_check
          %p252 = pneg %p69
        $region38: #{tpu_custom_call.1} parent=31 // pred_check_branch
          %254 = sbr.rel (%p252) target = $region40
        $region39: #{tpu_custom_call.1} parent=31 // pred_region
          %256 = dma.done [#allocation6], 3072
        $region40: #{tpu_custom_call.1} parent=31 // pred_fallthru
          _
        // Predicated region
        $region41: #{tpu_custom_call.1} parent=31 // pred_check
          %p257 = pneg %p90
        $region42: #{tpu_custom_call.1} parent=31 // pred_check_branch
          %259 = sbr.rel (%p257) target = $region44
        $region43: #{tpu_custom_call.1} parent=31 // pred_region
          %261 = dma.done [#allocation6], 48
        $region44: #{tpu_custom_call.1} parent=31 // pred_fallthru
          _
        %s262 = sand.u32 %s35, 1
        %s263 = scalar_lea.sflag [#allocation3], %s262
        %s264 = sand.u32 %s35, 1
        %s265 = smul.addr %s264, 512
        %s266 = scalar_lea.vmem [#allocation2], %s265
        %p267 = pneg %p48
        %p268 = pneg %p45
        %p269 = pneg %p69
        %p270 = pneg %p66
        %p271 = pneg %p90
        %p272 = pneg %p87
        %p273 = pneg %p116
        %p274 = pneg %p113
        %s275 = sand.u32 %s103, 1
        %s276 = scalar_lea.sflag [#allocation4], %s275
        %s277 = sand.u32 %s103, 1
        %s278 = smul.addr %s277, 256
        %s279 = scalar_lea.vmem [#allocation8], %s278
        %p280 = pneg %p142
        %p281 = pneg %p139
        %s282 = sand.u32 %s27, 1
        %s283 = scalar_lea.sflag [#allocation10], %s282
        %s284 = sand.u32 %s129, 1
        %s285 = smul.addr %s284, 256
        %s286 = scalar_lea.vmem [#allocation9], %s285
        %p287 = pneg %p168
        %p288 = pneg %p165
        %s289 = sand.u32 %s27, 1
        %s290 = scalar_lea.sflag [#allocation10], %s289
        %s291 = sand.u32 %s155, 1
        %s292 = smul.addr %s291, 256
        %s293 = scalar_lea.vmem [#allocation11], %s292
        %s294 = smul.u32 64, %s27
        %s295 = smul.u32 64, %s27
        %s296 = smul.u32 64, %s27
        %s297 = smul.u32 64, %s27
        %v298 = vld [vmem:[%s246] sm:$0xff]
        %v299 = vld [vmem:[%s246 + $0x8] sm:$0xff]
        %v300 = vld [vmem:[%s246 + $0x10] sm:$0xff]
        %v301 = vld [vmem:[%s246 + $0x18] sm:$0xff]
        %v302 = vld [vmem:[%s246 + $0x20] sm:$0xff]
        %v303 = vld [vmem:[%s246 + $0x28] sm:$0xff]
        %v304 = vld [vmem:[%s246 + $0x30] sm:$0xff]
        %v305 = vld [vmem:[%s246 + $0x38] sm:$0xff]
        %v306 = vld [vmem:[%s246 + $0x40] sm:$0xff]
        %v307 = vld [vmem:[%s246 + $0x48] sm:$0xff]
        %v308 = vld [vmem:[%s246 + $0x50] sm:$0xff]
        %v309 = vld [vmem:[%s246 + $0x58] sm:$0xff]
        %v310 = vld [vmem:[%s246 + $0x60] sm:$0xff]
        %v311 = vld [vmem:[%s246 + $0x68] sm:$0xff]
        %v312 = vld [vmem:[%s246 + $0x70] sm:$0xff]
        %v313 = vld [vmem:[%s246 + $0x78] sm:$0xff]
        %v314 = vld [vmem:[%s246 + $0x80] sm:$0xff]
        %v315 = vld [vmem:[%s246 + $0x88] sm:$0xff]
        %v316 = vld [vmem:[%s246 + $0x90] sm:$0xff]
        %v317 = vld [vmem:[%s246 + $0x98] sm:$0xff]
        %v318 = vld [vmem:[%s246 + $0xa0] sm:$0xff]
        %v319 = vld [vmem:[%s246 + $0xa8] sm:$0xff]
        %v320 = vld [vmem:[%s246 + $0xb0] sm:$0xff]
        %v321 = vld [vmem:[%s246 + $0xb8] sm:$0xff]
        %v322 = vld [vmem:[%s246 + $0xc0] sm:$0xff]
        %v323 = vld [vmem:[%s246 + $0xc8] sm:$0xff]
        %v324 = vld [vmem:[%s246 + $0xd0] sm:$0xff]
        %v325 = vld [vmem:[%s246 + $0xd8] sm:$0xff]
        %v326 = vld [vmem:[%s246 + $0xe0] sm:$0xff]
        %v327 = vld [vmem:[%s246 + $0xe8] sm:$0xff]
        %v328 = vld [vmem:[%s246 + $0xf0] sm:$0xff]
        %v329 = vld [vmem:[%s246 + $0xf8] sm:$0xff]
        %v330 = vld [vmem:[%s246 + $0x100] sm:$0xff]
        %v331 = vld [vmem:[%s246 + $0x108] sm:$0xff]
        %v332 = vld [vmem:[%s246 + $0x110] sm:$0xff]
        %v333 = vld [vmem:[%s246 + $0x118] sm:$0xff]
        %v334 = vld [vmem:[%s246 + $0x120] sm:$0xff]
        %v335 = vld [vmem:[%s246 + $0x128] sm:$0xff]
        %v336 = vld [vmem:[%s246 + $0x130] sm:$0xff]
        %v337 = vld [vmem:[%s246 + $0x138] sm:$0xff]
        %v338 = vld [vmem:[%s246 + $0x140] sm:$0xff]
        %v339 = vld [vmem:[%s246 + $0x148] sm:$0xff]
        %v340 = vld [vmem:[%s246 + $0x150] sm:$0xff]
        %v341 = vld [vmem:[%s246 + $0x158] sm:$0xff]
        %v342 = vld [vmem:[%s246 + $0x160] sm:$0xff]
        %v343 = vld [vmem:[%s246 + $0x168] sm:$0xff]
        %v344 = vld [vmem:[%s246 + $0x170] sm:$0xff]
        %v345 = vld [vmem:[%s246 + $0x178] sm:$0xff]
        %v346 = vld [vmem:[%s246 + $0x180] sm:$0xff]
        %v347 = vld [vmem:[%s246 + $0x188] sm:$0xff]
        %v348 = vld [vmem:[%s246 + $0x190] sm:$0xff]
        %v349 = vld [vmem:[%s246 + $0x198] sm:$0xff]
        %v350 = vld [vmem:[%s246 + $0x1a0] sm:$0xff]
        %v351 = vld [vmem:[%s246 + $0x1a8] sm:$0xff]
        %v352 = vld [vmem:[%s246 + $0x1b0] sm:$0xff]
        %v353 = vld [vmem:[%s246 + $0x1b8] sm:$0xff]
        %v354 = vld [vmem:[%s246 + $0x1c0] sm:$0xff]
        %v355 = vld [vmem:[%s246 + $0x1c8] sm:$0xff]
        %v356 = vld [vmem:[%s246 + $0x1d0] sm:$0xff]
        %v357 = vld [vmem:[%s246 + $0x1d8] sm:$0xff]
        %v358 = vld [vmem:[%s246 + $0x1e0] sm:$0xff]
        %v359 = vld [vmem:[%s246 + $0x1e8] sm:$0xff]
        %v360 = vld [vmem:[%s246 + $0x1f0] sm:$0xff]
        %v361 = vld [vmem:[%s246 + $0x1f8] sm:$0xff]
        %v362 = vpack.c.bf16 %v299, %v298
        %v363 = vpack.c.bf16 %v301, %v300
        %v364 = vpack.c.bf16 %v303, %v302
        %v365 = vpack.c.bf16 %v305, %v304
        %v366 = vpack.c.bf16 %v307, %v306
        %v367 = vpack.c.bf16 %v309, %v308
        %v368 = vpack.c.bf16 %v311, %v310
        %v369 = vpack.c.bf16 %v313, %v312
        %v370 = vpack.c.bf16 %v315, %v314
        %v371 = vpack.c.bf16 %v317, %v316
        %v372 = vpack.c.bf16 %v319, %v318
        %v373 = vpack.c.bf16 %v321, %v320
        %v374 = vpack.c.bf16 %v323, %v322
        %v375 = vpack.c.bf16 %v325, %v324
        %v376 = vpack.c.bf16 %v327, %v326
        %v377 = vpack.c.bf16 %v329, %v328
        %v378 = vpack.c.bf16 %v331, %v330
        %v379 = vpack.c.bf16 %v333, %v332
        %v380 = vpack.c.bf16 %v335, %v334
        %v381 = vpack.c.bf16 %v337, %v336
        %v382 = vpack.c.bf16 %v339, %v338
        %v383 = vpack.c.bf16 %v341, %v340
        %v384 = vpack.c.bf16 %v343, %v342
        %v385 = vpack.c.bf16 %v345, %v344
        %v386 = vpack.c.bf16 %v347, %v346
        %v387 = vpack.c.bf16 %v349, %v348
        %v388 = vpack.c.bf16 %v351, %v350
        %v389 = vpack.c.bf16 %v353, %v352
        %v390 = vpack.c.bf16 %v355, %v354
        %v391 = vpack.c.bf16 %v357, %v356
        %v392 = vpack.c.bf16 %v359, %v358
        %v393 = vpack.c.bf16 %v361, %v360
        %v394 = vld [vmem:[#allocation5] sm:$0xff]
        %v395 = vld [vmem:[#allocation5 + $0x8] sm:$0xf]
        %v396 = vld [vmem:[#allocation5 + $0xc] sm:$0xff]
        %v397 = vld [vmem:[#allocation5 + $0x14] sm:$0xf]
        %v398 = vld [vmem:[#allocation5 + $0x18] sm:$0xff]
        %v399 = vld [vmem:[#allocation5 + $0x20] sm:$0xf]
        %v400 = vld [vmem:[#allocation5 + $0x24] sm:$0xff]
        %v401 = vld [vmem:[#allocation5 + $0x2c] sm:$0xf]
        %v402 = vld [vmem:[#allocation5 + $0x30] sm:$0xff]
        %v403 = vld [vmem:[#allocation5 + $0x38] sm:$0xf]
        %v404 = vld [vmem:[#allocation5 + $0x3c] sm:$0xff]
        %v405 = vld [vmem:[#allocation5 + $0x44] sm:$0xf]
        %v406 = vld [vmem:[#allocation5 + $0x48] sm:$0xff]
        %v407 = vld [vmem:[#allocation5 + $0x50] sm:$0xf]
        %v408 = vld [vmem:[#allocation5 + $0x54] sm:$0xff]
        %v409 = vld [vmem:[#allocation5 + $0x5c] sm:$0xf]
        %v410 = vld [vmem:[#allocation5 + $0x60] sm:$0xff]
        %v411 = vld [vmem:[#allocation5 + $0x68] sm:$0xf]
        %v412 = vld [vmem:[#allocation5 + $0x6c] sm:$0xff]
        %v413 = vld [vmem:[#allocation5 + $0x74] sm:$0xf]
        %v414 = vld [vmem:[#allocation5 + $0x78] sm:$0xff]
        %v415 = vld [vmem:[#allocation5 + $0x80] sm:$0xf]
        %v416 = vld [vmem:[#allocation5 + $0x84] sm:$0xff]
        %v417 = vld [vmem:[#allocation5 + $0x8c] sm:$0xf]
        %v418 = vld [vmem:[#allocation5 + $0x90] sm:$0xff]
        %v419 = vld [vmem:[#allocation5 + $0x98] sm:$0xf]
        %v420 = vld [vmem:[#allocation5 + $0x9c] sm:$0xff]
        %v421 = vld [vmem:[#allocation5 + $0xa4] sm:$0xf]
        %v422 = vld [vmem:[#allocation5 + $0xa8] sm:$0xff]
        %v423 = vld [vmem:[#allocation5 + $0xb0] sm:$0xf]
        %v424 = vld [vmem:[#allocation5 + $0xb4] sm:$0xff]
        %v425 = vld [vmem:[#allocation5 + $0xbc] sm:$0xf]
        %v426 = vld [vmem:[#allocation7] sm:$0x7]
        %v428 = vperm.slane %v426, 0
        %v429 = vperm.slane %v426, 1
        %v430 = vperm.slane %v426, 2
        %v466 = vunpack.c.l.b16 %v394
        %v467 = vunpack.c.h.b16 %v394
        %v468 = vunpack.c.l.b16 %v395
        %v469 = vunpack.c.l.b16 %v396
        %v470 = vunpack.c.h.b16 %v396
        %v471 = vunpack.c.l.b16 %v397
        %v472 = vunpack.c.l.b16 %v398
        %v473 = vunpack.c.h.b16 %v398
        %v474 = vunpack.c.l.b16 %v399
        %v475 = vunpack.c.l.b16 %v400
        %v476 = vunpack.c.h.b16 %v400
        %v477 = vunpack.c.l.b16 %v401
        %v478 = vunpack.c.l.b16 %v402
        %v479 = vunpack.c.h.b16 %v402
        %v480 = vunpack.c.l.b16 %v403
        %v481 = vunpack.c.l.b16 %v404
        %v482 = vunpack.c.h.b16 %v404
        %v483 = vunpack.c.l.b16 %v405
        %v484 = vunpack.c.l.b16 %v406
        %v485 = vunpack.c.h.b16 %v406
        %v486 = vunpack.c.l.b16 %v407
        %v487 = vunpack.c.l.b16 %v408
        %v488 = vunpack.c.h.b16 %v408
        %v489 = vunpack.c.l.b16 %v409
        %v490 = vunpack.c.l.b16 %v410
        %v491 = vunpack.c.h.b16 %v410
        %v492 = vunpack.c.l.b16 %v411
        %v493 = vunpack.c.l.b16 %v412
        %v494 = vunpack.c.h.b16 %v412
        %v495 = vunpack.c.l.b16 %v413
        %v496 = vunpack.c.l.b16 %v414
        %v497 = vunpack.c.h.b16 %v414
        %v498 = vunpack.c.l.b16 %v415
        %v499 = vunpack.c.l.b16 %v416
        %v500 = vunpack.c.h.b16 %v416
        %v501 = vunpack.c.l.b16 %v417
        %v502 = vunpack.c.l.b16 %v418
        %v503 = vunpack.c.h.b16 %v418
        %v504 = vunpack.c.l.b16 %v419
        %v505 = vunpack.c.l.b16 %v420
        %v506 = vunpack.c.h.b16 %v420
        %v507 = vunpack.c.l.b16 %v421
        %v508 = vunpack.c.l.b16 %v422
        %v509 = vunpack.c.h.b16 %v422
        %v510 = vunpack.c.l.b16 %v423
        %v511 = vunpack.c.l.b16 %v424
        %v512 = vunpack.c.h.b16 %v424
        %v513 = vunpack.c.l.b16 %v425
        %v514 = vpack.c.b16 %v469, %v466
        %v515 = vpack.c.b16 %v470, %v467
        %v516 = vpack.c.b16 %v471, %v468
        %v517 = vpack.c.b16 %v475, %v472
        %v518 = vpack.c.b16 %v476, %v473
        %v519 = vpack.c.b16 %v477, %v474
        %v520 = vpack.c.b16 %v481, %v478
        %v521 = vpack.c.b16 %v482, %v479
        %v522 = vpack.c.b16 %v483, %v480
        %v523 = vpack.c.b16 %v487, %v484
        %v524 = vpack.c.b16 %v488, %v485
        %v525 = vpack.c.b16 %v489, %v486
        %v526 = vpack.c.b16 %v493, %v490
        %v527 = vpack.c.b16 %v494, %v491
        %v528 = vpack.c.b16 %v495, %v492
        %v529 = vpack.c.b16 %v499, %v496
        %v530 = vpack.c.b16 %v500, %v497
        %v531 = vpack.c.b16 %v501, %v498
        %v532 = vpack.c.b16 %v505, %v502
        %v533 = vpack.c.b16 %v506, %v503
        %v534 = vpack.c.b16 %v507, %v504
        %v535 = vpack.c.b16 %v511, %v508
        %v536 = vpack.c.b16 %v512, %v509
        %v537 = vpack.c.b16 %v513, %v510
        %562 = vmatpush.bf16.msra.mxu0 %v535
        %563 = vmatpush.bf16.msra.mxu0 %v532
        %564 = vmatpush.bf16.msra.mxu0 %v529
        %565 = vmatpush.bf16.msra.mxu0 %v526
        %566 = vmatpush.bf16.msra.mxu0 %v523
        %567 = vmatpush.bf16.msra.mxu0 %v520
        %568 = vmatpush.bf16.msra.mxu0 %v517
        %569 = vmatpush.bf16.msra.mxu0 %v514
        %570 = vmatmul.bf16.gmra.mxu0 %v362
        %v571 = vpop.f32.mrf.mxu0
        %v572 = vadd.f32 %v428, %v571
        %v573 = vpop.f32.mrf.mxu0
        %v574 = vadd.f32 %v428, %v573
        %575 = vmatmul.bf16.gmra.mxu0 %v363
        %v576 = vpop.f32.mrf.mxu0
        %v577 = vadd.f32 %v428, %v576
        %v578 = vpop.f32.mrf.mxu0
        %v579 = vadd.f32 %v428, %v578
        %580 = vmatmul.bf16.gmra.mxu0 %v364
        %v581 = vpop.f32.mrf.mxu0
        %v582 = vadd.f32 %v428, %v581
        %v583 = vpop.f32.mrf.mxu0
        %v584 = vadd.f32 %v428, %v583
        %585 = vmatmul.bf16.gmra.mxu0 %v365
        %v586 = vpop.f32.mrf.mxu0
        %v587 = vadd.f32 %v428, %v586
        %v588 = vpop.f32.mrf.mxu0
        %v589 = vadd.f32 %v428, %v588
        %590 = vmatmul.bf16.gmra.mxu0 %v366
        %v591 = vpop.f32.mrf.mxu0
        %v592 = vadd.f32 %v428, %v591
        %v593 = vpop.f32.mrf.mxu0
        %v594 = vadd.f32 %v428, %v593
        %595 = vmatmul.bf16.gmra.mxu0 %v367
        %v596 = vpop.f32.mrf.mxu0
        %v597 = vadd.f32 %v428, %v596
        %v598 = vpop.f32.mrf.mxu0
        %v599 = vadd.f32 %v428, %v598
        %600 = vmatmul.bf16.gmra.mxu0 %v368
        %v601 = vpop.f32.mrf.mxu0
        %v602 = vadd.f32 %v428, %v601
        %v603 = vpop.f32.mrf.mxu0
        %v604 = vadd.f32 %v428, %v603
        %605 = vmatmul.bf16.gmra.mxu0 %v369
        %v606 = vpop.f32.mrf.mxu0
        %v607 = vadd.f32 %v428, %v606
        %v608 = vpop.f32.mrf.mxu0
        %v609 = vadd.f32 %v428, %v608
        %610 = vmatmul.bf16.gmra.mxu0 %v370
        %v611 = vpop.f32.mrf.mxu0
        %v612 = vadd.f32 %v428, %v611
        %v613 = vpop.f32.mrf.mxu0
        %v614 = vadd.f32 %v428, %v613
        %615 = vmatmul.bf16.gmra.mxu0 %v371
        %v616 = vpop.f32.mrf.mxu0
        %v617 = vadd.f32 %v428, %v616
        %v618 = vpop.f32.mrf.mxu0
        %v619 = vadd.f32 %v428, %v618
        %620 = vmatmul.bf16.gmra.mxu0 %v372
        %v621 = vpop.f32.mrf.mxu0
        %v622 = vadd.f32 %v428, %v621
        %v623 = vpop.f32.mrf.mxu0
        %v624 = vadd.f32 %v428, %v623
        %625 = vmatmul.bf16.gmra.mxu0 %v373
        %v626 = vpop.f32.mrf.mxu0
        %v627 = vadd.f32 %v428, %v626
        %v628 = vpop.f32.mrf.mxu0
        %v629 = vadd.f32 %v428, %v628
        %630 = vmatmul.bf16.gmra.mxu0 %v374
        %v631 = vpop.f32.mrf.mxu0
        %v632 = vadd.f32 %v428, %v631
        %v633 = vpop.f32.mrf.mxu0
        %v634 = vadd.f32 %v428, %v633
        %635 = vmatmul.bf16.gmra.mxu0 %v375
        %v636 = vpop.f32.mrf.mxu0
        %v637 = vadd.f32 %v428, %v636
        %v638 = vpop.f32.mrf.mxu0
        %v639 = vadd.f32 %v428, %v638
        %640 = vmatmul.bf16.gmra.mxu0 %v376
        %v641 = vpop.f32.mrf.mxu0
        %v642 = vadd.f32 %v428, %v641
        %v643 = vpop.f32.mrf.mxu0
        %v644 = vadd.f32 %v428, %v643
        %645 = vmatmul.bf16.gmra.mxu0 %v377
        %v646 = vpop.f32.mrf.mxu0
        %v647 = vadd.f32 %v428, %v646
        %v648 = vpop.f32.mrf.mxu0
        %v649 = vadd.f32 %v428, %v648
        %650 = vmatmul.bf16.gmra.mxu0 %v378
        %v651 = vpop.f32.mrf.mxu0
        %v652 = vadd.f32 %v428, %v651
        %v653 = vpop.f32.mrf.mxu0
        %v654 = vadd.f32 %v428, %v653
        %655 = vmatmul.bf16.gmra.mxu0 %v379
        %v656 = vpop.f32.mrf.mxu0
        %v657 = vadd.f32 %v428, %v656
        %v658 = vpop.f32.mrf.mxu0
        %v659 = vadd.f32 %v428, %v658
        %660 = vmatmul.bf16.gmra.mxu0 %v380
        %v661 = vpop.f32.mrf.mxu0
        %v662 = vadd.f32 %v428, %v661
        %v663 = vpop.f32.mrf.mxu0
        %v664 = vadd.f32 %v428, %v663
        %665 = vmatmul.bf16.gmra.mxu0 %v381
        %v666 = vpop.f32.mrf.mxu0
        %v667 = vadd.f32 %v428, %v666
        %v668 = vpop.f32.mrf.mxu0
        %v669 = vadd.f32 %v428, %v668
        %670 = vmatmul.bf16.gmra.mxu0 %v382
        %v671 = vpop.f32.mrf.mxu0
        %v672 = vadd.f32 %v428, %v671
        %v673 = vpop.f32.mrf.mxu0
        %v674 = vadd.f32 %v428, %v673
        %675 = vmatmul.bf16.gmra.mxu0 %v383
        %v676 = vpop.f32.mrf.mxu0
        %v677 = vadd.f32 %v428, %v676
        %v678 = vpop.f32.mrf.mxu0
        %v679 = vadd.f32 %v428, %v678
        %680 = vmatmul.bf16.gmra.mxu0 %v384
        %v681 = vpop.f32.mrf.mxu0
        %v682 = vadd.f32 %v428, %v681
        %v683 = vpop.f32.mrf.mxu0
        %v684 = vadd.f32 %v428, %v683
        %685 = vmatmul.bf16.gmra.mxu0 %v385
        %v686 = vpop.f32.mrf.mxu0
        %v687 = vadd.f32 %v428, %v686
        %v688 = vpop.f32.mrf.mxu0
        %v689 = vadd.f32 %v428, %v688
        %690 = vmatmul.bf16.gmra.mxu0 %v386
        %v691 = vpop.f32.mrf.mxu0
        %v692 = vadd.f32 %v428, %v691
        %v693 = vpop.f32.mrf.mxu0
        %v694 = vadd.f32 %v428, %v693
        %695 = vmatmul.bf16.gmra.mxu0 %v387
        %v696 = vpop.f32.mrf.mxu0
        %v697 = vadd.f32 %v428, %v696
        %v698 = vpop.f32.mrf.mxu0
        %v699 = vadd.f32 %v428, %v698
        %700 = vmatmul.bf16.gmra.mxu0 %v388
        %v701 = vpop.f32.mrf.mxu0
        %v702 = vadd.f32 %v428, %v701
        %v703 = vpop.f32.mrf.mxu0
        %v704 = vadd.f32 %v428, %v703
        %705 = vmatmul.bf16.gmra.mxu0 %v389
        %v706 = vpop.f32.mrf.mxu0
        %v707 = vadd.f32 %v428, %v706
        %v708 = vpop.f32.mrf.mxu0
        %v709 = vadd.f32 %v428, %v708
        %710 = vmatmul.bf16.gmra.mxu0 %v390
        %v711 = vpop.f32.mrf.mxu0
        %v712 = vadd.f32 %v428, %v711
        %v713 = vpop.f32.mrf.mxu0
        %v714 = vadd.f32 %v428, %v713
        %715 = vmatmul.bf16.gmra.mxu0 %v391
        %v716 = vpop.f32.mrf.mxu0
        %v717 = vadd.f32 %v428, %v716
        %v718 = vpop.f32.mrf.mxu0
        %v719 = vadd.f32 %v428, %v718
        %720 = vmatmul.bf16.gmra.mxu0 %v392
        %v721 = vpop.f32.mrf.mxu0
        %v722 = vadd.f32 %v428, %v721
        %v723 = vpop.f32.mrf.mxu0
        %v724 = vadd.f32 %v428, %v723
        %725 = vmatmul.bf16.gmra.mxu0 %v393
        %v726 = vpop.f32.mrf.mxu0
        %v727 = vadd.f32 %v428, %v726
        %v728 = vpop.f32.mrf.mxu0
        %v729 = vadd.f32 %v428, %v728
        %730 = vdwg.mxu0
        %731 = vmatpush.bf16.msra.mxu0 %v536
        %732 = vmatpush.bf16.msra.mxu0 %v533
        %733 = vmatpush.bf16.msra.mxu0 %v530
        %734 = vmatpush.bf16.msra.mxu0 %v527
        %735 = vmatpush.bf16.msra.mxu0 %v524
        %736 = vmatpush.bf16.msra.mxu0 %v521
        %737 = vmatpush.bf16.msra.mxu0 %v518
        %738 = vmatpush.bf16.msra.mxu0 %v515
        %739 = vmatmul.bf16.gmra.mxu0 %v362
        %v740 = vpop.f32.mrf.mxu0
        %v741 = vadd.f32 %v429, %v740
        %v742 = vpop.f32.mrf.mxu0
        %v743 = vadd.f32 %v429, %v742
        %744 = vmatmul.bf16.gmra.mxu0 %v363
        %v745 = vpop.f32.mrf.mxu0
        %v746 = vadd.f32 %v429, %v745
        %v747 = vpop.f32.mrf.mxu0
        %v748 = vadd.f32 %v429, %v747
        %749 = vmatmul.bf16.gmra.mxu0 %v364
        %v750 = vpop.f32.mrf.mxu0
        %v751 = vadd.f32 %v429, %v750
        %v752 = vpop.f32.mrf.mxu0
        %v753 = vadd.f32 %v429, %v752
        %754 = vmatmul.bf16.gmra.mxu0 %v365
        %v755 = vpop.f32.mrf.mxu0
        %v756 = vadd.f32 %v429, %v755
        %v757 = vpop.f32.mrf.mxu0
        %v758 = vadd.f32 %v429, %v757
        %759 = vmatmul.bf16.gmra.mxu0 %v366
        %v760 = vpop.f32.mrf.mxu0
        %v761 = vadd.f32 %v429, %v760
        %v762 = vpop.f32.mrf.mxu0
        %v763 = vadd.f32 %v429, %v762
        %764 = vmatmul.bf16.gmra.mxu0 %v367
        %v765 = vpop.f32.mrf.mxu0
        %v766 = vadd.f32 %v429, %v765
        %v767 = vpop.f32.mrf.mxu0
        %v768 = vadd.f32 %v429, %v767
        %769 = vmatmul.bf16.gmra.mxu0 %v368
        %v770 = vpop.f32.mrf.mxu0
        %v771 = vadd.f32 %v429, %v770
        %v772 = vpop.f32.mrf.mxu0
        %v773 = vadd.f32 %v429, %v772
        %774 = vmatmul.bf16.gmra.mxu0 %v369
        %v775 = vpop.f32.mrf.mxu0
        %v776 = vadd.f32 %v429, %v775
        %v777 = vpop.f32.mrf.mxu0
        %v778 = vadd.f32 %v429, %v777
        %779 = vmatmul.bf16.gmra.mxu0 %v370
        %v780 = vpop.f32.mrf.mxu0
        %v781 = vadd.f32 %v429, %v780
        %v782 = vpop.f32.mrf.mxu0
        %v783 = vadd.f32 %v429, %v782
        %784 = vmatmul.bf16.gmra.mxu0 %v371
        %v785 = vpop.f32.mrf.mxu0
        %v786 = vadd.f32 %v429, %v785
        %v787 = vpop.f32.mrf.mxu0
        %v788 = vadd.f32 %v429, %v787
        %789 = vmatmul.bf16.gmra.mxu0 %v372
        %v790 = vpop.f32.mrf.mxu0
        %v791 = vadd.f32 %v429, %v790
        %v792 = vpop.f32.mrf.mxu0
        %v793 = vadd.f32 %v429, %v792
        %794 = vmatmul.bf16.gmra.mxu0 %v373
        %v795 = vpop.f32.mrf.mxu0
        %v796 = vadd.f32 %v429, %v795
        %v797 = vpop.f32.mrf.mxu0
        %v798 = vadd.f32 %v429, %v797
        %799 = vmatmul.bf16.gmra.mxu0 %v374
        %v800 = vpop.f32.mrf.mxu0
        %v801 = vadd.f32 %v429, %v800
        %v802 = vpop.f32.mrf.mxu0
        %v803 = vadd.f32 %v429, %v802
        %804 = vmatmul.bf16.gmra.mxu0 %v375
        %v805 = vpop.f32.mrf.mxu0
        %v806 = vadd.f32 %v429, %v805
        %v807 = vpop.f32.mrf.mxu0
        %v808 = vadd.f32 %v429, %v807
        %809 = vmatmul.bf16.gmra.mxu0 %v376
        %v810 = vpop.f32.mrf.mxu0
        %v811 = vadd.f32 %v429, %v810
        %v812 = vpop.f32.mrf.mxu0
        %v813 = vadd.f32 %v429, %v812
        %814 = vmatmul.bf16.gmra.mxu0 %v377
        %v815 = vpop.f32.mrf.mxu0
        %v816 = vadd.f32 %v429, %v815
        %v817 = vpop.f32.mrf.mxu0
        %v818 = vadd.f32 %v429, %v817
        %819 = vmatmul.bf16.gmra.mxu0 %v378
        %v820 = vpop.f32.mrf.mxu0
        %v821 = vadd.f32 %v429, %v820
        %v822 = vpop.f32.mrf.mxu0
        %v823 = vadd.f32 %v429, %v822
        %824 = vmatmul.bf16.gmra.mxu0 %v379
        %v825 = vpop.f32.mrf.mxu0
        %v826 = vadd.f32 %v429, %v825
        %v827 = vpop.f32.mrf.mxu0
        %v828 = vadd.f32 %v429, %v827
        %829 = vmatmul.bf16.gmra.mxu0 %v380
        %v830 = vpop.f32.mrf.mxu0
        %v831 = vadd.f32 %v429, %v830
        %v832 = vpop.f32.mrf.mxu0
        %v833 = vadd.f32 %v429, %v832
        %834 = vmatmul.bf16.gmra.mxu0 %v381
        %v835 = vpop.f32.mrf.mxu0
        %v836 = vadd.f32 %v429, %v835
        %v837 = vpop.f32.mrf.mxu0
        %v838 = vadd.f32 %v429, %v837
        %839 = vmatmul.bf16.gmra.mxu0 %v382
        %v840 = vpop.f32.mrf.mxu0
        %v841 = vadd.f32 %v429, %v840
        %v842 = vpop.f32.mrf.mxu0
        %v843 = vadd.f32 %v429, %v842
        %844 = vmatmul.bf16.gmra.mxu0 %v383
        %v845 = vpop.f32.mrf.mxu0
        %v846 = vadd.f32 %v429, %v845
        %v847 = vpop.f32.mrf.mxu0
        %v848 = vadd.f32 %v429, %v847
        %849 = vmatmul.bf16.gmra.mxu0 %v384
        %v850 = vpop.f32.mrf.mxu0
        %v851 = vadd.f32 %v429, %v850
        %v852 = vpop.f32.mrf.mxu0
        %v853 = vadd.f32 %v429, %v852
        %854 = vmatmul.bf16.gmra.mxu0 %v385
        %v855 = vpop.f32.mrf.mxu0
        %v856 = vadd.f32 %v429, %v855
        %v857 = vpop.f32.mrf.mxu0
        %v858 = vadd.f32 %v429, %v857
        %859 = vmatmul.bf16.gmra.mxu0 %v386
        %v860 = vpop.f32.mrf.mxu0
        %v861 = vadd.f32 %v429, %v860
        %v862 = vpop.f32.mrf.mxu0
        %v863 = vadd.f32 %v429, %v862
        %864 = vmatmul.bf16.gmra.mxu0 %v387
        %v865 = vpop.f32.mrf.mxu0
        %v866 = vadd.f32 %v429, %v865
        %v867 = vpop.f32.mrf.mxu0
        %v868 = vadd.f32 %v429, %v867
        %869 = vmatmul.bf16.gmra.mxu0 %v388
        %v870 = vpop.f32.mrf.mxu0
        %v871 = vadd.f32 %v429, %v870
        %v872 = vpop.f32.mrf.mxu0
        %v873 = vadd.f32 %v429, %v872
        %874 = vmatmul.bf16.gmra.mxu0 %v389
        %v875 = vpop.f32.mrf.mxu0
        %v876 = vadd.f32 %v429, %v875
        %v877 = vpop.f32.mrf.mxu0
        %v878 = vadd.f32 %v429, %v877
        %879 = vmatmul.bf16.gmra.mxu0 %v390
        %v880 = vpop.f32.mrf.mxu0
        %v881 = vadd.f32 %v429, %v880
        %v882 = vpop.f32.mrf.mxu0
        %v883 = vadd.f32 %v429, %v882
        %884 = vmatmul.bf16.gmra.mxu0 %v391
        %v885 = vpop.f32.mrf.mxu0
        %v886 = vadd.f32 %v429, %v885
        %v887 = vpop.f32.mrf.mxu0
        %v888 = vadd.f32 %v429, %v887
        %889 = vmatmul.bf16.gmra.mxu0 %v392
        %v890 = vpop.f32.mrf.mxu0
        %v891 = vadd.f32 %v429, %v890
        %v892 = vpop.f32.mrf.mxu0
        %v893 = vadd.f32 %v429, %v892
        %894 = vmatmul.bf16.gmra.mxu0 %v393
        %v895 = vpop.f32.mrf.mxu0
        %v896 = vadd.f32 %v429, %v895
        %v897 = vpop.f32.mrf.mxu0
        %v898 = vadd.f32 %v429, %v897
        %899 = vdwg.mxu0
        %900 = vmatpush.bf16.msra.mxu0 %v537
        %901 = vmatpush.bf16.msra.mxu0 %v534
        %902 = vmatpush.bf16.msra.mxu0 %v531
        %903 = vmatpush.bf16.msra.mxu0 %v528
        %904 = vmatpush.bf16.msra.mxu0 %v525
        %905 = vmatpush.bf16.msra.mxu0 %v522
        %906 = vmatpush.bf16.msra.mxu0 %v519
        %907 = vmatpush.bf16.msra.mxu0 %v516
        %908 = vmatmul.bf16.gmra.mxu0 %v362
        %v909 = vpop.f32.mrf.mxu0
        %v910 = vadd.f32 %v430, %v909
        %v911 = vpop.f32.mrf.mxu0
        %v912 = vadd.f32 %v430, %v911
        %913 = vmatmul.bf16.gmra.mxu0 %v363
        %v914 = vpop.f32.mrf.mxu0
        %v915 = vadd.f32 %v430, %v914
        %v916 = vpop.f32.mrf.mxu0
        %v917 = vadd.f32 %v430, %v916
        %918 = vmatmul.bf16.gmra.mxu0 %v364
        %v919 = vpop.f32.mrf.mxu0
        %v920 = vadd.f32 %v430, %v919
        %v921 = vpop.f32.mrf.mxu0
        %v922 = vadd.f32 %v430, %v921
        %923 = vmatmul.bf16.gmra.mxu0 %v365
        %v924 = vpop.f32.mrf.mxu0
        %v925 = vadd.f32 %v430, %v924
        %v926 = vpop.f32.mrf.mxu0
        %v927 = vadd.f32 %v430, %v926
        %928 = vmatmul.bf16.gmra.mxu0 %v366
        %v929 = vpop.f32.mrf.mxu0
        %v930 = vadd.f32 %v430, %v929
        %v931 = vpop.f32.mrf.mxu0
        %v932 = vadd.f32 %v430, %v931
        %933 = vmatmul.bf16.gmra.mxu0 %v367
        %v934 = vpop.f32.mrf.mxu0
        %v935 = vadd.f32 %v430, %v934
        %v936 = vpop.f32.mrf.mxu0
        %v937 = vadd.f32 %v430, %v936
        %938 = vmatmul.bf16.gmra.mxu0 %v368
        %v939 = vpop.f32.mrf.mxu0
        %v940 = vadd.f32 %v430, %v939
        %v941 = vpop.f32.mrf.mxu0
        %v942 = vadd.f32 %v430, %v941
        %943 = vmatmul.bf16.gmra.mxu0 %v369
        %v944 = vpop.f32.mrf.mxu0
        %v945 = vadd.f32 %v430, %v944
        %v946 = vpop.f32.mrf.mxu0
        %v947 = vadd.f32 %v430, %v946
        %948 = vmatmul.bf16.gmra.mxu0 %v370
        %v949 = vpop.f32.mrf.mxu0
        %v950 = vadd.f32 %v430, %v949
        %v951 = vpop.f32.mrf.mxu0
        %v952 = vadd.f32 %v430, %v951
        %953 = vmatmul.bf16.gmra.mxu0 %v371
        %v954 = vpop.f32.mrf.mxu0
        %v955 = vadd.f32 %v430, %v954
        %v956 = vpop.f32.mrf.mxu0
        %v957 = vadd.f32 %v430, %v956
        %958 = vmatmul.bf16.gmra.mxu0 %v372
        %v959 = vpop.f32.mrf.mxu0
        %v960 = vadd.f32 %v430, %v959
        %v961 = vpop.f32.mrf.mxu0
        %v962 = vadd.f32 %v430, %v961
        %963 = vmatmul.bf16.gmra.mxu0 %v373
        %v964 = vpop.f32.mrf.mxu0
        %v965 = vadd.f32 %v430, %v964
        %v966 = vpop.f32.mrf.mxu0
        %v967 = vadd.f32 %v430, %v966
        %968 = vmatmul.bf16.gmra.mxu0 %v374
        %v969 = vpop.f32.mrf.mxu0
        %v970 = vadd.f32 %v430, %v969
        %v971 = vpop.f32.mrf.mxu0
        %v972 = vadd.f32 %v430, %v971
        %973 = vmatmul.bf16.gmra.mxu0 %v375
        %v974 = vpop.f32.mrf.mxu0
        %v975 = vadd.f32 %v430, %v974
        %v976 = vpop.f32.mrf.mxu0
        %v977 = vadd.f32 %v430, %v976
        %978 = vmatmul.bf16.gmra.mxu0 %v376
        %v979 = vpop.f32.mrf.mxu0
        %v980 = vadd.f32 %v430, %v979
        %v981 = vpop.f32.mrf.mxu0
        %v982 = vadd.f32 %v430, %v981
        %983 = vmatmul.bf16.gmra.mxu0 %v377
        %v984 = vpop.f32.mrf.mxu0
        %v985 = vadd.f32 %v430, %v984
        %v986 = vpop.f32.mrf.mxu0
        %v987 = vadd.f32 %v430, %v986
        %988 = vmatmul.bf16.gmra.mxu0 %v378
        %v989 = vpop.f32.mrf.mxu0
        %v990 = vadd.f32 %v430, %v989
        %v991 = vpop.f32.mrf.mxu0
        %v992 = vadd.f32 %v430, %v991
        %993 = vmatmul.bf16.gmra.mxu0 %v379
        %v994 = vpop.f32.mrf.mxu0
        %v995 = vadd.f32 %v430, %v994
        %v996 = vpop.f32.mrf.mxu0
        %v997 = vadd.f32 %v430, %v996
        %998 = vmatmul.bf16.gmra.mxu0 %v380
        %v999 = vpop.f32.mrf.mxu0
        %v1000 = vadd.f32 %v430, %v999
        %v1001 = vpop.f32.mrf.mxu0
        %v1002 = vadd.f32 %v430, %v1001
        %1003 = vmatmul.bf16.gmra.mxu0 %v381
        %v1004 = vpop.f32.mrf.mxu0
        %v1005 = vadd.f32 %v430, %v1004
        %v1006 = vpop.f32.mrf.mxu0
        %v1007 = vadd.f32 %v430, %v1006
        %1008 = vmatmul.bf16.gmra.mxu0 %v382
        %v1009 = vpop.f32.mrf.mxu0
        %v1010 = vadd.f32 %v430, %v1009
        %v1011 = vpop.f32.mrf.mxu0
        %v1012 = vadd.f32 %v430, %v1011
        %1013 = vmatmul.bf16.gmra.mxu0 %v383
        %v1014 = vpop.f32.mrf.mxu0
        %v1015 = vadd.f32 %v430, %v1014
        %v1016 = vpop.f32.mrf.mxu0
        %v1017 = vadd.f32 %v430, %v1016
        %1018 = vmatmul.bf16.gmra.mxu0 %v384
        %v1019 = vpop.f32.mrf.mxu0
        %v1020 = vadd.f32 %v430, %v1019
        %v1021 = vpop.f32.mrf.mxu0
        %v1022 = vadd.f32 %v430, %v1021
        %1023 = vmatmul.bf16.gmra.mxu0 %v385
        %v1024 = vpop.f32.mrf.mxu0
        %v1025 = vadd.f32 %v430, %v1024
        %v1026 = vpop.f32.mrf.mxu0
        %v1027 = vadd.f32 %v430, %v1026
        %1028 = vmatmul.bf16.gmra.mxu0 %v386
        %v1029 = vpop.f32.mrf.mxu0
        %v1030 = vadd.f32 %v430, %v1029
        %v1031 = vpop.f32.mrf.mxu0
        %v1032 = vadd.f32 %v430, %v1031
        %1033 = vmatmul.bf16.gmra.mxu0 %v387
        %v1034 = vpop.f32.mrf.mxu0
        %v1035 = vadd.f32 %v430, %v1034
        %v1036 = vpop.f32.mrf.mxu0
        %v1037 = vadd.f32 %v430, %v1036
        %1038 = vmatmul.bf16.gmra.mxu0 %v388
        %v1039 = vpop.f32.mrf.mxu0
        %v1040 = vadd.f32 %v430, %v1039
        %v1041 = vpop.f32.mrf.mxu0
        %v1042 = vadd.f32 %v430, %v1041
        %1043 = vmatmul.bf16.gmra.mxu0 %v389
        %v1044 = vpop.f32.mrf.mxu0
        %v1045 = vadd.f32 %v430, %v1044
        %v1046 = vpop.f32.mrf.mxu0
        %v1047 = vadd.f32 %v430, %v1046
        %1048 = vmatmul.bf16.gmra.mxu0 %v390
        %v1049 = vpop.f32.mrf.mxu0
        %v1050 = vadd.f32 %v430, %v1049
        %v1051 = vpop.f32.mrf.mxu0
        %v1052 = vadd.f32 %v430, %v1051
        %1053 = vmatmul.bf16.gmra.mxu0 %v391
        %v1054 = vpop.f32.mrf.mxu0
        %v1055 = vadd.f32 %v430, %v1054
        %v1056 = vpop.f32.mrf.mxu0
        %v1057 = vadd.f32 %v430, %v1056
        %1058 = vmatmul.bf16.gmra.mxu0 %v392
        %v1059 = vpop.f32.mrf.mxu0
        %v1060 = vadd.f32 %v430, %v1059
        %v1061 = vpop.f32.mrf.mxu0
        %v1062 = vadd.f32 %v430, %v1061
        %1063 = vmatmul.bf16.gmra.mxu0 %v393
        %v1064 = vpop.f32.mrf.mxu0
        %v1065 = vadd.f32 %v430, %v1064
        %v1066 = vpop.f32.mrf.mxu0
        %v1067 = vadd.f32 %v430, %v1066
        %1068 = vdwg.mxu0
        %v1069 = vmul.f32 %v572, 0.088388346
        %v1070 = vmul.f32 %v574, 0.088388346
        %v1071 = vmul.f32 %v577, 0.088388346
        %v1072 = vmul.f32 %v579, 0.088388346
        %v1073 = vmul.f32 %v582, 0.088388346
        %v1074 = vmul.f32 %v584, 0.088388346
        %v1075 = vmul.f32 %v587, 0.088388346
        %v1076 = vmul.f32 %v589, 0.088388346
        %v1077 = vmul.f32 %v592, 0.088388346
        %v1078 = vmul.f32 %v594, 0.088388346
        %v1079 = vmul.f32 %v597, 0.088388346
        %v1080 = vmul.f32 %v599, 0.088388346
        %v1081 = vmul.f32 %v602, 0.088388346
        %v1082 = vmul.f32 %v604, 0.088388346
        %v1083 = vmul.f32 %v607, 0.088388346
        %v1084 = vmul.f32 %v609, 0.088388346
        %v1085 = vmul.f32 %v612, 0.088388346
        %v1086 = vmul.f32 %v614, 0.088388346
        %v1087 = vmul.f32 %v617, 0.088388346
        %v1088 = vmul.f32 %v619, 0.088388346
        %v1089 = vmul.f32 %v622, 0.088388346
        %v1090 = vmul.f32 %v624, 0.088388346
        %v1091 = vmul.f32 %v627, 0.088388346
        %v1092 = vmul.f32 %v629, 0.088388346
        %v1093 = vmul.f32 %v632, 0.088388346
        %v1094 = vmul.f32 %v634, 0.088388346
        %v1095 = vmul.f32 %v637, 0.088388346
        %v1096 = vmul.f32 %v639, 0.088388346
        %v1097 = vmul.f32 %v642, 0.088388346
        %v1098 = vmul.f32 %v644, 0.088388346
        %v1099 = vmul.f32 %v647, 0.088388346
        %v1100 = vmul.f32 %v649, 0.088388346
        %v1101 = vmul.f32 %v652, 0.088388346
        %v1102 = vmul.f32 %v654, 0.088388346
        %v1103 = vmul.f32 %v657, 0.088388346
        %v1104 = vmul.f32 %v659, 0.088388346
        %v1105 = vmul.f32 %v662, 0.088388346
        %v1106 = vmul.f32 %v664, 0.088388346
        %v1107 = vmul.f32 %v667, 0.088388346
        %v1108 = vmul.f32 %v669, 0.088388346
        %v1109 = vmul.f32 %v672, 0.088388346
        %v1110 = vmul.f32 %v674, 0.088388346
        %v1111 = vmul.f32 %v677, 0.088388346
        %v1112 = vmul.f32 %v679, 0.088388346
        %v1113 = vmul.f32 %v682, 0.088388346
        %v1114 = vmul.f32 %v684, 0.088388346
        %v1115 = vmul.f32 %v687, 0.088388346
        %v1116 = vmul.f32 %v689, 0.088388346
        %v1117 = vmul.f32 %v692, 0.088388346
        %v1118 = vmul.f32 %v694, 0.088388346
        %v1119 = vmul.f32 %v697, 0.088388346
        %v1120 = vmul.f32 %v699, 0.088388346
        %v1121 = vmul.f32 %v702, 0.088388346
        %v1122 = vmul.f32 %v704, 0.088388346
        %v1123 = vmul.f32 %v707, 0.088388346
        %v1124 = vmul.f32 %v709, 0.088388346
        %v1125 = vmul.f32 %v712, 0.088388346
        %v1126 = vmul.f32 %v714, 0.088388346
        %v1127 = vmul.f32 %v717, 0.088388346
        %v1128 = vmul.f32 %v719, 0.088388346
        %v1129 = vmul.f32 %v722, 0.088388346
        %v1130 = vmul.f32 %v724, 0.088388346
        %v1131 = vmul.f32 %v727, 0.088388346
        %v1132 = vmul.f32 %v729, 0.088388346
        %v1133 = vpack.c.bf16 %v1069, %v1069
        %v1134 = vpack.c.bf16 %v1070, %v1070
        %v1135 = vpack.c.bf16 %v1071, %v1071
        %v1136 = vpack.c.bf16 %v1072, %v1072
        %v1137 = vpack.c.bf16 %v1073, %v1073
        %v1138 = vpack.c.bf16 %v1074, %v1074
        %v1139 = vpack.c.bf16 %v1075, %v1075
        %v1140 = vpack.c.bf16 %v1076, %v1076
        %v1141 = vpack.c.bf16 %v1077, %v1077
        %v1142 = vpack.c.bf16 %v1078, %v1078
        %v1143 = vpack.c.bf16 %v1079, %v1079
        %v1144 = vpack.c.bf16 %v1080, %v1080
        %v1145 = vpack.c.bf16 %v1081, %v1081
        %v1146 = vpack.c.bf16 %v1082, %v1082
        %v1147 = vpack.c.bf16 %v1083, %v1083
        %v1148 = vpack.c.bf16 %v1084, %v1084
        %v1149 = vpack.c.bf16 %v1085, %v1085
        %v1150 = vpack.c.bf16 %v1086, %v1086
        %v1151 = vpack.c.bf16 %v1087, %v1087
        %v1152 = vpack.c.bf16 %v1088, %v1088
        %v1153 = vpack.c.bf16 %v1089, %v1089
        %v1154 = vpack.c.bf16 %v1090, %v1090
        %v1155 = vpack.c.bf16 %v1091, %v1091
        %v1156 = vpack.c.bf16 %v1092, %v1092
        %v1157 = vpack.c.bf16 %v1093, %v1093
        %v1158 = vpack.c.bf16 %v1094, %v1094
        %v1159 = vpack.c.bf16 %v1095, %v1095
        %v1160 = vpack.c.bf16 %v1096, %v1096
        %v1161 = vpack.c.bf16 %v1097, %v1097
        %v1162 = vpack.c.bf16 %v1098, %v1098
        %v1163 = vpack.c.bf16 %v1099, %v1099
        %v1164 = vpack.c.bf16 %v1100, %v1100
        %v1165 = vpack.c.bf16 %v1101, %v1101
        %v1166 = vpack.c.bf16 %v1102, %v1102
        %v1167 = vpack.c.bf16 %v1103, %v1103
        %v1168 = vpack.c.bf16 %v1104, %v1104
        %v1169 = vpack.c.bf16 %v1105, %v1105
        %v1170 = vpack.c.bf16 %v1106, %v1106
        %v1171 = vpack.c.bf16 %v1107, %v1107
        %v1172 = vpack.c.bf16 %v1108, %v1108
        %v1173 = vpack.c.bf16 %v1109, %v1109
        %v1174 = vpack.c.bf16 %v1110, %v1110
        %v1175 = vpack.c.bf16 %v1111, %v1111
        %v1176 = vpack.c.bf16 %v1112, %v1112
        %v1177 = vpack.c.bf16 %v1113, %v1113
        %v1178 = vpack.c.bf16 %v1114, %v1114
        %v1179 = vpack.c.bf16 %v1115, %v1115
        %v1180 = vpack.c.bf16 %v1116, %v1116
        %v1181 = vpack.c.bf16 %v1117, %v1117
        %v1182 = vpack.c.bf16 %v1118, %v1118
        %v1183 = vpack.c.bf16 %v1119, %v1119
        %v1184 = vpack.c.bf16 %v1120, %v1120
        %v1185 = vpack.c.bf16 %v1121, %v1121
        %v1186 = vpack.c.bf16 %v1122, %v1122
        %v1187 = vpack.c.bf16 %v1123, %v1123
        %v1188 = vpack.c.bf16 %v1124, %v1124
        %v1189 = vpack.c.bf16 %v1125, %v1125
        %v1190 = vpack.c.bf16 %v1126, %v1126
        %v1191 = vpack.c.bf16 %v1127, %v1127
        %v1192 = vpack.c.bf16 %v1128, %v1128
        %v1193 = vpack.c.bf16 %v1129, %v1129
        %v1194 = vpack.c.bf16 %v1130, %v1130
        %v1195 = vpack.c.bf16 %v1131, %v1131
        %v1196 = vpack.c.bf16 %v1132, %v1132
        %1197 = vst [vmem:[%s279] sm:$0xf] %v1133
        %1198 = vst [vmem:[%s279 + $0x4] sm:$0xf] %v1134
        %1199 = vst [vmem:[%s279 + $0x8] sm:$0xf] %v1135
        %1200 = vst [vmem:[%s279 + $0xc] sm:$0xf] %v1136
        %1201 = vst [vmem:[%s279 + $0x10] sm:$0xf] %v1137
        %1202 = vst [vmem:[%s279 + $0x14] sm:$0xf] %v1138
        %1203 = vst [vmem:[%s279 + $0x18] sm:$0xf] %v1139
        %1204 = vst [vmem:[%s279 + $0x1c] sm:$0xf] %v1140
        %1205 = vst [vmem:[%s279 + $0x20] sm:$0xf] %v1141
        %1206 = vst [vmem:[%s279 + $0x24] sm:$0xf] %v1142
        %1207 = vst [vmem:[%s279 + $0x28] sm:$0xf] %v1143
        %1208 = vst [vmem:[%s279 + $0x2c] sm:$0xf] %v1144
        %1209 = vst [vmem:[%s279 + $0x30] sm:$0xf] %v1145
        %1210 = vst [vmem:[%s279 + $0x34] sm:$0xf] %v1146
        %1211 = vst [vmem:[%s279 + $0x38] sm:$0xf] %v1147
        %1212 = vst [vmem:[%s279 + $0x3c] sm:$0xf] %v1148
        %1213 = vst [vmem:[%s279 + $0x40] sm:$0xf] %v1149
        %1214 = vst [vmem:[%s279 + $0x44] sm:$0xf] %v1150
        %1215 = vst [vmem:[%s279 + $0x48] sm:$0xf] %v1151
        %1216 = vst [vmem:[%s279 + $0x4c] sm:$0xf] %v1152
        %1217 = vst [vmem:[%s279 + $0x50] sm:$0xf] %v1153
        %1218 = vst [vmem:[%s279 + $0x54] sm:$0xf] %v1154
        %1219 = vst [vmem:[%s279 + $0x58] sm:$0xf] %v1155
        %1220 = vst [vmem:[%s279 + $0x5c] sm:$0xf] %v1156
        %1221 = vst [vmem:[%s279 + $0x60] sm:$0xf] %v1157
        %1222 = vst [vmem:[%s279 + $0x64] sm:$0xf] %v1158
        %1223 = vst [vmem:[%s279 + $0x68] sm:$0xf] %v1159
        %1224 = vst [vmem:[%s279 + $0x6c] sm:$0xf] %v1160
        %1225 = vst [vmem:[%s279 + $0x70] sm:$0xf] %v1161
        %1226 = vst [vmem:[%s279 + $0x74] sm:$0xf] %v1162
        %1227 = vst [vmem:[%s279 + $0x78] sm:$0xf] %v1163
        %1228 = vst [vmem:[%s279 + $0x7c] sm:$0xf] %v1164
        %1229 = vst [vmem:[%s279 + $0x80] sm:$0xf] %v1165
        %1230 = vst [vmem:[%s279 + $0x84] sm:$0xf] %v1166
        %1231 = vst [vmem:[%s279 + $0x88] sm:$0xf] %v1167
        %1232 = vst [vmem:[%s279 + $0x8c] sm:$0xf] %v1168
        %1233 = vst [vmem:[%s279 + $0x90] sm:$0xf] %v1169
        %1234 = vst [vmem:[%s279 + $0x94] sm:$0xf] %v1170
        %1235 = vst [vmem:[%s279 + $0x98] sm:$0xf] %v1171
        %1236 = vst [vmem:[%s279 + $0x9c] sm:$0xf] %v1172
        %1237 = vst [vmem:[%s279 + $0xa0] sm:$0xf] %v1173
        %1238 = vst [vmem:[%s279 + $0xa4] sm:$0xf] %v1174
        %1239 = vst [vmem:[%s279 + $0xa8] sm:$0xf] %v1175
        %1240 = vst [vmem:[%s279 + $0xac] sm:$0xf] %v1176
        %1241 = vst [vmem:[%s279 + $0xb0] sm:$0xf] %v1177
        %1242 = vst [vmem:[%s279 + $0xb4] sm:$0xf] %v1178
        %1243 = vst [vmem:[%s279 + $0xb8] sm:$0xf] %v1179
        %1244 = vst [vmem:[%s279 + $0xbc] sm:$0xf] %v1180
        %1245 = vst [vmem:[%s279 + $0xc0] sm:$0xf] %v1181
        %1246 = vst [vmem:[%s279 + $0xc4] sm:$0xf] %v1182
        %1247 = vst [vmem:[%s279 + $0xc8] sm:$0xf] %v1183
        %1248 = vst [vmem:[%s279 + $0xcc] sm:$0xf] %v1184
        %1249 = vst [vmem:[%s279 + $0xd0] sm:$0xf] %v1185
        %1250 = vst [vmem:[%s279 + $0xd4] sm:$0xf] %v1186
        %1251 = vst [vmem:[%s279 + $0xd8] sm:$0xf] %v1187
        %1252 = vst [vmem:[%s279 + $0xdc] sm:$0xf] %v1188
        %1253 = vst [vmem:[%s279 + $0xe0] sm:$0xf] %v1189
        %1254 = vst [vmem:[%s279 + $0xe4] sm:$0xf] %v1190
        %1255 = vst [vmem:[%s279 + $0xe8] sm:$0xf] %v1191
        %1256 = vst [vmem:[%s279 + $0xec] sm:$0xf] %v1192
        %1257 = vst [vmem:[%s279 + $0xf0] sm:$0xf] %v1193
        %1258 = vst [vmem:[%s279 + $0xf4] sm:$0xf] %v1194
        %1259 = vst [vmem:[%s279 + $0xf8] sm:$0xf] %v1195
        %1260 = vst [vmem:[%s279 + $0xfc] sm:$0xf] %v1196
        %v1261 = vpack.c.bf16 %v741, %v741
        %v1262 = vpack.c.bf16 %v743, %v743
        %v1263 = vpack.c.bf16 %v746, %v746
        %v1264 = vpack.c.bf16 %v748, %v748
        %v1265 = vpack.c.bf16 %v751, %v751
        %v1266 = vpack.c.bf16 %v753, %v753
        %v1267 = vpack.c.bf16 %v756, %v756
        %v1268 = vpack.c.bf16 %v758, %v758
        %v1269 = vpack.c.bf16 %v761, %v761
        %v1270 = vpack.c.bf16 %v763, %v763
        %v1271 = vpack.c.bf16 %v766, %v766
        %v1272 = vpack.c.bf16 %v768, %v768
        %v1273 = vpack.c.bf16 %v771, %v771
        %v1274 = vpack.c.bf16 %v773, %v773
        %v1275 = vpack.c.bf16 %v776, %v776
        %v1276 = vpack.c.bf16 %v778, %v778
        %v1277 = vpack.c.bf16 %v781, %v781
        %v1278 = vpack.c.bf16 %v783, %v783
        %v1279 = vpack.c.bf16 %v786, %v786
        %v1280 = vpack.c.bf16 %v788, %v788
        %v1281 = vpack.c.bf16 %v791, %v791
        %v1282 = vpack.c.bf16 %v793, %v793
        %v1283 = vpack.c.bf16 %v796, %v796
        %v1284 = vpack.c.bf16 %v798, %v798
        %v1285 = vpack.c.bf16 %v801, %v801
        %v1286 = vpack.c.bf16 %v803, %v803
        %v1287 = vpack.c.bf16 %v806, %v806
        %v1288 = vpack.c.bf16 %v808, %v808
        %v1289 = vpack.c.bf16 %v811, %v811
        %v1290 = vpack.c.bf16 %v813, %v813
        %v1291 = vpack.c.bf16 %v816, %v816
        %v1292 = vpack.c.bf16 %v818, %v818
        %v1293 = vpack.c.bf16 %v821, %v821
        %v1294 = vpack.c.bf16 %v823, %v823
        %v1295 = vpack.c.bf16 %v826, %v826
        %v1296 = vpack.c.bf16 %v828, %v828
        %v1297 = vpack.c.bf16 %v831, %v831
        %v1298 = vpack.c.bf16 %v833, %v833
        %v1299 = vpack.c.bf16 %v836, %v836
        %v1300 = vpack.c.bf16 %v838, %v838
        %v1301 = vpack.c.bf16 %v841, %v841
        %v1302 = vpack.c.bf16 %v843, %v843
        %v1303 = vpack.c.bf16 %v846, %v846
        %v1304 = vpack.c.bf16 %v848, %v848
        %v1305 = vpack.c.bf16 %v851, %v851
        %v1306 = vpack.c.bf16 %v853, %v853
        %v1307 = vpack.c.bf16 %v856, %v856
        %v1308 = vpack.c.bf16 %v858, %v858
        %v1309 = vpack.c.bf16 %v861, %v861
        %v1310 = vpack.c.bf16 %v863, %v863
        %v1311 = vpack.c.bf16 %v866, %v866
        %v1312 = vpack.c.bf16 %v868, %v868
        %v1313 = vpack.c.bf16 %v871, %v871
        %v1314 = vpack.c.bf16 %v873, %v873
        %v1315 = vpack.c.bf16 %v876, %v876
        %v1316 = vpack.c.bf16 %v878, %v878
        %v1317 = vpack.c.bf16 %v881, %v881
        %v1318 = vpack.c.bf16 %v883, %v883
        %v1319 = vpack.c.bf16 %v886, %v886
        %v1320 = vpack.c.bf16 %v888, %v888
        %v1321 = vpack.c.bf16 %v891, %v891
        %v1322 = vpack.c.bf16 %v893, %v893
        %v1323 = vpack.c.bf16 %v896, %v896
        %v1324 = vpack.c.bf16 %v898, %v898
        %1325 = vst [vmem:[%s286] sm:$0xf] %v1261
        %1326 = vst [vmem:[%s286 + $0x4] sm:$0xf] %v1262
        %1327 = vst [vmem:[%s286 + $0x8] sm:$0xf] %v1263
        %1328 = vst [vmem:[%s286 + $0xc] sm:$0xf] %v1264
        %1329 = vst [vmem:[%s286 + $0x10] sm:$0xf] %v1265
        %1330 = vst [vmem:[%s286 + $0x14] sm:$0xf] %v1266
        %1331 = vst [vmem:[%s286 + $0x18] sm:$0xf] %v1267
        %1332 = vst [vmem:[%s286 + $0x1c] sm:$0xf] %v1268
        %1333 = vst [vmem:[%s286 + $0x20] sm:$0xf] %v1269
        %1334 = vst [vmem:[%s286 + $0x24] sm:$0xf] %v1270
        %1335 = vst [vmem:[%s286 + $0x28] sm:$0xf] %v1271
        %1336 = vst [vmem:[%s286 + $0x2c] sm:$0xf] %v1272
        %1337 = vst [vmem:[%s286 + $0x30] sm:$0xf] %v1273
        %1338 = vst [vmem:[%s286 + $0x34] sm:$0xf] %v1274
        %1339 = vst [vmem:[%s286 + $0x38] sm:$0xf] %v1275
        %1340 = vst [vmem:[%s286 + $0x3c] sm:$0xf] %v1276
        %1341 = vst [vmem:[%s286 + $0x40] sm:$0xf] %v1277
        %1342 = vst [vmem:[%s286 + $0x44] sm:$0xf] %v1278
        %1343 = vst [vmem:[%s286 + $0x48] sm:$0xf] %v1279
        %1344 = vst [vmem:[%s286 + $0x4c] sm:$0xf] %v1280
        %1345 = vst [vmem:[%s286 + $0x50] sm:$0xf] %v1281
        %1346 = vst [vmem:[%s286 + $0x54] sm:$0xf] %v1282
        %1347 = vst [vmem:[%s286 + $0x58] sm:$0xf] %v1283
        %1348 = vst [vmem:[%s286 + $0x5c] sm:$0xf] %v1284
        %1349 = vst [vmem:[%s286 + $0x60] sm:$0xf] %v1285
        %1350 = vst [vmem:[%s286 + $0x64] sm:$0xf] %v1286
        %1351 = vst [vmem:[%s286 + $0x68] sm:$0xf] %v1287
        %1352 = vst [vmem:[%s286 + $0x6c] sm:$0xf] %v1288
        %1353 = vst [vmem:[%s286 + $0x70] sm:$0xf] %v1289
        %1354 = vst [vmem:[%s286 + $0x74] sm:$0xf] %v1290
        %1355 = vst [vmem:[%s286 + $0x78] sm:$0xf] %v1291
        %1356 = vst [vmem:[%s286 + $0x7c] sm:$0xf] %v1292
        %1357 = vst [vmem:[%s286 + $0x80] sm:$0xf] %v1293
        %1358 = vst [vmem:[%s286 + $0x84] sm:$0xf] %v1294
        %1359 = vst [vmem:[%s286 + $0x88] sm:$0xf] %v1295
        %1360 = vst [vmem:[%s286 + $0x8c] sm:$0xf] %v1296
        %1361 = vst [vmem:[%s286 + $0x90] sm:$0xf] %v1297
        %1362 = vst [vmem:[%s286 + $0x94] sm:$0xf] %v1298
        %1363 = vst [vmem:[%s286 + $0x98] sm:$0xf] %v1299
        %1364 = vst [vmem:[%s286 + $0x9c] sm:$0xf] %v1300
        %1365 = vst [vmem:[%s286 + $0xa0] sm:$0xf] %v1301
        %1366 = vst [vmem:[%s286 + $0xa4] sm:$0xf] %v1302
        %1367 = vst [vmem:[%s286 + $0xa8] sm:$0xf] %v1303
        %1368 = vst [vmem:[%s286 + $0xac] sm:$0xf] %v1304
        %1369 = vst [vmem:[%s286 + $0xb0] sm:$0xf] %v1305
        %1370 = vst [vmem:[%s286 + $0xb4] sm:$0xf] %v1306
        %1371 = vst [vmem:[%s286 + $0xb8] sm:$0xf] %v1307
        %1372 = vst [vmem:[%s286 + $0xbc] sm:$0xf] %v1308
        %1373 = vst [vmem:[%s286 + $0xc0] sm:$0xf] %v1309
        %1374 = vst [vmem:[%s286 + $0xc4] sm:$0xf] %v1310
        %1375 = vst [vmem:[%s286 + $0xc8] sm:$0xf] %v1311
        %1376 = vst [vmem:[%s286 + $0xcc] sm:$0xf] %v1312
        %1377 = vst [vmem:[%s286 + $0xd0] sm:$0xf] %v1313
        %1378 = vst [vmem:[%s286 + $0xd4] sm:$0xf] %v1314
        %1379 = vst [vmem:[%s286 + $0xd8] sm:$0xf] %v1315
        %1380 = vst [vmem:[%s286 + $0xdc] sm:$0xf] %v1316
        %1381 = vst [vmem:[%s286 + $0xe0] sm:$0xf] %v1317
        %1382 = vst [vmem:[%s286 + $0xe4] sm:$0xf] %v1318
        %1383 = vst [vmem:[%s286 + $0xe8] sm:$0xf] %v1319
        %1384 = vst [vmem:[%s286 + $0xec] sm:$0xf] %v1320
        %1385 = vst [vmem:[%s286 + $0xf0] sm:$0xf] %v1321
        %1386 = vst [vmem:[%s286 + $0xf4] sm:$0xf] %v1322
        %1387 = vst [vmem:[%s286 + $0xf8] sm:$0xf] %v1323
        %1388 = vst [vmem:[%s286 + $0xfc] sm:$0xf] %v1324
        %v1389 = vpack.c.bf16 %v910, %v910
        %v1390 = vpack.c.bf16 %v912, %v912
        %v1391 = vpack.c.bf16 %v915, %v915
        %v1392 = vpack.c.bf16 %v917, %v917
        %v1393 = vpack.c.bf16 %v920, %v920
        %v1394 = vpack.c.bf16 %v922, %v922
        %v1395 = vpack.c.bf16 %v925, %v925
        %v1396 = vpack.c.bf16 %v927, %v927
        %v1397 = vpack.c.bf16 %v930, %v930
        %v1398 = vpack.c.bf16 %v932, %v932
        %v1399 = vpack.c.bf16 %v935, %v935
        %v1400 = vpack.c.bf16 %v937, %v937
        %v1401 = vpack.c.bf16 %v940, %v940
        %v1402 = vpack.c.bf16 %v942, %v942
        %v1403 = vpack.c.bf16 %v945, %v945
        %v1404 = vpack.c.bf16 %v947, %v947
        %v1405 = vpack.c.bf16 %v950, %v950
        %v1406 = vpack.c.bf16 %v952, %v952
        %v1407 = vpack.c.bf16 %v955, %v955
        %v1408 = vpack.c.bf16 %v957, %v957
        %v1409 = vpack.c.bf16 %v960, %v960
        %v1410 = vpack.c.bf16 %v962, %v962
        %v1411 = vpack.c.bf16 %v965, %v965
        %v1412 = vpack.c.bf16 %v967, %v967
        %v1413 = vpack.c.bf16 %v970, %v970
        %v1414 = vpack.c.bf16 %v972, %v972
        %v1415 = vpack.c.bf16 %v975, %v975
        %v1416 = vpack.c.bf16 %v977, %v977
        %v1417 = vpack.c.bf16 %v980, %v980
        %v1418 = vpack.c.bf16 %v982, %v982
        %v1419 = vpack.c.bf16 %v985, %v985
        %v1420 = vpack.c.bf16 %v987, %v987
        %v1421 = vpack.c.bf16 %v990, %v990
        %v1422 = vpack.c.bf16 %v992, %v992
        %v1423 = vpack.c.bf16 %v995, %v995
        %v1424 = vpack.c.bf16 %v997, %v997
        %v1425 = vpack.c.bf16 %v1000, %v1000
        %v1426 = vpack.c.bf16 %v1002, %v1002
        %v1427 = vpack.c.bf16 %v1005, %v1005
        %v1428 = vpack.c.bf16 %v1007, %v1007
        %v1429 = vpack.c.bf16 %v1010, %v1010
        %v1430 = vpack.c.bf16 %v1012, %v1012
        %v1431 = vpack.c.bf16 %v1015, %v1015
        %v1432 = vpack.c.bf16 %v1017, %v1017
        %v1433 = vpack.c.bf16 %v1020, %v1020
        %v1434 = vpack.c.bf16 %v1022, %v1022
        %v1435 = vpack.c.bf16 %v1025, %v1025
        %v1436 = vpack.c.bf16 %v1027, %v1027
        %v1437 = vpack.c.bf16 %v1030, %v1030
        %v1438 = vpack.c.bf16 %v1032, %v1032
        %v1439 = vpack.c.bf16 %v1035, %v1035
        %v1440 = vpack.c.bf16 %v1037, %v1037
        %v1441 = vpack.c.bf16 %v1040, %v1040
        %v1442 = vpack.c.bf16 %v1042, %v1042
        %v1443 = vpack.c.bf16 %v1045, %v1045
        %v1444 = vpack.c.bf16 %v1047, %v1047
        %v1445 = vpack.c.bf16 %v1050, %v1050
        %v1446 = vpack.c.bf16 %v1052, %v1052
        %v1447 = vpack.c.bf16 %v1055, %v1055
        %v1448 = vpack.c.bf16 %v1057, %v1057
        %v1449 = vpack.c.bf16 %v1060, %v1060
        %v1450 = vpack.c.bf16 %v1062, %v1062
        %v1451 = vpack.c.bf16 %v1065, %v1065
        %v1452 = vpack.c.bf16 %v1067, %v1067
        %1453 = vst [vmem:[%s293] sm:$0xf] %v1389
        %1454 = vst [vmem:[%s293 + $0x4] sm:$0xf] %v1390
        %1455 = vst [vmem:[%s293 + $0x8] sm:$0xf] %v1391
        %1456 = vst [vmem:[%s293 + $0xc] sm:$0xf] %v1392
        %1457 = vst [vmem:[%s293 + $0x10] sm:$0xf] %v1393
        %1458 = vst [vmem:[%s293 + $0x14] sm:$0xf] %v1394
        %1459 = vst [vmem:[%s293 + $0x18] sm:$0xf] %v1395
        %1460 = vst [vmem:[%s293 + $0x1c] sm:$0xf] %v1396
        %1461 = vst [vmem:[%s293 + $0x20] sm:$0xf] %v1397
        %1462 = vst [vmem:[%s293 + $0x24] sm:$0xf] %v1398
        %1463 = vst [vmem:[%s293 + $0x28] sm:$0xf] %v1399
        %1464 = vst [vmem:[%s293 + $0x2c] sm:$0xf] %v1400
        %1465 = vst [vmem:[%s293 + $0x30] sm:$0xf] %v1401
        %1466 = vst [vmem:[%s293 + $0x34] sm:$0xf] %v1402
        %1467 = vst [vmem:[%s293 + $0x38] sm:$0xf] %v1403
        %1468 = vst [vmem:[%s293 + $0x3c] sm:$0xf] %v1404
        %1469 = vst [vmem:[%s293 + $0x40] sm:$0xf] %v1405
        %1470 = vst [vmem:[%s293 + $0x44] sm:$0xf] %v1406
        %1471 = vst [vmem:[%s293 + $0x48] sm:$0xf] %v1407
        %1472 = vst [vmem:[%s293 + $0x4c] sm:$0xf] %v1408
        %1473 = vst [vmem:[%s293 + $0x50] sm:$0xf] %v1409
        %1474 = vst [vmem:[%s293 + $0x54] sm:$0xf] %v1410
        %1475 = vst [vmem:[%s293 + $0x58] sm:$0xf] %v1411
        %1476 = vst [vmem:[%s293 + $0x5c] sm:$0xf] %v1412
        %1477 = vst [vmem:[%s293 + $0x60] sm:$0xf] %v1413
        %1478 = vst [vmem:[%s293 + $0x64] sm:$0xf] %v1414
        %1479 = vst [vmem:[%s293 + $0x68] sm:$0xf] %v1415
        %1480 = vst [vmem:[%s293 + $0x6c] sm:$0xf] %v1416
        %1481 = vst [vmem:[%s293 + $0x70] sm:$0xf] %v1417
        %1482 = vst [vmem:[%s293 + $0x74] sm:$0xf] %v1418
        %1483 = vst [vmem:[%s293 + $0x78] sm:$0xf] %v1419
        %1484 = vst [vmem:[%s293 + $0x7c] sm:$0xf] %v1420
        %1485 = vst [vmem:[%s293 + $0x80] sm:$0xf] %v1421
        %1486 = vst [vmem:[%s293 + $0x84] sm:$0xf] %v1422
        %1487 = vst [vmem:[%s293 + $0x88] sm:$0xf] %v1423
        %1488 = vst [vmem:[%s293 + $0x8c] sm:$0xf] %v1424
        %1489 = vst [vmem:[%s293 + $0x90] sm:$0xf] %v1425
        %1490 = vst [vmem:[%s293 + $0x94] sm:$0xf] %v1426
        %1491 = vst [vmem:[%s293 + $0x98] sm:$0xf] %v1427
        %1492 = vst [vmem:[%s293 + $0x9c] sm:$0xf] %v1428
        %1493 = vst [vmem:[%s293 + $0xa0] sm:$0xf] %v1429
        %1494 = vst [vmem:[%s293 + $0xa4] sm:$0xf] %v1430
        %1495 = vst [vmem:[%s293 + $0xa8] sm:$0xf] %v1431
        %1496 = vst [vmem:[%s293 + $0xac] sm:$0xf] %v1432
        %1497 = vst [vmem:[%s293 + $0xb0] sm:$0xf] %v1433
        %1498 = vst [vmem:[%s293 + $0xb4] sm:$0xf] %v1434
        %1499 = vst [vmem:[%s293 + $0xb8] sm:$0xf] %v1435
        %1500 = vst [vmem:[%s293 + $0xbc] sm:$0xf] %v1436
        %1501 = vst [vmem:[%s293 + $0xc0] sm:$0xf] %v1437
        %1502 = vst [vmem:[%s293 + $0xc4] sm:$0xf] %v1438
        %1503 = vst [vmem:[%s293 + $0xc8] sm:$0xf] %v1439
        %1504 = vst [vmem:[%s293 + $0xcc] sm:$0xf] %v1440
        %1505 = vst [vmem:[%s293 + $0xd0] sm:$0xf] %v1441
        %1506 = vst [vmem:[%s293 + $0xd4] sm:$0xf] %v1442
        %1507 = vst [vmem:[%s293 + $0xd8] sm:$0xf] %v1443
        %1508 = vst [vmem:[%s293 + $0xdc] sm:$0xf] %v1444
        %1509 = vst [vmem:[%s293 + $0xe0] sm:$0xf] %v1445
        %1510 = vst [vmem:[%s293 + $0xe4] sm:$0xf] %v1446
        %1511 = vst [vmem:[%s293 + $0xe8] sm:$0xf] %v1447
        %1512 = vst [vmem:[%s293 + $0xec] sm:$0xf] %v1448
        %1513 = vst [vmem:[%s293 + $0xf0] sm:$0xf] %v1449
        %1514 = vst [vmem:[%s293 + $0xf4] sm:$0xf] %v1450
        %1515 = vst [vmem:[%s293 + $0xf8] sm:$0xf] %v1451
        %1516 = vst [vmem:[%s293 + $0xfc] sm:$0xf] %v1452
        %s1517 = sand.u32 %s103, 1
        %s1518 = scalar_lea.sflag [#allocation4], %s1517
        %s1519 = sand.u32 %s103, 1
        %s1520 = smul.addr %s1519, 256
        %s1521 = scalar_lea.vmem [#allocation8], %s1520
        %s1522 = sand.u32 %s27, 1
        %s1523 = scalar_lea.sflag [#allocation10], %s1522
        %s1524 = sand.u32 %s129, 1
        %s1525 = smul.addr %s1524, 256
        %s1526 = scalar_lea.vmem [#allocation9], %s1525
        %s1527 = sand.u32 %s27, 1
        %s1528 = scalar_lea.sflag [#allocation10], %s1527
        %s1529 = sand.u32 %s155, 1
        %s1530 = smul.addr %s1529, 256
        %s1531 = scalar_lea.vmem [#allocation11], %s1530
        // Predicated region
        $region45: #{tpu_custom_call.1} parent=31 // pred_check
          %p1532 = pneg %p113
        $region46: #{tpu_custom_call.1} parent=31 // pred_check_branch
          %1534 = sbr.rel (%p1532) target = $region48
        $region47: #{tpu_custom_call.1} parent=31 // pred_region
          %s1535 = smul.u32 64, %s27
          %1537 = vsyncadd %s1518, 0
          %s1538 = smul.addr %s1535, 4
          %s1539 = scalar_lea.hbm %s3, %s1538
          %s1540 = sshll.u32 %s1521, 4
          %s1541 = int_to_ptr.vmem [resolvable:$true] %s1540
          %s1542 = sshll.u32 %s1539, 4
          %s1543 = int_to_ptr.hbm [resolvable:$true] %s1542
          %1548 = dma.vmem_to_hbm [thread:$0]  %s1541, 4096, %s1543, %s1518, 64, 64, 4
        $region48: #{tpu_custom_call.1} parent=31 // pred_fallthru
          _
        // Predicated region
        $region49: #{tpu_custom_call.1} parent=31 // pred_check
          %p1549 = pneg %p139
        $region50: #{tpu_custom_call.1} parent=31 // pred_check_branch
          %1551 = sbr.rel (%p1549) target = $region52
        $region51: #{tpu_custom_call.1} parent=31 // pred_region
          %s1552 = smul.u32 64, %s27
          %1554 = vsyncadd %s1523, 0
          %s1555 = smul.addr %s1552, 4
          %s1556 = scalar_lea.hbm %s4, %s1555
          %s1557 = sshll.u32 %s1526, 4
          %s1558 = int_to_ptr.vmem [resolvable:$true] %s1557
          %s1559 = sshll.u32 %s1556, 4
          %s1560 = int_to_ptr.hbm [resolvable:$true] %s1559
          %1565 = dma.vmem_to_hbm [thread:$0]  %s1558, 4096, %s1560, %s1523, 64, 64, 4
        $region52: #{tpu_custom_call.1} parent=31 // pred_fallthru
          _
        // Predicated region
        $region53: #{tpu_custom_call.1} parent=31 // pred_check
          %p1566 = pneg %p165
        $region54: #{tpu_custom_call.1} parent=31 // pred_check_branch
          %1568 = sbr.rel (%p1566) target = $region56
        $region55: #{tpu_custom_call.1} parent=31 // pred_region
          %s1569 = smul.u32 64, %s27
          %1571 = vsyncadd %s1528, 0
          %s1572 = smul.addr %s1569, 4
          %s1573 = scalar_lea.hbm %s5, %s1572
          %s1574 = sshll.u32 %s1531, 4
          %s1575 = int_to_ptr.vmem [resolvable:$true] %s1574
          %s1576 = sshll.u32 %s1573, 4
          %s1577 = int_to_ptr.hbm [resolvable:$true] %s1576
          %1582 = dma.vmem_to_hbm [thread:$0]  %s1575, 4096, %s1577, %s1528, 64, 64, 4
        $region56: #{tpu_custom_call.1} parent=31 // pred_fallthru
          _
      $region32: #{tpu_custom_call.1} parent=5 // pred_fallthru
        _
      %p1583 = scmp.le.s32.totalorder 2, %s22
      // Predicated region
      $region57: #{tpu_custom_call.1} parent=5 // pred_check
        %p1584 = pneg %p1583
      $region58: #{tpu_custom_call.1} parent=5 // pred_check_branch
        %1586 = sbr.rel (%p1584) target = $region60
      $region59: #{tpu_custom_call.1} parent=5 // pred_region
        %s1587 = ssub.s32 %s22, 2
        // Predicated region
        $region61: #{tpu_custom_call.1} parent=59 // pred_check
          %p1588 = pneg %p119
        $region62: #{tpu_custom_call.1} parent=59 // pred_check_branch
          %1590 = sbr.rel (%p1588) target = $region64
        $region63: #{tpu_custom_call.1} parent=59 // pred_region
          %s1591 = sand.u32 %s104, 1
          %s1592 = scalar_lea.sflag [#allocation4], %s1591
          %s1593 = sand.u32 %s104, 1
          %s1594 = smul.addr %s1593, 256
          %s1595 = scalar_lea.vmem [#allocation8], %s1594
          %1597 = dma.done %s1592, 4096
        $region64: #{tpu_custom_call.1} parent=59 // pred_fallthru
          _
        // Predicated region
        $region65: #{tpu_custom_call.1} parent=59 // pred_check
          %p1598 = pneg %p145
        $region66: #{tpu_custom_call.1} parent=59 // pred_check_branch
          %1600 = sbr.rel (%p1598) target = $region68
        $region67: #{tpu_custom_call.1} parent=59 // pred_region
          %s1601 = sand.u32 %s28, 1
          %s1602 = scalar_lea.sflag [#allocation10], %s1601
          %s1603 = sand.u32 %s130, 1
          %s1604 = smul.addr %s1603, 256
          %s1605 = scalar_lea.vmem [#allocation9], %s1604
          %1607 = dma.done %s1602, 4096
        $region68: #{tpu_custom_call.1} parent=59 // pred_fallthru
          _
        // Predicated region
        $region69: #{tpu_custom_call.1} parent=59 // pred_check
          %p1608 = pneg %p171
        $region70: #{tpu_custom_call.1} parent=59 // pred_check_branch
          %1610 = sbr.rel (%p1608) target = $region72
        $region71: #{tpu_custom_call.1} parent=59 // pred_region
          %s1611 = sand.u32 %s28, 1
          %s1612 = scalar_lea.sflag [#allocation10], %s1611
          %s1613 = sand.u32 %s156, 1
          %s1614 = smul.addr %s1613, 256
          %s1615 = scalar_lea.vmem [#allocation11], %s1614
          %1617 = dma.done %s1612, 4096
        $region72: #{tpu_custom_call.1} parent=59 // pred_fallthru
          _
      $region60: #{tpu_custom_call.1} parent=5 // pred_fallthru
        _
    $region6: #{tpu_custom_call.1} parent=1 // loop_footer
      %s26 = sadd.s32 1, %s22
    $region7: #{tpu_custom_call.1} parent=1 // loop_footer_branch
      %21 = sbr.rel target = $region3
    $region8: #{tpu_custom_call.1} parent=1 // loop_exit
      _
    %1618 = vsyncpa [#allocation3], 1
    %s1619 = scalar_lea.sflag [#allocation3], 1
    %1620 = vsyncpa %s1619, 1
    %1621 = vsyncpa [#allocation6], 1
    %1622 = vsyncpa [#allocation4], 1
    %s1623 = scalar_lea.sflag [#allocation4], 1
    %1624 = vsyncpa %s1623, 1
    %1625 = vsyncpa [#allocation10], 1
    %s1626 = scalar_lea.sflag [#allocation10], 1
    %1627 = vsyncpa %s1626, 1

// kernel: tpu_custom_call.1
$region0: #{tpu_custom_call.1}
  #allocation0 [shape = 'u32[]', space=smem, size = 0x4, offset = 0x4, fixed_abs, tag = 'smem constant byte address 0x4 - core index']
  #allocation1 [shape = 'u32[72,128]{1,0:T(1,128)}', space=vmem, size = 0x9000, scoped, tag = 'internal scratch']
  %s0 = inlined_call_operand.hbm [shape: f32[1024,128], index: 0, kind: input, shape index: {}]
  %s1 = inlined_call_operand.hbm [shape: bf16[128,384], index: 1, kind: input, shape index: {}]
  %s2 = inlined_call_operand.hbm [shape: f32[1,384], index: 2, kind: input, shape index: {}]
  %s3 = inlined_call_operand.hbm [shape: bf16[1024,128], index: 3, kind: output, shape index: {0}]
  %s4 = inlined_call_operand.hbm [shape: bf16[1024,128], index: 4, kind: output, shape index: {1}]
  %s5 = inlined_call_operand.hbm [shape: bf16[1024,128], index: 5, kind: output, shape index: {2}]
  %6 = xla_tuple %s3, %s4, %s5
  %s7 = sld [smem:[#allocation0]]
  $region73: #{tpu_custom_call.1} parent=0
    _
  %s9 = ssub.s32 1, %s7
  %s10 = scalar_select 0, %s9, %s7
  $region1: #{tpu_custom_call.1} parent=0
    #allocation2 [shape = 'u8[524288]{0}', space=vmem, size = 0x80000, scoped, tag = 'input window, operand 0']
    #allocation3 [shape = 's32[2]{0}', space=sflag, size = 0x8, scoped, tag = 'scoped memory for tpu_custom_call.1']
    #allocation4 [shape = 's32[2]{0}', space=sflag, size = 0x8, scoped, tag = 'scoped memory for tpu_custom_call.1']
    #allocation5 [shape = 'u8[98304]{0}', space=vmem, size = 0x18000, scoped, tag = 'input window, operand 1, single buffered']
    #allocation6 [shape = 's32[1]{0}', space=sflag, size = 0x4, scoped, tag = 'scoped memory for tpu_custom_call.1']
    #allocation7 [shape = 'u8[1536]{0}', space=vmem, size = 0x800, scoped, tag = 'input window, operand 2, single buffered']
    #allocation8 [shape = 'u8[262144]{0}', space=vmem, size = 0x40000, scoped, tag = 'output window, operand 0']
    #allocation9 [shape = 'u8[262144]{0}', space=vmem, size = 0x40000, scoped, tag = 'output window, operand 1']
    #allocation10 [shape = 's32[2]{0}', space=sflag, size = 0x8, scoped, tag = 'scoped memory for tpu_custom_call.1']
    #allocation11 [shape = 'u8[262144]{0}', space=vmem, size = 0x40000, scoped, tag = 'output window, operand 2']
    %11 = vsyncpa [#allocation3], 0
    %s12 = scalar_lea.sflag [#allocation3], 1
    %13 = vsyncpa %s12, 0
    %14 = vsyncpa [#allocation6], 0
    %15 = vsyncpa [#allocation4], 0
    %s16 = scalar_lea.sflag [#allocation4], 1
    %17 = vsyncpa %s16, 0
    %18 = vsyncpa [#allocation10], 0
    %s19 = scalar_lea.sflag [#allocation10], 1
    %20 = vsyncpa %s19, 0
    loop: start=0, step=1, limit=4
    $region2: #{tpu_custom_call.1} parent=1 // loop_pre_header
      _
    $region3: #{tpu_custom_call.1} parent=1 // loop_header
      %s22 = sphi 0, %s26
      %p23 = scmp.ge.s32.totalorder %s22, 4
      %s32 = sphi 0, %s34
      %s35 = sphi 0, %s32
      %s36 = sphi 0, %s35
      %s52 = sphi 0, %s36
      %s56 = sphi 0, %s56
      %s58 = sphi 0, %s56
      %s59 = sphi 0, %s58
      %s73 = sphi 0, %s59
      %s77 = sphi 0, %s77
      %s79 = sphi 0, %s77
      %s80 = sphi 0, %s79
      %s94 = sphi 0, %s80
      %s100 = sphi 0, %s102
      %s103 = sphi 0, %s100
      %s104 = sphi 0, %s103
      %s120 = sphi 0, %s104
      %s126 = sphi 0, %s128
      %s129 = sphi 0, %s126
      %s130 = sphi 0, %s129
      %s146 = sphi 0, %s130
      %s152 = sphi 0, %s154
      %s155 = sphi 0, %s152
      %s156 = sphi 0, %s155
      %s172 = sphi 0, %s156
    $region4: #{tpu_custom_call.1} parent=1 // loop_header_branch
      %25 = sbr.rel (%p23) target = $region8
    $region5: #{tpu_custom_call.1} parent=1 // loop_body
      %s27 = ssub.s32 %s22, 1
      %s28 = ssub.s32 %s22, 2
      %s29 = sadd.s32 %s22, 1
      %s30 = ssub.s32 %s22, %s29
      %p31 = scmp.eq.s32.totalorder %s30, 0
      %s33 = sadd.s32 %s32, 1
      %s34 = scalar_select %p31, %s32, %s33
      %p37 = pneg %p31
      %p38 = scmp.eq.s32.totalorder %s22, 1
      %p39 = por %p37, %p38
      %p40 = scmp.ne.s32.totalorder %s32, %s35
      %p41 = scmp.eq.s32.totalorder %s22, 0
      %p42 = por %p40, %p41
      %p43 = scmp.ne.s32.totalorder %s32, %s35
      %p44 = scmp.eq.s32.totalorder %s27, 1
      %p45 = por %p43, %p44
      %p46 = scmp.ne.s32.totalorder %s35, %s36
      %p47 = scmp.eq.s32.totalorder %s27, 0
      %p48 = por %p46, %p47
      %p49 = scmp.ne.s32.totalorder %s35, %s36
      %p50 = scmp.eq.s32.totalorder %s28, 1
      %p51 = por %p49, %p50
      %p53 = scmp.ne.s32.totalorder %s36, %s52
      %p54 = scmp.eq.s32.totalorder %s28, 0
      %p55 = por %p53, %p54
      %s57 = sadd.s32 %s56, 1
      %p60 = scmp.eq.s32.totalorder %s22, 1
      %p61 = scmp.ne.s32.totalorder %s56, %s58
      %p62 = scmp.eq.s32.totalorder %s22, 0
      %p63 = por %p61, %p62
      %p64 = scmp.ne.s32.totalorder %s56, %s58
      %p65 = scmp.eq.s32.totalorder %s27, 1
      %p66 = por %p64, %p65
      %p67 = scmp.ne.s32.totalorder %s58, %s59
      %p68 = scmp.eq.s32.totalorder %s27, 0
      %p69 = por %p67, %p68
      %p70 = scmp.ne.s32.totalorder %s58, %s59
      %p71 = scmp.eq.s32.totalorder %s28, 1
      %p72 = por %p70, %p71
      %p74 = scmp.ne.s32.totalorder %s59, %s73
      %p75 = scmp.eq.s32.totalorder %s28, 0
      %p76 = por %p74, %p75
      %s78 = sadd.s32 %s77, 1
      %p81 = scmp.eq.s32.totalorder %s22, 1
      %p82 = scmp.ne.s32.totalorder %s77, %s79
      %p83 = scmp.eq.s32.totalorder %s22, 0
      %p84 = por %p82, %p83
      %p85 = scmp.ne.s32.totalorder %s77, %s79
      %p86 = scmp.eq.s32.totalorder %s27, 1
      %p87 = por %p85, %p86
      %p88 = scmp.ne.s32.totalorder %s79, %s80
      %p89 = scmp.eq.s32.totalorder %s27, 0
      %p90 = por %p88, %p89
      %p91 = scmp.ne.s32.totalorder %s79, %s80
      %p92 = scmp.eq.s32.totalorder %s28, 1
      %p93 = por %p91, %p92
      %p95 = scmp.ne.s32.totalorder %s80, %s94
      %p96 = scmp.eq.s32.totalorder %s28, 0
      %p97 = por %p95, %p96
      %s98 = ssub.s32 %s22, %s29
      %p99 = scmp.eq.s32.totalorder %s98, 0
      %s101 = sadd.s32 %s100, 1
      %s102 = scalar_select %p99, %s100, %s101
      %p105 = pneg %p99
      %p106 = scmp.eq.s32.totalorder %s22, 1
      %p107 = por %p105, %p106
      %p108 = scmp.ne.s32.totalorder %s100, %s103
      %p109 = scmp.eq.s32.totalorder %s22, 0
      %p110 = por %p108, %p109
      %p111 = scmp.ne.s32.totalorder %s100, %s103
      %p112 = scmp.eq.s32.totalorder %s27, 1
      %p113 = por %p111, %p112
      %p114 = scmp.ne.s32.totalorder %s103, %s104
      %p115 = scmp.eq.s32.totalorder %s27, 0
      %p116 = por %p114, %p115
      %p117 = scmp.ne.s32.totalorder %s103, %s104
      %p118 = scmp.eq.s32.totalorder %s28, 1
      %p119 = por %p117, %p118
      %p121 = scmp.ne.s32.totalorder %s104, %s120
      %p122 = scmp.eq.s32.totalorder %s28, 0
      %p123 = por %p121, %p122
      %s124 = ssub.s32 %s22, %s29
      %p125 = scmp.eq.s32.totalorder %s124, 0
      %s127 = sadd.s32 %s126, 1
      %s128 = scalar_select %p125, %s126, %s127
      %p131 = pneg %p125
      %p132 = scmp.eq.s32.totalorder %s22, 1
      %p133 = por %p131, %p132
      %p134 = scmp.ne.s32.totalorder %s126, %s129
      %p135 = scmp.eq.s32.totalorder %s22, 0
      %p136 = por %p134, %p135
      %p137 = scmp.ne.s32.totalorder %s126, %s129
      %p138 = scmp.eq.s32.totalorder %s27, 1
      %p139 = por %p137, %p138
      %p140 = scmp.ne.s32.totalorder %s129, %s130
      %p141 = scmp.eq.s32.totalorder %s27, 0
      %p142 = por %p140, %p141
      %p143 = scmp.ne.s32.totalorder %s129, %s130
      %p144 = scmp.eq.s32.totalorder %s28, 1
      %p145 = por %p143, %p144
      %p147 = scmp.ne.s32.totalorder %s130, %s146
      %p148 = scmp.eq.s32.totalorder %s28, 0
      %p149 = por %p147, %p148
      %s150 = ssub.s32 %s22, %s29
      %p151 = scmp.eq.s32.totalorder %s150, 0
      %s153 = sadd.s32 %s152, 1
      %s154 = scalar_select %p151, %s152, %s153
      %p157 = pneg %p151
      %p158 = scmp.eq.s32.totalorder %s22, 1
      %p159 = por %p157, %p158
      %p160 = scmp.ne.s32.totalorder %s152, %s155
      %p161 = scmp.eq.s32.totalorder %s22, 0
      %p162 = por %p160, %p161
      %p163 = scmp.ne.s32.totalorder %s152, %s155
      %p164 = scmp.eq.s32.totalorder %s27, 1
      %p165 = por %p163, %p164
      %p166 = scmp.ne.s32.totalorder %s155, %s156
      %p167 = scmp.eq.s32.totalorder %s27, 0
      %p168 = por %p166, %p167
      %p169 = scmp.ne.s32.totalorder %s155, %s156
      %p170 = scmp.eq.s32.totalorder %s28, 1
      %p171 = por %p169, %p170
      %p173 = scmp.ne.s32.totalorder %s156, %s172
      %p174 = scmp.eq.s32.totalorder %s28, 0
      %p175 = por %p173, %p174
      %p176 = scmp.le.s32.totalorder 1, %s22
      %p177 = scmp.lt.s32.totalorder %s22, 3
      %p178 = pnand %p176, %p177
      %p179 = pneg %p178
      // Predicated region
      $region9: #{tpu_custom_call.1} parent=5 // pred_check
        _
      $region10: #{tpu_custom_call.1} parent=5 // pred_check_branch
        %181 = sbr.rel (%p178) target = $region12
      $region11: #{tpu_custom_call.1} parent=5 // pred_region
        %s182 = ssub.s32 %s22, 1
        // Predicated region
        $region13: #{tpu_custom_call.1} parent=11 // pred_check
          %p183 = pneg %p69
        $region14: #{tpu_custom_call.1} parent=11 // pred_check_branch
          %185 = sbr.rel (%p183) target = $region16
        $region15: #{tpu_custom_call.1} parent=11 // pred_region
          %187 = vsyncadd [#allocation6], 0
          %s188 = sshll.u32 %s1, 4
          %s189 = int_to_ptr.hbm [resolvable:$true] %s188
          %s190 = sshll.u32 [#allocation5], 4
          %s191 = int_to_ptr.vmem [resolvable:$true] %s190
          %196 = dma.hbm_to_vmem [thread:$0]  %s189, 3072, %s191, [#allocation6], 192, 192, 12
        $region16: #{tpu_custom_call.1} parent=11 // pred_fallthru
          _
        // Predicated region
        $region17: #{tpu_custom_call.1} parent=11 // pred_check
          %p197 = pneg %p90
        $region18: #{tpu_custom_call.1} parent=11 // pred_check_branch
          %199 = sbr.rel (%p197) target = $region20
        $region19: #{tpu_custom_call.1} parent=11 // pred_region
          %201 = vsyncadd [#allocation6], 0
          %s203 = sshll.u32 %s2, 4
          %s204 = int_to_ptr.hbm [resolvable:$true] %s203
          %s205 = sshll.u32 [#allocation7], 4
          %s206 = int_to_ptr.vmem [resolvable:$true] %s205
          %208 = dma.hbm_to_vmem [thread:$0]  %s204, 48, %s206, [#allocation6]
        $region20: #{tpu_custom_call.1} parent=11 // pred_fallthru
          _
      $region12: #{tpu_custom_call.1} parent=5 // pred_fallthru
        _
      %p209 = scmp.lt.s32.totalorder %s22, 2
      // Predicated region
      $region21: #{tpu_custom_call.1} parent=5 // pred_check
        %p210 = pneg %p209
      $region22: #{tpu_custom_call.1} parent=5 // pred_check_branch
        %212 = sbr.rel (%p210) target = $region24
      $region23: #{tpu_custom_call.1} parent=5 // pred_region
        // Predicated region
        $region25: #{tpu_custom_call.1} parent=23 // pred_check
          %p213 = pneg %p42
        $region26: #{tpu_custom_call.1} parent=23 // pred_check_branch
          %215 = sbr.rel (%p213) target = $region28
        $region27: #{tpu_custom_call.1} parent=23 // pred_region
          %s216 = sand.u32 %s32, 1
          %s217 = scalar_lea.sflag [#allocation3], %s216
          %s218 = sand.u32 %s32, 1
          %s219 = smul.addr %s218, 512
          %s220 = scalar_lea.vmem [#allocation2], %s219
          %s221 = smul.u32 64, %s22
          %223 = vsyncadd %s217, 0
          %s224 = smul.addr %s221, 8
          %s225 = scalar_lea.hbm %s0, %s224
          %s226 = sshll.u32 %s225, 4
          %s227 = int_to_ptr.hbm [resolvable:$true] %s226
          %s228 = sshll.u32 %s220, 4
          %s229 = int_to_ptr.vmem [resolvable:$true] %s228
          %234 = dma.hbm_to_vmem [thread:$0]  %s227, 8192, %s229, %s217, 128, 128, 8
        $region28: #{tpu_custom_call.1} parent=23 // pred_fallthru
          _
      $region24: #{tpu_custom_call.1} parent=5 // pred_fallthru
        _
      %p235 = scmp.le.s32.totalorder 1, %s22
      %p236 = scmp.lt.s32.totalorder %s22, 3
      %p237 = pnand %p235, %p236
      %p238 = pneg %p237
      // Predicated region
      $region29: #{tpu_custom_call.1} parent=5 // pred_check
        _
      $region30: #{tpu_custom_call.1} parent=5 // pred_check_branch
        %240 = sbr.rel (%p237) target = $region32
      $region31: #{tpu_custom_call.1} parent=5 // pred_region
        %s241 = ssub.s32 %s22, 1
        %s242 = sand.u32 %s35, 1
        %s243 = scalar_lea.sflag [#allocation3], %s242
        %s244 = sand.u32 %s35, 1
        %s245 = smul.addr %s244, 512
        %s246 = scalar_lea.vmem [#allocation2], %s245
        // Predicated region
        $region33: #{tpu_custom_call.1} parent=31 // pred_check
          %p247 = pneg %p48
        $region34: #{tpu_custom_call.1} parent=31 // pred_check_branch
          %249 = sbr.rel (%p247) target = $region36
        $region35: #{tpu_custom_call.1} parent=31 // pred_region
          %251 = dma.done %s243, 8192
        $region36: #{tpu_custom_call.1} parent=31 // pred_fallthru
          _
        // Predicated region
        $region37: #{tpu_custom_call.1} parent=31 // pred_check
          %p252 = pneg %p69
        $region38: #{tpu_custom_call.1} parent=31 // pred_check_branch
          %254 = sbr.rel (%p252) target = $region40
        $region39: #{tpu_custom_call.1} parent=31 // pred_region
          %256 = dma.done [#allocation6], 3072
        $region40: #{tpu_custom_call.1} parent=31 // pred_fallthru
          _
        // Predicated region
        $region41: #{tpu_custom_call.1} parent=31 // pred_check
          %p257 = pneg %p90
        $region42: #{tpu_custom_call.1} parent=31 // pred_check_branch
          %259 = sbr.rel (%p257) target = $region44
        $region43: #{tpu_custom_call.1} parent=31 // pred_region
          %261 = dma.done [#allocation6], 48
        $region44: #{tpu_custom_call.1} parent=31 // pred_fallthru
          _
        %s262 = sand.u32 %s35, 1
        %s263 = scalar_lea.sflag [#allocation3], %s262
        %s264 = sand.u32 %s35, 1
        %s265 = smul.addr %s264, 512
        %s266 = scalar_lea.vmem [#allocation2], %s265
        %p267 = pneg %p48
        %p268 = pneg %p45
        %p269 = pneg %p69
        %p270 = pneg %p66
        %p271 = pneg %p90
        %p272 = pneg %p87
        %p273 = pneg %p116
        %p274 = pneg %p113
        %s275 = sand.u32 %s103, 1
        %s276 = scalar_lea.sflag [#allocation4], %s275
        %s277 = sand.u32 %s103, 1
        %s278 = smul.addr %s277, 256
        %s279 = scalar_lea.vmem [#allocation8], %s278
        %p280 = pneg %p142
        %p281 = pneg %p139
        %s282 = sand.u32 %s27, 1
        %s283 = scalar_lea.sflag [#allocation10], %s282
        %s284 = sand.u32 %s129, 1
        %s285 = smul.addr %s284, 256
        %s286 = scalar_lea.vmem [#allocation9], %s285
        %p287 = pneg %p168
        %p288 = pneg %p165
        %s289 = sand.u32 %s27, 1
        %s290 = scalar_lea.sflag [#allocation10], %s289
        %s291 = sand.u32 %s155, 1
        %s292 = smul.addr %s291, 256
        %s293 = scalar_lea.vmem [#allocation11], %s292
        %s294 = smul.u32 64, %s27
        %s295 = smul.u32 64, %s27
        %s296 = smul.u32 64, %s27
        %s297 = smul.u32 64, %s27
        %v298 = vld [vmem:[%s246] sm:$0xff]
        %v299 = vld [vmem:[%s246 + $0x8] sm:$0xff]
        %v300 = vld [vmem:[%s246 + $0x10] sm:$0xff]
        %v301 = vld [vmem:[%s246 + $0x18] sm:$0xff]
        %v302 = vld [vmem:[%s246 + $0x20] sm:$0xff]
        %v303 = vld [vmem:[%s246 + $0x28] sm:$0xff]
        %v304 = vld [vmem:[%s246 + $0x30] sm:$0xff]
        %v305 = vld [vmem:[%s246 + $0x38] sm:$0xff]
        %v306 = vld [vmem:[%s246 + $0x40] sm:$0xff]
        %v307 = vld [vmem:[%s246 + $0x48] sm:$0xff]
        %v308 = vld [vmem:[%s246 + $0x50] sm:$0xff]
        %v309 = vld [vmem:[%s246 + $0x58] sm:$0xff]
        %v310 = vld [vmem:[%s246 + $0x60] sm:$0xff]
        %v311 = vld [vmem:[%s246 + $0x68] sm:$0xff]
        %v312 = vld [vmem:[%s246 + $0x70] sm:$0xff]
        %v313 = vld [vmem:[%s246 + $0x78] sm:$0xff]
        %v314 = vld [vmem:[%s246 + $0x80] sm:$0xff]
        %v315 = vld [vmem:[%s246 + $0x88] sm:$0xff]
        %v316 = vld [vmem:[%s246 + $0x90] sm:$0xff]
        %v317 = vld [vmem:[%s246 + $0x98] sm:$0xff]
        %v318 = vld [vmem:[%s246 + $0xa0] sm:$0xff]
        %v319 = vld [vmem:[%s246 + $0xa8] sm:$0xff]
        %v320 = vld [vmem:[%s246 + $0xb0] sm:$0xff]
        %v321 = vld [vmem:[%s246 + $0xb8] sm:$0xff]
        %v322 = vld [vmem:[%s246 + $0xc0] sm:$0xff]
        %v323 = vld [vmem:[%s246 + $0xc8] sm:$0xff]
        %v324 = vld [vmem:[%s246 + $0xd0] sm:$0xff]
        %v325 = vld [vmem:[%s246 + $0xd8] sm:$0xff]
        %v326 = vld [vmem:[%s246 + $0xe0] sm:$0xff]
        %v327 = vld [vmem:[%s246 + $0xe8] sm:$0xff]
        %v328 = vld [vmem:[%s246 + $0xf0] sm:$0xff]
        %v329 = vld [vmem:[%s246 + $0xf8] sm:$0xff]
        %v330 = vld [vmem:[%s246 + $0x100] sm:$0xff]
        %v331 = vld [vmem:[%s246 + $0x108] sm:$0xff]
        %v332 = vld [vmem:[%s246 + $0x110] sm:$0xff]
        %v333 = vld [vmem:[%s246 + $0x118] sm:$0xff]
        %v334 = vld [vmem:[%s246 + $0x120] sm:$0xff]
        %v335 = vld [vmem:[%s246 + $0x128] sm:$0xff]
        %v336 = vld [vmem:[%s246 + $0x130] sm:$0xff]
        %v337 = vld [vmem:[%s246 + $0x138] sm:$0xff]
        %v338 = vld [vmem:[%s246 + $0x140] sm:$0xff]
        %v339 = vld [vmem:[%s246 + $0x148] sm:$0xff]
        %v340 = vld [vmem:[%s246 + $0x150] sm:$0xff]
        %v341 = vld [vmem:[%s246 + $0x158] sm:$0xff]
        %v342 = vld [vmem:[%s246 + $0x160] sm:$0xff]
        %v343 = vld [vmem:[%s246 + $0x168] sm:$0xff]
        %v344 = vld [vmem:[%s246 + $0x170] sm:$0xff]
        %v345 = vld [vmem:[%s246 + $0x178] sm:$0xff]
        %v346 = vld [vmem:[%s246 + $0x180] sm:$0xff]
        %v347 = vld [vmem:[%s246 + $0x188] sm:$0xff]
        %v348 = vld [vmem:[%s246 + $0x190] sm:$0xff]
        %v349 = vld [vmem:[%s246 + $0x198] sm:$0xff]
        %v350 = vld [vmem:[%s246 + $0x1a0] sm:$0xff]
        %v351 = vld [vmem:[%s246 + $0x1a8] sm:$0xff]
        %v352 = vld [vmem:[%s246 + $0x1b0] sm:$0xff]
        %v353 = vld [vmem:[%s246 + $0x1b8] sm:$0xff]
        %v354 = vld [vmem:[%s246 + $0x1c0] sm:$0xff]
        %v355 = vld [vmem:[%s246 + $0x1c8] sm:$0xff]
        %v356 = vld [vmem:[%s246 + $0x1d0] sm:$0xff]
        %v357 = vld [vmem:[%s246 + $0x1d8] sm:$0xff]
        %v358 = vld [vmem:[%s246 + $0x1e0] sm:$0xff]
        %v359 = vld [vmem:[%s246 + $0x1e8] sm:$0xff]
        %v360 = vld [vmem:[%s246 + $0x1f0] sm:$0xff]
        %v361 = vld [vmem:[%s246 + $0x1f8] sm:$0xff]
        %v362 = vpack.c.bf16 %v299, %v298
        %v363 = vpack.c.bf16 %v301, %v300
        %v364 = vpack.c.bf16 %v303, %v302
        %v365 = vpack.c.bf16 %v305, %v304
        %v366 = vpack.c.bf16 %v307, %v306
        %v367 = vpack.c.bf16 %v309, %v308
        %v368 = vpack.c.bf16 %v311, %v310
        %v369 = vpack.c.bf16 %v313, %v312
        %v370 = vpack.c.bf16 %v315, %v314
        %v371 = vpack.c.bf16 %v317, %v316
        %v372 = vpack.c.bf16 %v319, %v318
        %v373 = vpack.c.bf16 %v321, %v320
        %v374 = vpack.c.bf16 %v323, %v322
        %v375 = vpack.c.bf16 %v325, %v324
        %v376 = vpack.c.bf16 %v327, %v326
        %v377 = vpack.c.bf16 %v329, %v328
        %v378 = vpack.c.bf16 %v331, %v330
        %v379 = vpack.c.bf16 %v333, %v332
        %v380 = vpack.c.bf16 %v335, %v334
        %v381 = vpack.c.bf16 %v337, %v336
        %v382 = vpack.c.bf16 %v339, %v338
        %v383 = vpack.c.bf16 %v341, %v340
        %v384 = vpack.c.bf16 %v343, %v342
        %v385 = vpack.c.bf16 %v345, %v344
        %v386 = vpack.c.bf16 %v347, %v346
        %v387 = vpack.c.bf16 %v349, %v348
        %v388 = vpack.c.bf16 %v351, %v350
        %v389 = vpack.c.bf16 %v353, %v352
        %v390 = vpack.c.bf16 %v355, %v354
        %v391 = vpack.c.bf16 %v357, %v356
        %v392 = vpack.c.bf16 %v359, %v358
        %v393 = vpack.c.bf16 %v361, %v360
        %v394 = vld [vmem:[#allocation5] sm:$0xff]
        %v395 = vld [vmem:[#allocation5 + $0x8] sm:$0xf]
        %v396 = vld [vmem:[#allocation5 + $0xc] sm:$0xff]
        %v397 = vld [vmem:[#allocation5 + $0x14] sm:$0xf]
        %v398 = vld [vmem:[#allocation5 + $0x18] sm:$0xff]
        %v399 = vld [vmem:[#allocation5 + $0x20] sm:$0xf]
        %v400 = vld [vmem:[#allocation5 + $0x24] sm:$0xff]
        %v401 = vld [vmem:[#allocation5 + $0x2c] sm:$0xf]
        %v402 = vld [vmem:[#allocation5 + $0x30] sm:$0xff]
        %v403 = vld [vmem:[#allocation5 + $0x38] sm:$0xf]
        %v404 = vld [vmem:[#allocation5 + $0x3c] sm:$0xff]
        %v405 = vld [vmem:[#allocation5 + $0x44] sm:$0xf]
        %v406 = vld [vmem:[#allocation5 + $0x48] sm:$0xff]
        %v407 = vld [vmem:[#allocation5 + $0x50] sm:$0xf]
        %v408 = vld [vmem:[#allocation5 + $0x54] sm:$0xff]
        %v409 = vld [vmem:[#allocation5 + $0x5c] sm:$0xf]
        %v410 = vld [vmem:[#allocation5 + $0x60] sm:$0xff]
        %v411 = vld [vmem:[#allocation5 + $0x68] sm:$0xf]
        %v412 = vld [vmem:[#allocation5 + $0x6c] sm:$0xff]
        %v413 = vld [vmem:[#allocation5 + $0x74] sm:$0xf]
        %v414 = vld [vmem:[#allocation5 + $0x78] sm:$0xff]
        %v415 = vld [vmem:[#allocation5 + $0x80] sm:$0xf]
        %v416 = vld [vmem:[#allocation5 + $0x84] sm:$0xff]
        %v417 = vld [vmem:[#allocation5 + $0x8c] sm:$0xf]
        %v418 = vld [vmem:[#allocation5 + $0x90] sm:$0xff]
        %v419 = vld [vmem:[#allocation5 + $0x98] sm:$0xf]
        %v420 = vld [vmem:[#allocation5 + $0x9c] sm:$0xff]
        %v421 = vld [vmem:[#allocation5 + $0xa4] sm:$0xf]
        %v422 = vld [vmem:[#allocation5 + $0xa8] sm:$0xff]
        %v423 = vld [vmem:[#allocation5 + $0xb0] sm:$0xf]
        %v424 = vld [vmem:[#allocation5 + $0xb4] sm:$0xff]
        %v425 = vld [vmem:[#allocation5 + $0xbc] sm:$0xf]
        %v426 = vld [vmem:[#allocation7] sm:$0x7]
        %v428 = vperm.slane %v426, 0
        %v429 = vperm.slane %v426, 1
        %v430 = vperm.slane %v426, 2
        %v466 = vunpack.c.l.b16 %v394
        %v467 = vunpack.c.h.b16 %v394
        %v468 = vunpack.c.l.b16 %v395
        %v469 = vunpack.c.l.b16 %v396
        %v470 = vunpack.c.h.b16 %v396
        %v471 = vunpack.c.l.b16 %v397
        %v472 = vunpack.c.l.b16 %v398
        %v473 = vunpack.c.h.b16 %v398
        %v474 = vunpack.c.l.b16 %v399
        %v475 = vunpack.c.l.b16 %v400
        %v476 = vunpack.c.h.b16 %v400
        %v477 = vunpack.c.l.b16 %v401
        %v478 = vunpack.c.l.b16 %v402
        %v479 = vunpack.c.h.b16 %v402
        %v480 = vunpack.c.l.b16 %v403
        %v481 = vunpack.c.l.b16 %v404
        %v482 = vunpack.c.h.b16 %v404
        %v483 = vunpack.c.l.b16 %v405
        %v484 = vunpack.c.l.b16 %v406
        %v485 = vunpack.c.h.b16 %v406
        %v486 = vunpack.c.l.b16 %v407
        %v487 = vunpack.c.l.b16 %v408
        %v488 = vunpack.c.h.b16 %v408
        %v489 = vunpack.c.l.b16 %v409
        %v490 = vunpack.c.l.b16 %v410
        %v491 = vunpack.c.h.b16 %v410
        %v492 = vunpack.c.l.b16 %v411
        %v493 = vunpack.c.l.b16 %v412
        %v494 = vunpack.c.h.b16 %v412
        %v495 = vunpack.c.l.b16 %v413
        %v496 = vunpack.c.l.b16 %v414
        %v497 = vunpack.c.h.b16 %v414
        %v498 = vunpack.c.l.b16 %v415
        %v499 = vunpack.c.l.b16 %v416
        %v500 = vunpack.c.h.b16 %v416
        %v501 = vunpack.c.l.b16 %v417
        %v502 = vunpack.c.l.b16 %v418
        %v503 = vunpack.c.h.b16 %v418
        %v504 = vunpack.c.l.b16 %v419
        %v505 = vunpack.c.l.b16 %v420
        %v506 = vunpack.c.h.b16 %v420
        %v507 = vunpack.c.l.b16 %v421
        %v508 = vunpack.c.l.b16 %v422
        %v509 = vunpack.c.h.b16 %v422
        %v510 = vunpack.c.l.b16 %v423
        %v511 = vunpack.c.l.b16 %v424
        %v512 = vunpack.c.h.b16 %v424
        %v513 = vunpack.c.l.b16 %v425
        %v514 = vpack.c.b16 %v469, %v466
        %v515 = vpack.c.b16 %v470, %v467
        %v516 = vpack.c.b16 %v471, %v468
        %v517 = vpack.c.b16 %v475, %v472
        %v518 = vpack.c.b16 %v476, %v473
        %v519 = vpack.c.b16 %v477, %v474
        %v520 = vpack.c.b16 %v481, %v478
        %v521 = vpack.c.b16 %v482, %v479
        %v522 = vpack.c.b16 %v483, %v480
        %v523 = vpack.c.b16 %v487, %v484
        %v524 = vpack.c.b16 %v488, %v485
        %v525 = vpack.c.b16 %v489, %v486
        %v526 = vpack.c.b16 %v493, %v490
        %v527 = vpack.c.b16 %v494, %v491
        %v528 = vpack.c.b16 %v495, %v492
        %v529 = vpack.c.b16 %v499, %v496
        %v530 = vpack.c.b16 %v500, %v497
        %v531 = vpack.c.b16 %v501, %v498
        %v532 = vpack.c.b16 %v505, %v502
        %v533 = vpack.c.b16 %v506, %v503
        %v534 = vpack.c.b16 %v507, %v504
        %v535 = vpack.c.b16 %v511, %v508
        %v536 = vpack.c.b16 %v512, %v509
        %v537 = vpack.c.b16 %v513, %v510
        %562 = vmatpush.bf16.msra.mxu0 %v535
        %563 = vmatpush.bf16.msra.mxu0 %v532
        %564 = vmatpush.bf16.msra.mxu0 %v529
        %565 = vmatpush.bf16.msra.mxu0 %v526
        %566 = vmatpush.bf16.msra.mxu0 %v523
        %567 = vmatpush.bf16.msra.mxu0 %v520
        %568 = vmatpush.bf16.msra.mxu0 %v517
        %569 = vmatpush.bf16.msra.mxu0 %v514
        %570 = vmatmul.bf16.gmra.mxu0 %v362
        %v571 = vpop.f32.mrf.mxu0
        %v572 = vadd.f32 %v428, %v571
        %v573 = vpop.f32.mrf.mxu0
        %v574 = vadd.f32 %v428, %v573
        %575 = vmatmul.bf16.gmra.mxu0 %v363
        %v576 = vpop.f32.mrf.mxu0
        %v577 = vadd.f32 %v428, %v576
        %v578 = vpop.f32.mrf.mxu0
        %v579 = vadd.f32 %v428, %v578
        %580 = vmatmul.bf16.gmra.mxu0 %v364
        %v581 = vpop.f32.mrf.mxu0
        %v582 = vadd.f32 %v428, %v581
        %v583 = vpop.f32.mrf.mxu0
        %v584 = vadd.f32 %v428, %v583
        %585 = vmatmul.bf16.gmra.mxu0 %v365
        %v586 = vpop.f32.mrf.mxu0
        %v587 = vadd.f32 %v428, %v586
        %v588 = vpop.f32.mrf.mxu0
        %v589 = vadd.f32 %v428, %v588
        %590 = vmatmul.bf16.gmra.mxu0 %v366
        %v591 = vpop.f32.mrf.mxu0
        %v592 = vadd.f32 %v428, %v591
        %v593 = vpop.f32.mrf.mxu0
        %v594 = vadd.f32 %v428, %v593
        %595 = vmatmul.bf16.gmra.mxu0 %v367
        %v596 = vpop.f32.mrf.mxu0
        %v597 = vadd.f32 %v428, %v596
        %v598 = vpop.f32.mrf.mxu0
        %v599 = vadd.f32 %v428, %v598
        %600 = vmatmul.bf16.gmra.mxu0 %v368
        %v601 = vpop.f32.mrf.mxu0
        %v602 = vadd.f32 %v428, %v601
        %v603 = vpop.f32.mrf.mxu0
        %v604 = vadd.f32 %v428, %v603
        %605 = vmatmul.bf16.gmra.mxu0 %v369
        %v606 = vpop.f32.mrf.mxu0
        %v607 = vadd.f32 %v428, %v606
        %v608 = vpop.f32.mrf.mxu0
        %v609 = vadd.f32 %v428, %v608
        %610 = vmatmul.bf16.gmra.mxu0 %v370
        %v611 = vpop.f32.mrf.mxu0
        %v612 = vadd.f32 %v428, %v611
        %v613 = vpop.f32.mrf.mxu0
        %v614 = vadd.f32 %v428, %v613
        %615 = vmatmul.bf16.gmra.mxu0 %v371
        %v616 = vpop.f32.mrf.mxu0
        %v617 = vadd.f32 %v428, %v616
        %v618 = vpop.f32.mrf.mxu0
        %v619 = vadd.f32 %v428, %v618
        %620 = vmatmul.bf16.gmra.mxu0 %v372
        %v621 = vpop.f32.mrf.mxu0
        %v622 = vadd.f32 %v428, %v621
        %v623 = vpop.f32.mrf.mxu0
        %v624 = vadd.f32 %v428, %v623
        %625 = vmatmul.bf16.gmra.mxu0 %v373
        %v626 = vpop.f32.mrf.mxu0
        %v627 = vadd.f32 %v428, %v626
        %v628 = vpop.f32.mrf.mxu0
        %v629 = vadd.f32 %v428, %v628
        %630 = vmatmul.bf16.gmra.mxu0 %v374
        %v631 = vpop.f32.mrf.mxu0
        %v632 = vadd.f32 %v428, %v631
        %v633 = vpop.f32.mrf.mxu0
        %v634 = vadd.f32 %v428, %v633
        %635 = vmatmul.bf16.gmra.mxu0 %v375
        %v636 = vpop.f32.mrf.mxu0
        %v637 = vadd.f32 %v428, %v636
        %v638 = vpop.f32.mrf.mxu0
        %v639 = vadd.f32 %v428, %v638
        %640 = vmatmul.bf16.gmra.mxu0 %v376
        %v641 = vpop.f32.mrf.mxu0
        %v642 = vadd.f32 %v428, %v641
        %v643 = vpop.f32.mrf.mxu0
        %v644 = vadd.f32 %v428, %v643
        %645 = vmatmul.bf16.gmra.mxu0 %v377
        %v646 = vpop.f32.mrf.mxu0
        %v647 = vadd.f32 %v428, %v646
        %v648 = vpop.f32.mrf.mxu0
        %v649 = vadd.f32 %v428, %v648
        %650 = vmatmul.bf16.gmra.mxu0 %v378
        %v651 = vpop.f32.mrf.mxu0
        %v652 = vadd.f32 %v428, %v651
        %v653 = vpop.f32.mrf.mxu0
        %v654 = vadd.f32 %v428, %v653
        %655 = vmatmul.bf16.gmra.mxu0 %v379
        %v656 = vpop.f32.mrf.mxu0
        %v657 = vadd.f32 %v428, %v656
        %v658 = vpop.f32.mrf.mxu0
        %v659 = vadd.f32 %v428, %v658
        %660 = vmatmul.bf16.gmra.mxu0 %v380
        %v661 = vpop.f32.mrf.mxu0
        %v662 = vadd.f32 %v428, %v661
        %v663 = vpop.f32.mrf.mxu0
        %v664 = vadd.f32 %v428, %v663
        %665 = vmatmul.bf16.gmra.mxu0 %v381
        %v666 = vpop.f32.mrf.mxu0
        %v667 = vadd.f32 %v428, %v666
        %v668 = vpop.f32.mrf.mxu0
        %v669 = vadd.f32 %v428, %v668
        %670 = vmatmul.bf16.gmra.mxu0 %v382
        %v671 = vpop.f32.mrf.mxu0
        %v672 = vadd.f32 %v428, %v671
        %v673 = vpop.f32.mrf.mxu0
        %v674 = vadd.f32 %v428, %v673
        %675 = vmatmul.bf16.gmra.mxu0 %v383
        %v676 = vpop.f32.mrf.mxu0
        %v677 = vadd.f32 %v428, %v676
        %v678 = vpop.f32.mrf.mxu0
        %v679 = vadd.f32 %v428, %v678
        %680 = vmatmul.bf16.gmra.mxu0 %v384
        %v681 = vpop.f32.mrf.mxu0
        %v682 = vadd.f32 %v428, %v681
        %v683 = vpop.f32.mrf.mxu0
        %v684 = vadd.f32 %v428, %v683
        %685 = vmatmul.bf16.gmra.mxu0 %v385
        %v686 = vpop.f32.mrf.mxu0
        %v687 = vadd.f32 %v428, %v686
        %v688 = vpop.f32.mrf.mxu0
        %v689 = vadd.f32 %v428, %v688
        %690 = vmatmul.bf16.gmra.mxu0 %v386
        %v691 = vpop.f32.mrf.mxu0
        %v692 = vadd.f32 %v428, %v691
        %v693 = vpop.f32.mrf.mxu0
        %v694 = vadd.f32 %v428, %v693
        %695 = vmatmul.bf16.gmra.mxu0 %v387
        %v696 = vpop.f32.mrf.mxu0
        %v697 = vadd.f32 %v428, %v696
        %v698 = vpop.f32.mrf.mxu0
        %v699 = vadd.f32 %v428, %v698
        %700 = vmatmul.bf16.gmra.mxu0 %v388
        %v701 = vpop.f32.mrf.mxu0
        %v702 = vadd.f32 %v428, %v701
        %v703 = vpop.f32.mrf.mxu0
        %v704 = vadd.f32 %v428, %v703
        %705 = vmatmul.bf16.gmra.mxu0 %v389
        %v706 = vpop.f32.mrf.mxu0
        %v707 = vadd.f32 %v428, %v706
        %v708 = vpop.f32.mrf.mxu0
        %v709 = vadd.f32 %v428, %v708
        %710 = vmatmul.bf16.gmra.mxu0 %v390
        %v711 = vpop.f32.mrf.mxu0
        %v712 = vadd.f32 %v428, %v711
        %v713 = vpop.f32.mrf.mxu0
        %v714 = vadd.f32 %v428, %v713
        %715 = vmatmul.bf16.gmra.mxu0 %v391
        %v716 = vpop.f32.mrf.mxu0
        %v717 = vadd.f32 %v428, %v716
        %v718 = vpop.f32.mrf.mxu0
        %v719 = vadd.f32 %v428, %v718
        %720 = vmatmul.bf16.gmra.mxu0 %v392
        %v721 = vpop.f32.mrf.mxu0
        %v722 = vadd.f32 %v428, %v721
        %v723 = vpop.f32.mrf.mxu0
        %v724 = vadd.f32 %v428, %v723
        %725 = vmatmul.bf16.gmra.mxu0 %v393
        %v726 = vpop.f32.mrf.mxu0
        %v727 = vadd.f32 %v428, %v726
        %v728 = vpop.f32.mrf.mxu0
        %v729 = vadd.f32 %v428, %v728
        %730 = vdwg.mxu0
        %731 = vmatpush.bf16.msra.mxu0 %v536
        %732 = vmatpush.bf16.msra.mxu0 %v533
        %733 = vmatpush.bf16.msra.mxu0 %v530
        %734 = vmatpush.bf16.msra.mxu0 %v527
        %735 = vmatpush.bf16.msra.mxu0 %v524
        %736 = vmatpush.bf16.msra.mxu0 %v521
        %737 = vmatpush.bf16.msra.mxu0 %v518
        %738 = vmatpush.bf16.msra.mxu0 %v515
        %739 = vmatmul.bf16.gmra.mxu0 %v362
        %v740 = vpop.f32.mrf.mxu0
        %v741 = vadd.f32 %v429, %v740
        %v742 = vpop.f32.mrf.mxu0
        %v743 = vadd.f32 %v429, %v742
        %744 = vmatmul.bf16.gmra.mxu0 %v363
        %v745 = vpop.f32.mrf.mxu0
        %v746 = vadd.f32 %v429, %v745
        %v747 = vpop.f32.mrf.mxu0
        %v748 = vadd.f32 %v429, %v747
        %749 = vmatmul.bf16.gmra.mxu0 %v364
        %v750 = vpop.f32.mrf.mxu0
        %v751 = vadd.f32 %v429, %v750
        %v752 = vpop.f32.mrf.mxu0
        %v753 = vadd.f32 %v429, %v752
        %754 = vmatmul.bf16.gmra.mxu0 %v365
        %v755 = vpop.f32.mrf.mxu0
        %v756 = vadd.f32 %v429, %v755
        %v757 = vpop.f32.mrf.mxu0
        %v758 = vadd.f32 %v429, %v757
        %759 = vmatmul.bf16.gmra.mxu0 %v366
        %v760 = vpop.f32.mrf.mxu0
        %v761 = vadd.f32 %v429, %v760
        %v762 = vpop.f32.mrf.mxu0
        %v763 = vadd.f32 %v429, %v762
        %764 = vmatmul.bf16.gmra.mxu0 %v367
        %v765 = vpop.f32.mrf.mxu0
        %v766 = vadd.f32 %v429, %v765
        %v767 = vpop.f32.mrf.mxu0
        %v768 = vadd.f32 %v429, %v767
        %769 = vmatmul.bf16.gmra.mxu0 %v368
        %v770 = vpop.f32.mrf.mxu0
        %v771 = vadd.f32 %v429, %v770
        %v772 = vpop.f32.mrf.mxu0
        %v773 = vadd.f32 %v429, %v772
        %774 = vmatmul.bf16.gmra.mxu0 %v369
        %v775 = vpop.f32.mrf.mxu0
        %v776 = vadd.f32 %v429, %v775
        %v777 = vpop.f32.mrf.mxu0
        %v778 = vadd.f32 %v429, %v777
        %779 = vmatmul.bf16.gmra.mxu0 %v370
        %v780 = vpop.f32.mrf.mxu0
        %v781 = vadd.f32 %v429, %v780
        %v782 = vpop.f32.mrf.mxu0
        %v783 = vadd.f32 %v429, %v782
        %784 = vmatmul.bf16.gmra.mxu0 %v371
        %v785 = vpop.f32.mrf.mxu0
        %v786 = vadd.f32 %v429, %v785
        %v787 = vpop.f32.mrf.mxu0
        %v788 = vadd.f32 %v429, %v787
        %789 = vmatmul.bf16.gmra.mxu0 %v372
        %v790 = vpop.f32.mrf.mxu0
        %v791 = vadd.f32 %v429, %v790
        %v792 = vpop.f32.mrf.mxu0
        %v793 = vadd.f32 %v429, %v792
        %794 = vmatmul.bf16.gmra.mxu0 %v373
        %v795 = vpop.f32.mrf.mxu0
        %v796 = vadd.f32 %v429, %v795
        %v797 = vpop.f32.mrf.mxu0
        %v798 = vadd.f32 %v429, %v797
        %799 = vmatmul.bf16.gmra.mxu0 %v374
        %v800 = vpop.f32.mrf.mxu0
        %v801 = vadd.f32 %v429, %v800
        %v802 = vpop.f32.mrf.mxu0
        %v803 = vadd.f32 %v429, %v802
        %804 = vmatmul.bf16.gmra.mxu0 %v375
        %v805 = vpop.f32.mrf.mxu0
        %v806 = vadd.f32 %v429, %v805
        %v807 = vpop.f32.mrf.mxu0
        %v808 = vadd.f32 %v429, %v807
        %809 = vmatmul.bf16.gmra.mxu0 %v376
        %v810 = vpop.f32.mrf.mxu0
        %v811 = vadd.f32 %v429, %v810
        %v812 = vpop.f32.mrf.mxu0
        %v813 = vadd.f32 %v429, %v812
        %814 = vmatmul.bf16.gmra.mxu0 %v377
        %v815 = vpop.f32.mrf.mxu0
        %v816 = vadd.f32 %v429, %v815
        %v817 = vpop.f32.mrf.mxu0
        %v818 = vadd.f32 %v429, %v817
        %819 = vmatmul.bf16.gmra.mxu0 %v378
        %v820 = vpop.f32.mrf.mxu0
        %v821 = vadd.f32 %v429, %v820
        %v822 = vpop.f32.mrf.mxu0
        %v823 = vadd.f32 %v429, %v822
        %824 = vmatmul.bf16.gmra.mxu0 %v379
        %v825 = vpop.f32.mrf.mxu0
        %v826 = vadd.f32 %v429, %v825
        %v827 = vpop.f32.mrf.mxu0
        %v828 = vadd.f32 %v429, %v827
        %829 = vmatmul.bf16.gmra.mxu0 %v380
        %v830 = vpop.f32.mrf.mxu0
        %v831 = vadd.f32 %v429, %v830
        %v832 = vpop.f32.mrf.mxu0
        %v833 = vadd.f32 %v429, %v832
        %834 = vmatmul.bf16.gmra.mxu0 %v381
        %v835 = vpop.f32.mrf.mxu0
        %v836 = vadd.f32 %v429, %v835
        %v837 = vpop.f32.mrf.mxu0
        %v838 = vadd.f32 %v429, %v837
        %839 = vmatmul.bf16.gmra.mxu0 %v382
        %v840 = vpop.f32.mrf.mxu0
        %v841 = vadd.f32 %v429, %v840
        %v842 = vpop.f32.mrf.mxu0
        %v843 = vadd.f32 %v429, %v842
        %844 = vmatmul.bf16.gmra.mxu0 %v383
        %v845 = vpop.f32.mrf.mxu0
        %v846 = vadd.f32 %v429, %v845
        %v847 = vpop.f32.mrf.mxu0
        %v848 = vadd.f32 %v429, %v847
        %849 = vmatmul.bf16.gmra.mxu0 %v384
        %v850 = vpop.f32.mrf.mxu0
        %v851 = vadd.f32 %v429, %v850
        %v852 = vpop.f32.mrf.mxu0
        %v853 = vadd.f32 %v429, %v852
        %854 = vmatmul.bf16.gmra.mxu0 %v385
        %v855 = vpop.f32.mrf.mxu0
        %v856 = vadd.f32 %v429, %v855
        %v857 = vpop.f32.mrf.mxu0
        %v858 = vadd.f32 %v429, %v857
        %859 = vmatmul.bf16.gmra.mxu0 %v386
        %v860 = vpop.f32.mrf.mxu0
        %v861 = vadd.f32 %v429, %v860
        %v862 = vpop.f32.mrf.mxu0
        %v863 = vadd.f32 %v429, %v862
        %864 = vmatmul.bf16.gmra.mxu0 %v387
        %v865 = vpop.f32.mrf.mxu0
        %v866 = vadd.f32 %v429, %v865
        %v867 = vpop.f32.mrf.mxu0
        %v868 = vadd.f32 %v429, %v867
        %869 = vmatmul.bf16.gmra.mxu0 %v388
        %v870 = vpop.f32.mrf.mxu0
        %v871 = vadd.f32 %v429, %v870
        %v872 = vpop.f32.mrf.mxu0
        %v873 = vadd.f32 %v429, %v872
        %874 = vmatmul.bf16.gmra.mxu0 %v389
        %v875 = vpop.f32.mrf.mxu0
        %v876 = vadd.f32 %v429, %v875
        %v877 = vpop.f32.mrf.mxu0
        %v878 = vadd.f32 %v429, %v877
        %879 = vmatmul.bf16.gmra.mxu0 %v390
        %v880 = vpop.f32.mrf.mxu0
        %v881 = vadd.f32 %v429, %v880
        %v882 = vpop.f32.mrf.mxu0
        %v883 = vadd.f32 %v429, %v882
        %884 = vmatmul.bf16.gmra.mxu0 %v391
        %v885 = vpop.f32.mrf.mxu0
        %v886 = vadd.f32 %v429, %v885
        %v887 = vpop.f32.mrf.mxu0
        %v888 = vadd.f32 %v429, %v887
        %889 = vmatmul.bf16.gmra.mxu0 %v392
        %v890 = vpop.f32.mrf.mxu0
        %v891 = vadd.f32 %v429, %v890
        %v892 = vpop.f32.mrf.mxu0
        %v893 = vadd.f32 %v429, %v892
        %894 = vmatmul.bf16.gmra.mxu0 %v393
        %v895 = vpop.f32.mrf.mxu0
        %v896 = vadd.f32 %v429, %v895
        %v897 = vpop.f32.mrf.mxu0
        %v898 = vadd.f32 %v429, %v897
        %899 = vdwg.mxu0
        %900 = vmatpush.bf16.msra.mxu0 %v537
        %901 = vmatpush.bf16.msra.mxu0 %v534
        %902 = vmatpush.bf16.msra.mxu0 %v531
        %903 = vmatpush.bf16.msra.mxu0 %v528
        %904 = vmatpush.bf16.msra.mxu0 %v525
        %905 = vmatpush.bf16.msra.mxu0 %v522
        %906 = vmatpush.bf16.msra.mxu0 %v519
        %907 = vmatpush.bf16.msra.mxu0 %v516
        %908 = vmatmul.bf16.gmra.mxu0 %v362
        %v909 = vpop.f32.mrf.mxu0
        %v910 = vadd.f32 %v430, %v909
        %v911 = vpop.f32.mrf.mxu0
        %v912 = vadd.f32 %v430, %v911
        %913 = vmatmul.bf16.gmra.mxu0 %v363
        %v914 = vpop.f32.mrf.mxu0
        %v915 = vadd.f32 %v430, %v914
        %v916 = vpop.f32.mrf.mxu0
        %v917 = vadd.f32 %v430, %v916
        %918 = vmatmul.bf16.gmra.mxu0 %v364
        %v919 = vpop.f32.mrf.mxu0
        %v920 = vadd.f32 %v430, %v919
        %v921 = vpop.f32.mrf.mxu0
        %v922 = vadd.f32 %v430, %v921
        %923 = vmatmul.bf16.gmra.mxu0 %v365
        %v924 = vpop.f32.mrf.mxu0
        %v925 = vadd.f32 %v430, %v924
        %v926 = vpop.f32.mrf.mxu0
        %v927 = vadd.f32 %v430, %v926
        %928 = vmatmul.bf16.gmra.mxu0 %v366
        %v929 = vpop.f32.mrf.mxu0
        %v930 = vadd.f32 %v430, %v929
        %v931 = vpop.f32.mrf.mxu0
        %v932 = vadd.f32 %v430, %v931
        %933 = vmatmul.bf16.gmra.mxu0 %v367
        %v934 = vpop.f32.mrf.mxu0
        %v935 = vadd.f32 %v430, %v934
        %v936 = vpop.f32.mrf.mxu0
        %v937 = vadd.f32 %v430, %v936
        %938 = vmatmul.bf16.gmra.mxu0 %v368
        %v939 = vpop.f32.mrf.mxu0
        %v940 = vadd.f32 %v430, %v939
        %v941 = vpop.f32.mrf.mxu0
        %v942 = vadd.f32 %v430, %v941
        %943 = vmatmul.bf16.gmra.mxu0 %v369
        %v944 = vpop.f32.mrf.mxu0
        %v945 = vadd.f32 %v430, %v944
        %v946 = vpop.f32.mrf.mxu0
        %v947 = vadd.f32 %v430, %v946
        %948 = vmatmul.bf16.gmra.mxu0 %v370
        %v949 = vpop.f32.mrf.mxu0
        %v950 = vadd.f32 %v430, %v949
        %v951 = vpop.f32.mrf.mxu0
        %v952 = vadd.f32 %v430, %v951
        %953 = vmatmul.bf16.gmra.mxu0 %v371
        %v954 = vpop.f32.mrf.mxu0
        %v955 = vadd.f32 %v430, %v954
        %v956 = vpop.f32.mrf.mxu0
        %v957 = vadd.f32 %v430, %v956
        %958 = vmatmul.bf16.gmra.mxu0 %v372
        %v959 = vpop.f32.mrf.mxu0
        %v960 = vadd.f32 %v430, %v959
        %v961 = vpop.f32.mrf.mxu0
        %v962 = vadd.f32 %v430, %v961
        %963 = vmatmul.bf16.gmra.mxu0 %v373
        %v964 = vpop.f32.mrf.mxu0
        %v965 = vadd.f32 %v430, %v964
        %v966 = vpop.f32.mrf.mxu0
        %v967 = vadd.f32 %v430, %v966
        %968 = vmatmul.bf16.gmra.mxu0 %v374
        %v969 = vpop.f32.mrf.mxu0
        %v970 = vadd.f32 %v430, %v969
        %v971 = vpop.f32.mrf.mxu0
        %v972 = vadd.f32 %v430, %v971
        %973 = vmatmul.bf16.gmra.mxu0 %v375
        %v974 = vpop.f32.mrf.mxu0
        %v975 = vadd.f32 %v430, %v974
        %v976 = vpop.f32.mrf.mxu0
        %v977 = vadd.f32 %v430, %v976
        %978 = vmatmul.bf16.gmra.mxu0 %v376
        %v979 = vpop.f32.mrf.mxu0
        %v980 = vadd.f32 %v430, %v979
        %v981 = vpop.f32.mrf.mxu0
        %v982 = vadd.f32 %v430, %v981
        %983 = vmatmul.bf16.gmra.mxu0 %v377
        %v984 = vpop.f32.mrf.mxu0
        %v985 = vadd.f32 %v430, %v984
        %v986 = vpop.f32.mrf.mxu0
        %v987 = vadd.f32 %v430, %v986
        %988 = vmatmul.bf16.gmra.mxu0 %v378
        %v989 = vpop.f32.mrf.mxu0
        %v990 = vadd.f32 %v430, %v989
        %v991 = vpop.f32.mrf.mxu0
        %v992 = vadd.f32 %v430, %v991
        %993 = vmatmul.bf16.gmra.mxu0 %v379
        %v994 = vpop.f32.mrf.mxu0
        %v995 = vadd.f32 %v430, %v994
        %v996 = vpop.f32.mrf.mxu0
        %v997 = vadd.f32 %v430, %v996
        %998 = vmatmul.bf16.gmra.mxu0 %v380
        %v999 = vpop.f32.mrf.mxu0
        %v1000 = vadd.f32 %v430, %v999
        %v1001 = vpop.f32.mrf.mxu0
        %v1002 = vadd.f32 %v430, %v1001
        %1003 = vmatmul.bf16.gmra.mxu0 %v381
        %v1004 = vpop.f32.mrf.mxu0
        %v1005 = vadd.f32 %v430, %v1004
        %v1006 = vpop.f32.mrf.mxu0
        %v1007 = vadd.f32 %v430, %v1006
        %1008 = vmatmul.bf16.gmra.mxu0 %v382
        %v1009 = vpop.f32.mrf.mxu0
        %v1010 = vadd.f32 %v430, %v1009
        %v1011 = vpop.f32.mrf.mxu0
        %v1012 = vadd.f32 %v430, %v1011
        %1013 = vmatmul.bf16.gmra.mxu0 %v383
        %v1014 = vpop.f32.mrf.mxu0
        %v1015 = vadd.f32 %v430, %v1014
        %v1016 = vpop.f32.mrf.mxu0
        %v1017 = vadd.f32 %v430, %v1016
        %1018 = vmatmul.bf16.gmra.mxu0 %v384
        %v1019 = vpop.f32.mrf.mxu0
        %v1020 = vadd.f32 %v430, %v1019
        %v1021 = vpop.f32.mrf.mxu0
        %v1022 = vadd.f32 %v430, %v1021
        %1023 = vmatmul.bf16.gmra.mxu0 %v385
        %v1024 = vpop.f32.mrf.mxu0
        %v1025 = vadd.f32 %v430, %v1024
        %v1026 = vpop.f32.mrf.mxu0
        %v1027 = vadd.f32 %v430, %v1026
        %1028 = vmatmul.bf16.gmra.mxu0 %v386
        %v1029 = vpop.f32.mrf.mxu0
        %v1030 = vadd.f32 %v430, %v1029
        %v1031 = vpop.f32.mrf.mxu0
        %v1032 = vadd.f32 %v430, %v1031
        %1033 = vmatmul.bf16.gmra.mxu0 %v387
        %v1034 = vpop.f32.mrf.mxu0
        %v1035 = vadd.f32 %v430, %v1034
        %v1036 = vpop.f32.mrf.mxu0
        %v1037 = vadd.f32 %v430, %v1036
        %1038 = vmatmul.bf16.gmra.mxu0 %v388
        %v1039 = vpop.f32.mrf.mxu0
        %v1040 = vadd.f32 %v430, %v1039
        %v1041 = vpop.f32.mrf.mxu0
        %v1042 = vadd.f32 %v430, %v1041
        %1043 = vmatmul.bf16.gmra.mxu0 %v389
        %v1044 = vpop.f32.mrf.mxu0
        %v1045 = vadd.f32 %v430, %v1044
        %v1046 = vpop.f32.mrf.mxu0
        %v1047 = vadd.f32 %v430, %v1046
        %1048 = vmatmul.bf16.gmra.mxu0 %v390
        %v1049 = vpop.f32.mrf.mxu0
        %v1050 = vadd.f32 %v430, %v1049
        %v1051 = vpop.f32.mrf.mxu0
        %v1052 = vadd.f32 %v430, %v1051
        %1053 = vmatmul.bf16.gmra.mxu0 %v391
        %v1054 = vpop.f32.mrf.mxu0
        %v1055 = vadd.f32 %v430, %v1054
        %v1056 = vpop.f32.mrf.mxu0
        %v1057 = vadd.f32 %v430, %v1056
        %1058 = vmatmul.bf16.gmra.mxu0 %v392
        %v1059 = vpop.f32.mrf.mxu0
        %v1060 = vadd.f32 %v430, %v1059
        %v1061 = vpop.f32.mrf.mxu0
        %v1062 = vadd.f32 %v430, %v1061
        %1063 = vmatmul.bf16.gmra.mxu0 %v393
        %v1064 = vpop.f32.mrf.mxu0
        %v1065 = vadd.f32 %v430, %v1064
        %v1066 = vpop.f32.mrf.mxu0
        %v1067 = vadd.f32 %v430, %v1066
        %1068 = vdwg.mxu0
        %v1069 = vmul.f32 %v572, 0.088388346
        %v1070 = vmul.f32 %v574, 0.088388346
        %v1071 = vmul.f32 %v577, 0.088388346
        %v1072 = vmul.f32 %v579, 0.088388346
        %v1073 = vmul.f32 %v582, 0.088388346
        %v1074 = vmul.f32 %v584, 0.088388346
        %v1075 = vmul.f32 %v587, 0.088388346
        %v1076 = vmul.f32 %v589, 0.088388346
        %v1077 = vmul.f32 %v592, 0.088388346
        %v1078 = vmul.f32 %v594, 0.088388346
        %v1079 = vmul.f32 %v597, 0.088388346
        %v1080 = vmul.f32 %v599, 0.088388346
        %v1081 = vmul.f32 %v602, 0.088388346
        %v1082 = vmul.f32 %v604, 0.088388346
        %v1083 = vmul.f32 %v607, 0.088388346
        %v1084 = vmul.f32 %v609, 0.088388346
        %v1085 = vmul.f32 %v612, 0.088388346
        %v1086 = vmul.f32 %v614, 0.088388346
        %v1087 = vmul.f32 %v617, 0.088388346
        %v1088 = vmul.f32 %v619, 0.088388346
        %v1089 = vmul.f32 %v622, 0.088388346
        %v1090 = vmul.f32 %v624, 0.088388346
        %v1091 = vmul.f32 %v627, 0.088388346
        %v1092 = vmul.f32 %v629, 0.088388346
        %v1093 = vmul.f32 %v632, 0.088388346
        %v1094 = vmul.f32 %v634, 0.088388346
        %v1095 = vmul.f32 %v637, 0.088388346
        %v1096 = vmul.f32 %v639, 0.088388346
        %v1097 = vmul.f32 %v642, 0.088388346
        %v1098 = vmul.f32 %v644, 0.088388346
        %v1099 = vmul.f32 %v647, 0.088388346
        %v1100 = vmul.f32 %v649, 0.088388346
        %v1101 = vmul.f32 %v652, 0.088388346
        %v1102 = vmul.f32 %v654, 0.088388346
        %v1103 = vmul.f32 %v657, 0.088388346
        %v1104 = vmul.f32 %v659, 0.088388346
        %v1105 = vmul.f32 %v662, 0.088388346
        %v1106 = vmul.f32 %v664, 0.088388346
        %v1107 = vmul.f32 %v667, 0.088388346
        %v1108 = vmul.f32 %v669, 0.088388346
        %v1109 = vmul.f32 %v672, 0.088388346
        %v1110 = vmul.f32 %v674, 0.088388346
        %v1111 = vmul.f32 %v677, 0.088388346
        %v1112 = vmul.f32 %v679, 0.088388346
        %v1113 = vmul.f32 %v682, 0.088388346
        %v1114 = vmul.f32 %v684, 0.088388346
        %v1115 = vmul.f32 %v687, 0.088388346
        %v1116 = vmul.f32 %v689, 0.088388346
        %v1117 = vmul.f32 %v692, 0.088388346
        %v1118 = vmul.f32 %v694, 0.088388346
        %v1119 = vmul.f32 %v697, 0.088388346
        %v1120 = vmul.f32 %v699, 0.088388346
        %v1121 = vmul.f32 %v702, 0.088388346
        %v1122 = vmul.f32 %v704, 0.088388346
        %v1123 = vmul.f32 %v707, 0.088388346
        %v1124 = vmul.f32 %v709, 0.088388346
        %v1125 = vmul.f32 %v712, 0.088388346
        %v1126 = vmul.f32 %v714, 0.088388346
        %v1127 = vmul.f32 %v717, 0.088388346
        %v1128 = vmul.f32 %v719, 0.088388346
        %v1129 = vmul.f32 %v722, 0.088388346
        %v1130 = vmul.f32 %v724, 0.088388346
        %v1131 = vmul.f32 %v727, 0.088388346
        %v1132 = vmul.f32 %v729, 0.088388346
        %v1133 = vpack.c.bf16 %v1069, %v1069
        %v1134 = vpack.c.bf16 %v1070, %v1070
        %v1135 = vpack.c.bf16 %v1071, %v1071
        %v1136 = vpack.c.bf16 %v1072, %v1072
        %v1137 = vpack.c.bf16 %v1073, %v1073
        %v1138 = vpack.c.bf16 %v1074, %v1074
        %v1139 = vpack.c.bf16 %v1075, %v1075
        %v1140 = vpack.c.bf16 %v1076, %v1076
        %v1141 = vpack.c.bf16 %v1077, %v1077
        %v1142 = vpack.c.bf16 %v1078, %v1078
        %v1143 = vpack.c.bf16 %v1079, %v1079
        %v1144 = vpack.c.bf16 %v1080, %v1080
        %v1145 = vpack.c.bf16 %v1081, %v1081
        %v1146 = vpack.c.bf16 %v1082, %v1082
        %v1147 = vpack.c.bf16 %v1083, %v1083
        %v1148 = vpack.c.bf16 %v1084, %v1084
        %v1149 = vpack.c.bf16 %v1085, %v1085
        %v1150 = vpack.c.bf16 %v1086, %v1086
        %v1151 = vpack.c.bf16 %v1087, %v1087
        %v1152 = vpack.c.bf16 %v1088, %v1088
        %v1153 = vpack.c.bf16 %v1089, %v1089
        %v1154 = vpack.c.bf16 %v1090, %v1090
        %v1155 = vpack.c.bf16 %v1091, %v1091
        %v1156 = vpack.c.bf16 %v1092, %v1092
        %v1157 = vpack.c.bf16 %v1093, %v1093
        %v1158 = vpack.c.bf16 %v1094, %v1094
        %v1159 = vpack.c.bf16 %v1095, %v1095
        %v1160 = vpack.c.bf16 %v1096, %v1096
        %v1161 = vpack.c.bf16 %v1097, %v1097
        %v1162 = vpack.c.bf16 %v1098, %v1098
        %v1163 = vpack.c.bf16 %v1099, %v1099
        %v1164 = vpack.c.bf16 %v1100, %v1100
        %v1165 = vpack.c.bf16 %v1101, %v1101
        %v1166 = vpack.c.bf16 %v1102, %v1102
        %v1167 = vpack.c.bf16 %v1103, %v1103
        %v1168 = vpack.c.bf16 %v1104, %v1104
        %v1169 = vpack.c.bf16 %v1105, %v1105
        %v1170 = vpack.c.bf16 %v1106, %v1106
        %v1171 = vpack.c.bf16 %v1107, %v1107
        %v1172 = vpack.c.bf16 %v1108, %v1108
        %v1173 = vpack.c.bf16 %v1109, %v1109
        %v1174 = vpack.c.bf16 %v1110, %v1110
        %v1175 = vpack.c.bf16 %v1111, %v1111
        %v1176 = vpack.c.bf16 %v1112, %v1112
        %v1177 = vpack.c.bf16 %v1113, %v1113
        %v1178 = vpack.c.bf16 %v1114, %v1114
        %v1179 = vpack.c.bf16 %v1115, %v1115
        %v1180 = vpack.c.bf16 %v1116, %v1116
        %v1181 = vpack.c.bf16 %v1117, %v1117
        %v1182 = vpack.c.bf16 %v1118, %v1118
        %v1183 = vpack.c.bf16 %v1119, %v1119
        %v1184 = vpack.c.bf16 %v1120, %v1120
        %v1185 = vpack.c.bf16 %v1121, %v1121
        %v1186 = vpack.c.bf16 %v1122, %v1122
        %v1187 = vpack.c.bf16 %v1123, %v1123
        %v1188 = vpack.c.bf16 %v1124, %v1124
        %v1189 = vpack.c.bf16 %v1125, %v1125
        %v1190 = vpack.c.bf16 %v1126, %v1126
        %v1191 = vpack.c.bf16 %v1127, %v1127
        %v1192 = vpack.c.bf16 %v1128, %v1128
        %v1193 = vpack.c.bf16 %v1129, %v1129
        %v1194 = vpack.c.bf16 %v1130, %v1130
        %v1195 = vpack.c.bf16 %v1131, %v1131
        %v1196 = vpack.c.bf16 %v1132, %v1132
        %1197 = vst [vmem:[%s279] sm:$0xf] %v1133
        %1198 = vst [vmem:[%s279 + $0x4] sm:$0xf] %v1134
        %1199 = vst [vmem:[%s279 + $0x8] sm:$0xf] %v1135
        %1200 = vst [vmem:[%s279 + $0xc] sm:$0xf] %v1136
        %1201 = vst [vmem:[%s279 + $0x10] sm:$0xf] %v1137
        %1202 = vst [vmem:[%s279 + $0x14] sm:$0xf] %v1138
        %1203 = vst [vmem:[%s279 + $0x18] sm:$0xf] %v1139
        %1204 = vst [vmem:[%s279 + $0x1c] sm:$0xf] %v1140
        %1205 = vst [vmem:[%s279 + $0x20] sm:$0xf] %v1141
        %1206 = vst [vmem:[%s279 + $0x24] sm:$0xf] %v1142
        %1207 = vst [vmem:[%s279 + $0x28] sm:$0xf] %v1143
        %1208 = vst [vmem:[%s279 + $0x2c] sm:$0xf] %v1144
        %1209 = vst [vmem:[%s279 + $0x30] sm:$0xf] %v1145
        %1210 = vst [vmem:[%s279 + $0x34] sm:$0xf] %v1146
        %1211 = vst [vmem:[%s279 + $0x38] sm:$0xf] %v1147
        %1212 = vst [vmem:[%s279 + $0x3c] sm:$0xf] %v1148
        %1213 = vst [vmem:[%s279 + $0x40] sm:$0xf] %v1149
        %1214 = vst [vmem:[%s279 + $0x44] sm:$0xf] %v1150
        %1215 = vst [vmem:[%s279 + $0x48] sm:$0xf] %v1151
        %1216 = vst [vmem:[%s279 + $0x4c] sm:$0xf] %v1152
        %1217 = vst [vmem:[%s279 + $0x50] sm:$0xf] %v1153
        %1218 = vst [vmem:[%s279 + $0x54] sm:$0xf] %v1154
        %1219 = vst [vmem:[%s279 + $0x58] sm:$0xf] %v1155
        %1220 = vst [vmem:[%s279 + $0x5c] sm:$0xf] %v1156
        %1221 = vst [vmem:[%s279 + $0x60] sm:$0xf] %v1157
        %1222 = vst [vmem:[%s279 + $0x64] sm:$0xf] %v1158
        %1223 = vst [vmem:[%s279 + $0x68] sm:$0xf] %v1159
        %1224 = vst [vmem:[%s279 + $0x6c] sm:$0xf] %v1160
        %1225 = vst [vmem:[%s279 + $0x70] sm:$0xf] %v1161
        %1226 = vst [vmem:[%s279 + $0x74] sm:$0xf] %v1162
        %1227 = vst [vmem:[%s279 + $0x78] sm:$0xf] %v1163
        %1228 = vst [vmem:[%s279 + $0x7c] sm:$0xf] %v1164
        %1229 = vst [vmem:[%s279 + $0x80] sm:$0xf] %v1165
        %1230 = vst [vmem:[%s279 + $0x84] sm:$0xf] %v1166
        %1231 = vst [vmem:[%s279 + $0x88] sm:$0xf] %v1167
        %1232 = vst [vmem:[%s279 + $0x8c] sm:$0xf] %v1168
        %1233 = vst [vmem:[%s279 + $0x90] sm:$0xf] %v1169
        %1234 = vst [vmem:[%s279 + $0x94] sm:$0xf] %v1170
        %1235 = vst [vmem:[%s279 + $0x98] sm:$0xf] %v1171
        %1236 = vst [vmem:[%s279 + $0x9c] sm:$0xf] %v1172
        %1237 = vst [vmem:[%s279 + $0xa0] sm:$0xf] %v1173
        %1238 = vst [vmem:[%s279 + $0xa4] sm:$0xf] %v1174
        %1239 = vst [vmem:[%s279 + $0xa8] sm:$0xf] %v1175
        %1240 = vst [vmem:[%s279 + $0xac] sm:$0xf] %v1176
        %1241 = vst [vmem:[%s279 + $0xb0] sm:$0xf] %v1177
        %1242 = vst [vmem:[%s279 + $0xb4] sm:$0xf] %v1178
        %1243 = vst [vmem:[%s279 + $0xb8] sm:$0xf] %v1179
        %1244 = vst [vmem:[%s279 + $0xbc] sm:$0xf] %v1180
        %1245 = vst [vmem:[%s279 + $0xc0] sm:$0xf] %v1181
        %1246 = vst [vmem:[%s279 + $0xc4] sm:$0xf] %v1182
        %1247 = vst [vmem:[%s279 + $0xc8] sm:$0xf] %v1183
        %1248 = vst [vmem:[%s279 + $0xcc] sm:$0xf] %v1184
        %1249 = vst [vmem:[%s279 + $0xd0] sm:$0xf] %v1185
        %1250 = vst [vmem:[%s279 + $0xd4] sm:$0xf] %v1186
        %1251 = vst [vmem:[%s279 + $0xd8] sm:$0xf] %v1187
        %1252 = vst [vmem:[%s279 + $0xdc] sm:$0xf] %v1188
        %1253 = vst [vmem:[%s279 + $0xe0] sm:$0xf] %v1189
        %1254 = vst [vmem:[%s279 + $0xe4] sm:$0xf] %v1190
        %1255 = vst [vmem:[%s279 + $0xe8] sm:$0xf] %v1191
        %1256 = vst [vmem:[%s279 + $0xec] sm:$0xf] %v1192
        %1257 = vst [vmem:[%s279 + $0xf0] sm:$0xf] %v1193
        %1258 = vst [vmem:[%s279 + $0xf4] sm:$0xf] %v1194
        %1259 = vst [vmem:[%s279 + $0xf8] sm:$0xf] %v1195
        %1260 = vst [vmem:[%s279 + $0xfc] sm:$0xf] %v1196
        %v1261 = vpack.c.bf16 %v741, %v741
        %v1262 = vpack.c.bf16 %v743, %v743
        %v1263 = vpack.c.bf16 %v746, %v746
        %v1264 = vpack.c.bf16 %v748, %v748
        %v1265 = vpack.c.bf16 %v751, %v751
        %v1266 = vpack.c.bf16 %v753, %v753
        %v1267 = vpack.c.bf16 %v756, %v756
        %v1268 = vpack.c.bf16 %v758, %v758
        %v1269 = vpack.c.bf16 %v761, %v761
        %v1270 = vpack.c.bf16 %v763, %v763
        %v1271 = vpack.c.bf16 %v766, %v766
        %v1272 = vpack.c.bf16 %v768, %v768
        %v1273 = vpack.c.bf16 %v771, %v771
        %v1274 = vpack.c.bf16 %v773, %v773
        %v1275 = vpack.c.bf16 %v776, %v776
        %v1276 = vpack.c.bf16 %v778, %v778
        %v1277 = vpack.c.bf16 %v781, %v781
        %v1278 = vpack.c.bf16 %v783, %v783
        %v1279 = vpack.c.bf16 %v786, %v786
        %v1280 = vpack.c.bf16 %v788, %v788
        %v1281 = vpack.c.bf16 %v791, %v791
        %v1282 = vpack.c.bf16 %v793, %v793
        %v1283 = vpack.c.bf16 %v796, %v796
        %v1284 = vpack.c.bf16 %v798, %v798
        %v1285 = vpack.c.bf16 %v801, %v801
        %v1286 = vpack.c.bf16 %v803, %v803
        %v1287 = vpack.c.bf16 %v806, %v806
        %v1288 = vpack.c.bf16 %v808, %v808
        %v1289 = vpack.c.bf16 %v811, %v811
        %v1290 = vpack.c.bf16 %v813, %v813
        %v1291 = vpack.c.bf16 %v816, %v816
        %v1292 = vpack.c.bf16 %v818, %v818
        %v1293 = vpack.c.bf16 %v821, %v821
        %v1294 = vpack.c.bf16 %v823, %v823
        %v1295 = vpack.c.bf16 %v826, %v826
        %v1296 = vpack.c.bf16 %v828, %v828
        %v1297 = vpack.c.bf16 %v831, %v831
        %v1298 = vpack.c.bf16 %v833, %v833
        %v1299 = vpack.c.bf16 %v836, %v836
        %v1300 = vpack.c.bf16 %v838, %v838
        %v1301 = vpack.c.bf16 %v841, %v841
        %v1302 = vpack.c.bf16 %v843, %v843
        %v1303 = vpack.c.bf16 %v846, %v846
        %v1304 = vpack.c.bf16 %v848, %v848
        %v1305 = vpack.c.bf16 %v851, %v851
        %v1306 = vpack.c.bf16 %v853, %v853
        %v1307 = vpack.c.bf16 %v856, %v856
        %v1308 = vpack.c.bf16 %v858, %v858
        %v1309 = vpack.c.bf16 %v861, %v861
        %v1310 = vpack.c.bf16 %v863, %v863
        %v1311 = vpack.c.bf16 %v866, %v866
        %v1312 = vpack.c.bf16 %v868, %v868
        %v1313 = vpack.c.bf16 %v871, %v871
        %v1314 = vpack.c.bf16 %v873, %v873
        %v1315 = vpack.c.bf16 %v876, %v876
        %v1316 = vpack.c.bf16 %v878, %v878
        %v1317 = vpack.c.bf16 %v881, %v881
        %v1318 = vpack.c.bf16 %v883, %v883
        %v1319 = vpack.c.bf16 %v886, %v886
        %v1320 = vpack.c.bf16 %v888, %v888
        %v1321 = vpack.c.bf16 %v891, %v891
        %v1322 = vpack.c.bf16 %v893, %v893
        %v1323 = vpack.c.bf16 %v896, %v896
        %v1324 = vpack.c.bf16 %v898, %v898
        %1325 = vst [vmem:[%s286] sm:$0xf] %v1261
        %1326 = vst [vmem:[%s286 + $0x4] sm:$0xf] %v1262
        %1327 = vst [vmem:[%s286 + $0x8] sm:$0xf] %v1263
        %1328 = vst [vmem:[%s286 + $0xc] sm:$0xf] %v1264
        %1329 = vst [vmem:[%s286 + $0x10] sm:$0xf] %v1265
        %1330 = vst [vmem:[%s286 + $0x14] sm:$0xf] %v1266
        %1331 = vst [vmem:[%s286 + $0x18] sm:$0xf] %v1267
        %1332 = vst [vmem:[%s286 + $0x1c] sm:$0xf] %v1268
        %1333 = vst [vmem:[%s286 + $0x20] sm:$0xf] %v1269
        %1334 = vst [vmem:[%s286 + $0x24] sm:$0xf] %v1270
        %1335 = vst [vmem:[%s286 + $0x28] sm:$0xf] %v1271
        %1336 = vst [vmem:[%s286 + $0x2c] sm:$0xf] %v1272
        %1337 = vst [vmem:[%s286 + $0x30] sm:$0xf] %v1273
        %1338 = vst [vmem:[%s286 + $0x34] sm:$0xf] %v1274
        %1339 = vst [vmem:[%s286 + $0x38] sm:$0xf] %v1275
        %1340 = vst [vmem:[%s286 + $0x3c] sm:$0xf] %v1276
        %1341 = vst [vmem:[%s286 + $0x40] sm:$0xf] %v1277
        %1342 = vst [vmem:[%s286 + $0x44] sm:$0xf] %v1278
        %1343 = vst [vmem:[%s286 + $0x48] sm:$0xf] %v1279
        %1344 = vst [vmem:[%s286 + $0x4c] sm:$0xf] %v1280
        %1345 = vst [vmem:[%s286 + $0x50] sm:$0xf] %v1281
        %1346 = vst [vmem:[%s286 + $0x54] sm:$0xf] %v1282
        %1347 = vst [vmem:[%s286 + $0x58] sm:$0xf] %v1283
        %1348 = vst [vmem:[%s286 + $0x5c] sm:$0xf] %v1284
        %1349 = vst [vmem:[%s286 + $0x60] sm:$0xf] %v1285
        %1350 = vst [vmem:[%s286 + $0x64] sm:$0xf] %v1286
        %1351 = vst [vmem:[%s286 + $0x68] sm:$0xf] %v1287
        %1352 = vst [vmem:[%s286 + $0x6c] sm:$0xf] %v1288
        %1353 = vst [vmem:[%s286 + $0x70] sm:$0xf] %v1289
        %1354 = vst [vmem:[%s286 + $0x74] sm:$0xf] %v1290
        %1355 = vst [vmem:[%s286 + $0x78] sm:$0xf] %v1291
        %1356 = vst [vmem:[%s286 + $0x7c] sm:$0xf] %v1292
        %1357 = vst [vmem:[%s286 + $0x80] sm:$0xf] %v1293
        %1358 = vst [vmem:[%s286 + $0x84] sm:$0xf] %v1294
        %1359 = vst [vmem:[%s286 + $0x88] sm:$0xf] %v1295
        %1360 = vst [vmem:[%s286 + $0x8c] sm:$0xf] %v1296
        %1361 = vst [vmem:[%s286 + $0x90] sm:$0xf] %v1297
        %1362 = vst [vmem:[%s286 + $0x94] sm:$0xf] %v1298
        %1363 = vst [vmem:[%s286 + $0x98] sm:$0xf] %v1299
        %1364 = vst [vmem:[%s286 + $0x9c] sm:$0xf] %v1300
        %1365 = vst [vmem:[%s286 + $0xa0] sm:$0xf] %v1301
        %1366 = vst [vmem:[%s286 + $0xa4] sm:$0xf] %v1302
        %1367 = vst [vmem:[%s286 + $0xa8] sm:$0xf] %v1303
        %1368 = vst [vmem:[%s286 + $0xac] sm:$0xf] %v1304
        %1369 = vst [vmem:[%s286 + $0xb0] sm:$0xf] %v1305
        %1370 = vst [vmem:[%s286 + $0xb4] sm:$0xf] %v1306
        %1371 = vst [vmem:[%s286 + $0xb8] sm:$0xf] %v1307
        %1372 = vst [vmem:[%s286 + $0xbc] sm:$0xf] %v1308
        %1373 = vst [vmem:[%s286 + $0xc0] sm:$0xf] %v1309
        %1374 = vst [vmem:[%s286 + $0xc4] sm:$0xf] %v1310
        %1375 = vst [vmem:[%s286 + $0xc8] sm:$0xf] %v1311
        %1376 = vst [vmem:[%s286 + $0xcc] sm:$0xf] %v1312
        %1377 = vst [vmem:[%s286 + $0xd0] sm:$0xf] %v1313
        %1378 = vst [vmem:[%s286 + $0xd4] sm:$0xf] %v1314
        %1379 = vst [vmem:[%s286 + $0xd8] sm:$0xf] %v1315
        %1380 = vst [vmem:[%s286 + $0xdc] sm:$0xf] %v1316
        %1381 = vst [vmem:[%s286 + $0xe0] sm:$0xf] %v1317
        %1382 = vst [vmem:[%s286 + $0xe4] sm:$0xf] %v1318
        %1383 = vst [vmem:[%s286 + $0xe8] sm:$0xf] %v1319
        %1384 = vst [vmem:[%s286 + $0xec] sm:$0xf] %v1320
        %1385 = vst [vmem:[%s286 + $0xf0] sm:$0xf] %v1321
        %1386 = vst [vmem:[%s286 + $0xf4] sm:$0xf] %v1322
        %1387 = vst [vmem:[%s286 + $0xf8] sm:$0xf] %v1323
        %1388 = vst [vmem:[%s286 + $0xfc] sm:$0xf] %v1324
        %v1389 = vpack.c.bf16 %v910, %v910
        %v1390 = vpack.c.bf16 %v912, %v912
        %v1391 = vpack.c.bf16 %v915, %v915
        %v1392 = vpack.c.bf16 %v917, %v917
        %v1393 = vpack.c.bf16 %v920, %v920
        %v1394 = vpack.c.bf16 %v922, %v922
        %v1395 = vpack.c.bf16 %v925, %v925
        %v1396 = vpack.c.bf16 %v927, %v927
        %v1397 = vpack.c.bf16 %v930, %v930
        %v1398 = vpack.c.bf16 %v932, %v932
        %v1399 = vpack.c.bf16 %v935, %v935
        %v1400 = vpack.c.bf16 %v937, %v937
        %v1401 = vpack.c.bf16 %v940, %v940
        %v1402 = vpack.c.bf16 %v942, %v942
        %v1403 = vpack.c.bf16 %v945, %v945
        %v1404 = vpack.c.bf16 %v947, %v947
        %v1405 = vpack.c.bf16 %v950, %v950
        %v1406 = vpack.c.bf16 %v952, %v952
        %v1407 = vpack.c.bf16 %v955, %v955
        %v1408 = vpack.c.bf16 %v957, %v957
        %v1409 = vpack.c.bf16 %v960, %v960
        %v1410 = vpack.c.bf16 %v962, %v962
        %v1411 = vpack.c.bf16 %v965, %v965
        %v1412 = vpack.c.bf16 %v967, %v967
        %v1413 = vpack.c.bf16 %v970, %v970
        %v1414 = vpack.c.bf16 %v972, %v972
        %v1415 = vpack.c.bf16 %v975, %v975
        %v1416 = vpack.c.bf16 %v977, %v977
        %v1417 = vpack.c.bf16 %v980, %v980
        %v1418 = vpack.c.bf16 %v982, %v982
        %v1419 = vpack.c.bf16 %v985, %v985
        %v1420 = vpack.c.bf16 %v987, %v987
        %v1421 = vpack.c.bf16 %v990, %v990
        %v1422 = vpack.c.bf16 %v992, %v992
        %v1423 = vpack.c.bf16 %v995, %v995
        %v1424 = vpack.c.bf16 %v997, %v997
        %v1425 = vpack.c.bf16 %v1000, %v1000
        %v1426 = vpack.c.bf16 %v1002, %v1002
        %v1427 = vpack.c.bf16 %v1005, %v1005
        %v1428 = vpack.c.bf16 %v1007, %v1007
        %v1429 = vpack.c.bf16 %v1010, %v1010
        %v1430 = vpack.c.bf16 %v1012, %v1012
        %v1431 = vpack.c.bf16 %v1015, %v1015
        %v1432 = vpack.c.bf16 %v1017, %v1017
        %v1433 = vpack.c.bf16 %v1020, %v1020
        %v1434 = vpack.c.bf16 %v1022, %v1022
        %v1435 = vpack.c.bf16 %v1025, %v1025
        %v1436 = vpack.c.bf16 %v1027, %v1027
        %v1437 = vpack.c.bf16 %v1030, %v1030
        %v1438 = vpack.c.bf16 %v1032, %v1032
        %v1439 = vpack.c.bf16 %v1035, %v1035
        %v1440 = vpack.c.bf16 %v1037, %v1037
        %v1441 = vpack.c.bf16 %v1040, %v1040
        %v1442 = vpack.c.bf16 %v1042, %v1042
        %v1443 = vpack.c.bf16 %v1045, %v1045
        %v1444 = vpack.c.bf16 %v1047, %v1047
        %v1445 = vpack.c.bf16 %v1050, %v1050
        %v1446 = vpack.c.bf16 %v1052, %v1052
        %v1447 = vpack.c.bf16 %v1055, %v1055
        %v1448 = vpack.c.bf16 %v1057, %v1057
        %v1449 = vpack.c.bf16 %v1060, %v1060
        %v1450 = vpack.c.bf16 %v1062, %v1062
        %v1451 = vpack.c.bf16 %v1065, %v1065
        %v1452 = vpack.c.bf16 %v1067, %v1067
        %1453 = vst [vmem:[%s293] sm:$0xf] %v1389
        %1454 = vst [vmem:[%s293 + $0x4] sm:$0xf] %v1390
        %1455 = vst [vmem:[%s293 + $0x8] sm:$0xf] %v1391
        %1456 = vst [vmem:[%s293 + $0xc] sm:$0xf] %v1392
        %1457 = vst [vmem:[%s293 + $0x10] sm:$0xf] %v1393
        %1458 = vst [vmem:[%s293 + $0x14] sm:$0xf] %v1394
        %1459 = vst [vmem:[%s293 + $0x18] sm:$0xf] %v1395
        %1460 = vst [vmem:[%s293 + $0x1c] sm:$0xf] %v1396
        %1461 = vst [vmem:[%s293 + $0x20] sm:$0xf] %v1397
        %1462 = vst [vmem:[%s293 + $0x24] sm:$0xf] %v1398
        %1463 = vst [vmem:[%s293 + $0x28] sm:$0xf] %v1399
        %1464 = vst [vmem:[%s293 + $0x2c] sm:$0xf] %v1400
        %1465 = vst [vmem:[%s293 + $0x30] sm:$0xf] %v1401
        %1466 = vst [vmem:[%s293 + $0x34] sm:$0xf] %v1402
        %1467 = vst [vmem:[%s293 + $0x38] sm:$0xf] %v1403
        %1468 = vst [vmem:[%s293 + $0x3c] sm:$0xf] %v1404
        %1469 = vst [vmem:[%s293 + $0x40] sm:$0xf] %v1405
        %1470 = vst [vmem:[%s293 + $0x44] sm:$0xf] %v1406
        %1471 = vst [vmem:[%s293 + $0x48] sm:$0xf] %v1407
        %1472 = vst [vmem:[%s293 + $0x4c] sm:$0xf] %v1408
        %1473 = vst [vmem:[%s293 + $0x50] sm:$0xf] %v1409
        %1474 = vst [vmem:[%s293 + $0x54] sm:$0xf] %v1410
        %1475 = vst [vmem:[%s293 + $0x58] sm:$0xf] %v1411
        %1476 = vst [vmem:[%s293 + $0x5c] sm:$0xf] %v1412
        %1477 = vst [vmem:[%s293 + $0x60] sm:$0xf] %v1413
        %1478 = vst [vmem:[%s293 + $0x64] sm:$0xf] %v1414
        %1479 = vst [vmem:[%s293 + $0x68] sm:$0xf] %v1415
        %1480 = vst [vmem:[%s293 + $0x6c] sm:$0xf] %v1416
        %1481 = vst [vmem:[%s293 + $0x70] sm:$0xf] %v1417
        %1482 = vst [vmem:[%s293 + $0x74] sm:$0xf] %v1418
        %1483 = vst [vmem:[%s293 + $0x78] sm:$0xf] %v1419
        %1484 = vst [vmem:[%s293 + $0x7c] sm:$0xf] %v1420
        %1485 = vst [vmem:[%s293 + $0x80] sm:$0xf] %v1421
        %1486 = vst [vmem:[%s293 + $0x84] sm:$0xf] %v1422
        %1487 = vst [vmem:[%s293 + $0x88] sm:$0xf] %v1423
        %1488 = vst [vmem:[%s293 + $0x8c] sm:$0xf] %v1424
        %1489 = vst [vmem:[%s293 + $0x90] sm:$0xf] %v1425
        %1490 = vst [vmem:[%s293 + $0x94] sm:$0xf] %v1426
        %1491 = vst [vmem:[%s293 + $0x98] sm:$0xf] %v1427
        %1492 = vst [vmem:[%s293 + $0x9c] sm:$0xf] %v1428
        %1493 = vst [vmem:[%s293 + $0xa0] sm:$0xf] %v1429
        %1494 = vst [vmem:[%s293 + $0xa4] sm:$0xf] %v1430
        %1495 = vst [vmem:[%s293 + $0xa8] sm:$0xf] %v1431
        %1496 = vst [vmem:[%s293 + $0xac] sm:$0xf] %v1432
        %1497 = vst [vmem:[%s293 + $0xb0] sm:$0xf] %v1433
        %1498 = vst [vmem:[%s293 + $0xb4] sm:$0xf] %v1434
        %1499 = vst [vmem:[%s293 + $0xb8] sm:$0xf] %v1435
        %1500 = vst [vmem:[%s293 + $0xbc] sm:$0xf] %v1436
        %1501 = vst [vmem:[%s293 + $0xc0] sm:$0xf] %v1437
        %1502 = vst [vmem:[%s293 + $0xc4] sm:$0xf] %v1438
        %1503 = vst [vmem:[%s293 + $0xc8] sm:$0xf] %v1439
        %1504 = vst [vmem:[%s293 + $0xcc] sm:$0xf] %v1440
        %1505 = vst [vmem:[%s293 + $0xd0] sm:$0xf] %v1441
        %1506 = vst [vmem:[%s293 + $0xd4] sm:$0xf] %v1442
        %1507 = vst [vmem:[%s293 + $0xd8] sm:$0xf] %v1443
        %1508 = vst [vmem:[%s293 + $0xdc] sm:$0xf] %v1444
        %1509 = vst [vmem:[%s293 + $0xe0] sm:$0xf] %v1445
        %1510 = vst [vmem:[%s293 + $0xe4] sm:$0xf] %v1446
        %1511 = vst [vmem:[%s293 + $0xe8] sm:$0xf] %v1447
        %1512 = vst [vmem:[%s293 + $0xec] sm:$0xf] %v1448
        %1513 = vst [vmem:[%s293 + $0xf0] sm:$0xf] %v1449
        %1514 = vst [vmem:[%s293 + $0xf4] sm:$0xf] %v1450
        %1515 = vst [vmem:[%s293 + $0xf8] sm:$0xf] %v1451
        %1516 = vst [vmem:[%s293 + $0xfc] sm:$0xf] %v1452
        %s1517 = sand.u32 %s103, 1
        %s1518 = scalar_lea.sflag [#allocation4], %s1517
        %s1519 = sand.u32 %s103, 1
        %s1520 = smul.addr %s1519, 256
        %s1521 = scalar_lea.vmem [#allocation8], %s1520
        %s1522 = sand.u32 %s27, 1
        %s1523 = scalar_lea.sflag [#allocation10], %s1522
        %s1524 = sand.u32 %s129, 1
        %s1525 = smul.addr %s1524, 256
        %s1526 = scalar_lea.vmem [#allocation9], %s1525
        %s1527 = sand.u32 %s27, 1
        %s1528 = scalar_lea.sflag [#allocation10], %s1527
        %s1529 = sand.u32 %s155, 1
        %s1530 = smul.addr %s1529, 256
        %s1531 = scalar_lea.vmem [#allocation11], %s1530
        // Predicated region
        $region45: #{tpu_custom_call.1} parent=31 // pred_check
          %p1532 = pneg %p113
        $region46: #{tpu_custom_call.1} parent=31 // pred_check_branch
          %1534 = sbr.rel (%p1532) target = $region48
        $region47: #{tpu_custom_call.1} parent=31 // pred_region
          %s1535 = smul.u32 64, %s27
          %1537 = vsyncadd %s1518, 0
          %s1538 = smul.addr %s1535, 4
          %s1539 = scalar_lea.hbm %s3, %s1538
          %s1540 = sshll.u32 %s1521, 4
          %s1541 = int_to_ptr.vmem [resolvable:$true] %s1540
          %s1542 = sshll.u32 %s1539, 4
          %s1543 = int_to_ptr.hbm [resolvable:$true] %s1542
          %1548 = dma.vmem_to_hbm [thread:$0]  %s1541, 4096, %s1543, %s1518, 64, 64, 4
        $region48: #{tpu_custom_call.1} parent=31 // pred_fallthru
          _
        // Predicated region
        $region49: #{tpu_custom_call.1} parent=31 // pred_check
          %p1549 = pneg %p139
        $region50: #{tpu_custom_call.1} parent=31 // pred_check_branch
          %1551 = sbr.rel (%p1549) target = $region52
        $region51: #{tpu_custom_call.1} parent=31 // pred_region
          %s1552 = smul.u32 64, %s27
          %1554 = vsyncadd %s1523, 0
          %s1555 = smul.addr %s1552, 4
          %s1556 = scalar_lea.hbm %s4, %s1555
          %s1557 = sshll.u32 %s1526, 4
          %s1558 = int_to_ptr.vmem [resolvable:$true] %s1557
          %s1559 = sshll.u32 %s1556, 4
          %s1560 = int_to_ptr.hbm [resolvable:$true] %s1559
          %1565 = dma.vmem_to_hbm [thread:$0]  %s1558, 4096, %s1560, %s1523, 64, 64, 4
        $region52: #{tpu_custom_call.1} parent=31 // pred_fallthru
          _
        // Predicated region
        $region53: #{tpu_custom_call.1} parent=31 // pred_check
          %p1566 = pneg %p165
        $region54: #{tpu_custom_call.1} parent=31 // pred_check_branch
          %1568 = sbr.rel (%p1566) target = $region56
        $region55: #{tpu_custom_call.1} parent=31 // pred_region
          %s1569 = smul.u32 64, %s27
          %1571 = vsyncadd %s1528, 0
          %s1572 = smul.addr %s1569, 4
          %s1573 = scalar_lea.hbm %s5, %s1572
          %s1574 = sshll.u32 %s1531, 4
          %s1575 = int_to_ptr.vmem [resolvable:$true] %s1574
          %s1576 = sshll.u32 %s1573, 4
          %s1577 = int_to_ptr.hbm [resolvable:$true] %s1576
          %1582 = dma.vmem_to_hbm [thread:$0]  %s1575, 4096, %s1577, %s1528, 64, 64, 4
        $region56: #{tpu_custom_call.1} parent=31 // pred_fallthru
          _
      $region32: #{tpu_custom_call.1} parent=5 // pred_fallthru
        _
      %p1583 = scmp.le.s32.totalorder 2, %s22
      // Predicated region
      $region57: #{tpu_custom_call.1} parent=5 // pred_check
        %p1584 = pneg %p1583
      $region58: #{tpu_custom_call.1} parent=5 // pred_check_branch
        %1586 = sbr.rel (%p1584) target = $region60
      $region59: #{tpu_custom_call.1} parent=5 // pred_region
        %s1587 = ssub.s32 %s22, 2
        // Predicated region
        $region61: #{tpu_custom_call.1} parent=59 // pred_check
          %p1588 = pneg %p119
        $region62: #{tpu_custom_call.1} parent=59 // pred_check_branch
          %1590 = sbr.rel (%p1588) target = $region64
        $region63: #{tpu_custom_call.1} parent=59 // pred_region
          %s1591 = sand.u32 %s104, 1
          %s1592 = scalar_lea.sflag [#allocation4], %s1591
          %s1593 = sand.u32 %s104, 1
          %s1594 = smul.addr %s1593, 256
          %s1595 = scalar_lea.vmem [#allocation8], %s1594
          %1597 = dma.done %s1592, 4096
        $region64: #{tpu_custom_call.1} parent=59 // pred_fallthru
          _
        // Predicated region
        $region65: #{tpu_custom_call.1} parent=59 // pred_check
          %p1598 = pneg %p145
        $region66: #{tpu_custom_call.1} parent=59 // pred_check_branch
          %1600 = sbr.rel (%p1598) target = $region68
        $region67: #{tpu_custom_call.1} parent=59 // pred_region
          %s1601 = sand.u32 %s28, 1
          %s1602 = scalar_lea.sflag [#allocation10], %s1601
          %s1603 = sand.u32 %s130, 1
          %s1604 = smul.addr %s1603, 256
          %s1605 = scalar_lea.vmem [#allocation9], %s1604
          %1607 = dma.done %s1602, 4096
        $region68: #{tpu_custom_call.1} parent=59 // pred_fallthru
          _
        // Predicated region
        $region69: #{tpu_custom_call.1} parent=59 // pred_check
          %p1608 = pneg %p171
        $region70: #{tpu_custom_call.1} parent=59 // pred_check_branch
          %1610 = sbr.rel (%p1608) target = $region72
        $region71: #{tpu_custom_call.1} parent=59 // pred_region
          %s1611 = sand.u32 %s28, 1
          %s1612 = scalar_lea.sflag [#allocation10], %s1611
          %s1613 = sand.u32 %s156, 1
          %s1614 = smul.addr %s1613, 256
          %s1615 = scalar_lea.vmem [#allocation11], %s1614
          %1617 = dma.done %s1612, 4096
        $region72: #{tpu_custom_call.1} parent=59 // pred_fallthru
          _
      $region60: #{tpu_custom_call.1} parent=5 // pred_fallthru
        _
    $region6: #{tpu_custom_call.1} parent=1 // loop_footer
      %s26 = sadd.s32 1, %s22
    $region7: #{tpu_custom_call.1} parent=1 // loop_footer_branch
      %21 = sbr.rel target = $region3
    $region8: #{tpu_custom_call.1} parent=1 // loop_exit
      _
    %1618 = vsyncpa [#allocation3], 1
    %s1619 = scalar_lea.sflag [#allocation3], 1
    %1620 = vsyncpa %s1619, 1
    %1621 = vsyncpa [#allocation6], 1
    %1622 = vsyncpa [#allocation4], 1
    %s1623 = scalar_lea.sflag [#allocation4], 1
    %1624 = vsyncpa %s1623, 1
    %1625 = vsyncpa [#allocation10], 1
    %s1626 = scalar_lea.sflag [#allocation10], 1
    %1627 = vsyncpa %s1626, 1

</llo_original>
